<compile_context>
chip_gen: v6e
topology: v6e:2x2x1
jax: 0.10.0
libtpu: 0.0.40
codegen_flags: <defaults>
</compile_context>

<pallas_src>
import functools
import math

import jax
import jax.numpy as jnp
from jax import lax
from jax.experimental import pallas as pl
from jax.experimental.pallas import tpu as pltpu

EPS = 1e-6  # matches annotated-transformer LayerNorm eps
_WEIGHT_KEYS = ("wq", "wk", "wv", "wo", "w1", "w2")


# ----------------------- generation-aware sizing -----------------------
def _vmem_capacity_bytes():
    try:
        return int(pltpu.get_tpu_info().vmem_capacity_bytes)
    except Exception:
        return 64 * 1024 * 1024          # conservative (v7x per-core VMEM)


_VMEM_CAP = _vmem_capacity_bytes()
_VMEM_LIMIT = max(32 * 1024 * 1024, int(_VMEM_CAP * 0.8))
_BIG_VMEM = _VMEM_CAP >= 96 * 1024 * 1024     # v5e / v6e (128 MiB) vs v7x (64 MiB)


def _pick_tq(S):
    # 256-tall query tiles match the 256-deep MXU on v6e and halve grid-step
    # overhead; keep 128 on v7x-class (64 MiB VMEM) parts.
    if _BIG_VMEM and S % 256 == 0 and S > 256:
        return 256
    if S % 128 == 0 and S > 128:
        return 128
    return S


def _pick_ff_chunk(d_ff):
    target = 1024 if _BIG_VMEM else 512
    if d_ff % target == 0 and d_ff > target:
        return target
    return d_ff


# ---------------------------- in-kernel helpers ----------------------------
def _ln_kernel(x, a, b):
    # LayerNorm exactly as in the reference module:
    #   a * (x - mean) / (std + eps) + b, with *unbiased* std (torch.std).
    # Exact division on the (rows, 1) denominator (correctness feedback);
    # the cheap per-row divide is negligible vs the matmuls.
    d = x.shape[-1]
    mean = jnp.mean(x, axis=-1, keepdims=True)
    xc = x - mean
    var = jnp.sum(xc * xc, axis=-1, keepdims=True) * (1.0 / (d - 1))
    std = jnp.sqrt(var)
    return a * xc * (1.0 / (std + EPS)) + b


# -------------------------------- kernels ----------------------------------
def encoder_layer_kernel(x_ref, mask_ref,
                         wq_ref, bq_ref, wk_ref, bk_ref, wv_ref, bv_ref,
                         wo_ref, bo_ref, w1_ref, b1_ref, w2_ref, b2_ref,
                         ln1a_ref, ln1b_ref, ln2a_ref, ln2b_ref,
                         fa_ref, fb_ref,
                         o_ref,
                         q_sc, k_sc, v_sc, attn_sc,
                         *, n_heads, apply_final_norm, ff_chunk, tq):
    S, D = q_sc.shape
    dh = D // n_heads
    d_ff = w1_ref.shape[1]
    scale = 1.0 / math.sqrt(dh)
    qi = pl.program_id(1)

    # ---- once per batch element (query tile 0): LN1 + Q/K/V projections ----
    # Bias add + bf16 cast fused so the f32 (S, D) projections never stay live.
    # Q is pre-scaled by 1/sqrt(dh) here (folded into the projection output).
    @pl.when(qi == 0)
    def _():
        xn = _ln_kernel(x_ref[0], ln1a_ref[...], ln1b_ref[...]).astype(jnp.bfloat16)
        q_sc[...] = ((jnp.dot(xn, wq_ref[...], preferred_element_type=jnp.float32)
                      + bq_ref[...]) * scale).astype(jnp.bfloat16)
        k_sc[...] = (jnp.dot(xn, wk_ref[...], preferred_element_type=jnp.float32)
                     + bk_ref[...]).astype(jnp.bfloat16)
        v_sc[...] = (jnp.dot(xn, wv_ref[...], preferred_element_type=jnp.float32)
                     + bv_ref[...]).astype(jnp.bfloat16)

    # Residual query tile sliced straight out of the (single) full-seq input.
    row0 = pl.multiple_of(qi * tq, tq)
    x_q = x_ref[0, pl.ds(row0, tq), :]                 # (TQ, D) f32
    mask = mask_ref[0]                                 # (1, S)
    # Additive mask hoisted out of the head loop; `!= 0` matches the reference
    # masked_fill(mask == 0, -1e9) for any (not just binary) mask values.
    addmask = jnp.where(mask != 0.0, jnp.float32(0.0), jnp.float32(-1e9))

    # ---- sublayer 1: x + SelfAttn(LayerNorm(x)) ----
    qb = q_sc[pl.ds(row0, tq), :]                      # (TQ, D) bf16, pre-scaled
    for h in range(n_heads):                           # static unroll over heads
        lo = h * dh
        qh = qb[:, lo:lo + dh]                         # (TQ, dh)
        kh = k_sc[:, lo:lo + dh]                       # (S, dh)
        vh = v_sc[:, lo:lo + dh]                       # (S, dh)
        # scores: contract dh of both operands (no materialized K transpose)
        s = lax.dot_general(qh, kh, dimension_numbers=(((1,), (1,)), ((), ())),
                            preferred_element_type=jnp.float32)       # (TQ, S)
        s = s + addmask
        s = s - jnp.max(s, axis=-1, keepdims=True)
        e = jnp.exp(s)       # (bf16 exp is a further EUP lever on v6e/v7x)
        inv_l = pl.reciprocal(jnp.sum(e, axis=-1, keepdims=True), approx=True)
        p = (e * inv_l).astype(jnp.bfloat16)                           # (TQ, S)
        # Per-head output parked in the concat scratch; projected once below.
        attn_sc[:, lo:lo + dh] = jnp.dot(
            p, vh, preferred_element_type=jnp.float32).astype(jnp.bfloat16)
    # One full-depth (K = D) output projection on the MXU.
    attn = jnp.dot(attn_sc[...], wo_ref[...], preferred_element_type=jnp.float32)
    x1 = x_q + attn + bo_ref[...]

    # ---- sublayer 2: x1 + FFN(LayerNorm(x1)) ----
    xn2 = _ln_kernel(x1, ln2a_ref[...], ln2b_ref[...]).astype(jnp.bfloat16)
    ff = jnp.zeros((tq, D), jnp.float32)
    for c in range(0, d_ff, ff_chunk):  # static chunk loop bounds (TQ, d_ff) tile
        h1 = jnp.maximum(
            jnp.dot(xn2, w1_ref[:, c:c + ff_chunk],
                    preferred_element_type=jnp.float32) + b1_ref[:, c:c + ff_chunk],
            0.0)
        ff = ff + jnp.dot(h1.astype(jnp.bfloat16), w2_ref[c:c + ff_chunk, :],
                          preferred_element_type=jnp.float32)
    out = x1 + ff + b2_ref[...]

    # ---- fused final LayerNorm on the last layer ----
    if apply_final_norm:
        out = _ln_kernel(out, fa_ref[...], fb_ref[...])

    o_ref[0] = out.astype(o_ref.dtype)


def final_norm_kernel(x_ref, a_ref, b_ref, o_ref):
    # Only used for the degenerate N == 0 stack.
    o_ref[0] = _ln_kernel(x_ref[0], a_ref[...], b_ref[...]).astype(o_ref.dtype)


# ------------------------------- wrappers ----------------------------------
def encoder_layer(x, mask, p, final_a, final_b, n_heads, apply_final_norm,
                  single_buffer_weights=True):
    B, S, D = x.shape
    d_ff = p["w1"].shape[1]
    TQ = _pick_tq(S)
    ff_chunk = _pick_ff_chunk(d_ff)

    def wspec(shape):
        # Weights / biases: one full block, same for every grid step.
        idx = lambda b, q, _n=len(shape): (0,) * _n
        if single_buffer_weights:
            # Constant block index -> no need for a second (double) buffer.
            return pl.BlockSpec(shape, idx, pipeline_mode=pl.Buffered(1))
        return pl.BlockSpec(shape, idx)

    weight_specs = [
        wspec((D, D)), wspec((1, D)),        # wq, bq
        wspec((D, D)), wspec((1, D)),        # wk, bk
        wspec((D, D)), wspec((1, D)),        # wv, bv
        wspec((D, D)), wspec((1, D)),        # wo, bo
        wspec((D, d_ff)), wspec((1, d_ff)),  # w1, b1
        wspec((d_ff, D)), wspec((1, D)),     # w2, b2
        wspec((1, D)), wspec((1, D)),        # ln1 a, b
        wspec((1, D)), wspec((1, D)),        # ln2 a, b
        wspec((1, D)), wspec((1, D)),        # final norm a, b
    ]
    kernel = functools.partial(encoder_layer_kernel, n_heads=n_heads,
                               apply_final_norm=apply_final_norm,
                               ff_chunk=ff_chunk, tq=TQ)
    return pl.pallas_call(
        kernel,
        out_shape=jax.ShapeDtypeStruct((B, S, D), x.dtype),
        grid=(B, S // TQ),
        in_specs=[pl.BlockSpec((1, S, D), lambda b, q: (b, 0, 0)),   # x (full seq,
                                                                     #  DMA'd once per b)
                  pl.BlockSpec((1, 1, S), lambda b, q: (b, 0, 0))]   # mask
                 + weight_specs,
        out_specs=pl.BlockSpec((1, TQ, D), lambda b, q: (b, q, 0)),
        scratch_shapes=[pltpu.VMEM((S, D), jnp.bfloat16),   # Q (pre-scaled)
                        pltpu.VMEM((S, D), jnp.bfloat16),   # K
                        pltpu.VMEM((S, D), jnp.bfloat16),   # V
                        pltpu.VMEM((TQ, D), jnp.bfloat16)], # per-head concat buf
        compiler_params=pltpu.CompilerParams(
            # q-tile axis must be "arbitrary": the K/V scratch computed at
            # q == 0 is reused by later tiles of the same batch element.
            dimension_semantics=("parallel", "arbitrary"),
            vmem_limit_bytes=_VMEM_LIMIT),
    )(x, mask,
      p["wq"], p["bq"], p["wk"], p["bk"], p["wv"], p["bv"],
      p["wo"], p["bo"], p["w1"], p["b1"], p["w2"], p["b2"],
      p["ln1a"], p["ln1b"], p["ln2a"], p["ln2b"],
      final_a, final_b)


def final_norm(x, a, b):
    # Fallback only for an empty layer stack (otherwise fused into the last layer).
    B, S, D = x.shape
    return pl.pallas_call(
        final_norm_kernel,
        out_shape=jax.ShapeDtypeStruct((B, S, D), x.dtype),
        grid=(B,),
        in_specs=[pl.BlockSpec((1, S, D), lambda b: (b, 0, 0)),
                  pl.BlockSpec((1, D), lambda b: (0, 0)),
                  pl.BlockSpec((1, D), lambda b: (0, 0))],
        out_specs=pl.BlockSpec((1, S, D), lambda b: (b, 0, 0)),
        compiler_params=pltpu.CompilerParams(
            dimension_semantics=("parallel",),
            vmem_limit_bytes=_VMEM_LIMIT),
    )(x, a, b)


def _cast_weights_bf16(p):
    out = dict(p)
    for k in _WEIGHT_KEYS:
        out[k] = p[k].astype(jnp.bfloat16)   # halve weight DMA / VMEM; MXU-native
    return out


def encoder_forward(x, mask, layer_params, final_a, final_b, n_heads):
    n = len(layer_params)
    if n == 0:
        return final_norm(x, final_a, final_b)
    bf16_params = [_cast_weights_bf16(p) for p in layer_params]
    # Weights are resident per layer; a cross-pallas_call prefetch of the next
    # layer's weights (P10 futures) is the remaining DMA-hiding lever on v5e.
    single_buf = True
    for i, p in enumerate(bf16_params):
        last = (i == n - 1)
        try:
            x = encoder_layer(x, mask, p, final_a, final_b, n_heads,
                              apply_final_norm=last,
                              single_buffer_weights=single_buf)
        except Exception:
            if not single_buf:
                raise
            # Feature guard: fall back to default double-buffered weights if
            # pipeline_mode=pl.Buffered(1) is not supported by this jax build.
            single_buf = False
            x = encoder_layer(x, mask, p, final_a, final_b, n_heads,
                              apply_final_norm=last,
                              single_buffer_weights=False)
    return x


# ---------------- pure-JAX reference (for a sanity check) ----------------
def _ln_ref(x, a, b):
    d = x.shape[-1]
    mean = jnp.mean(x, axis=-1, keepdims=True)
    var = jnp.sum((x - mean) ** 2, axis=-1, keepdims=True) / (d - 1)
    std = jnp.sqrt(var)
    return a * (x - mean) / (std + EPS) + b


def _ref_forward(x, mask, layer_params, final_a, final_b, n_heads):
    B, S, D = x.shape
    dh = D // n_heads
    for p in layer_params:
        xn = _ln_ref(x, p["ln1a"], p["ln1b"])
        q = xn @ p["wq"] + p["bq"]
        k = xn @ p["wk"] + p["bk"]
        v = xn @ p["wv"] + p["bv"]
        q = q.reshape(B, S, n_heads, dh).transpose(0, 2, 1, 3)
        k = k.reshape(B, S, n_heads, dh).transpose(0, 2, 1, 3)
        v = v.reshape(B, S, n_heads, dh).transpose(0, 2, 1, 3)
        s = jnp.einsum("bhqd,bhkd->bhqk", q, k) / math.sqrt(dh)
        s = jnp.where(mask[:, None, :, :] == 0.0, -1e9, s)
        pr = jax.nn.softmax(s, axis=-1)
        a = jnp.einsum("bhqk,bhkd->bhqd", pr, v).transpose(0, 2, 1, 3).reshape(B, S, D)
        x1 = x + (a @ p["wo"] + p["bo"])
        xn2 = _ln_ref(x1, p["ln2a"], p["ln2b"])
        ff = jnp.maximum(xn2 @ p["w1"] + p["b1"], 0.0) @ p["w2"] + p["b2"]
        x = x1 + ff
    return _ln_ref(x, final_a, final_b)


def init_params(key, n_layers, d_model, d_ff):
    layer_params = []
    for l in range(n_layers):
        k = jax.random.fold_in(key, l)
        ks = jax.random.split(k, 6)
        sd = 1.0 / math.sqrt(d_model)
        p = {
            "wq": jax.random.normal(ks[0], (d_model, d_model), jnp.float32) * sd,
            "wk": jax.random.normal(ks[1], (d_model, d_model), jnp.float32) * sd,
            "wv": jax.random.normal(ks[2], (d_model, d_model), jnp.float32) * sd,
            "wo": jax.random.normal(ks[3], (d_model, d_model), jnp.float32) * sd,
            "w1": jax.random.normal(ks[4], (d_model, d_ff), jnp.float32) * sd,
            "w2": jax.random.normal(ks[5], (d_ff, d_model), jnp.float32) / math.sqrt(d_ff),
            "bq": jnp.zeros((1, d_model), jnp.float32),
            "bk": jnp.zeros((1, d_model), jnp.float32),
            "bv": jnp.zeros((1, d_model), jnp.float32),
            "bo": jnp.zeros((1, d_model), jnp.float32),
            "b1": jnp.zeros((1, d_ff), jnp.float32),
            "b2": jnp.zeros((1, d_model), jnp.float32),
            "ln1a": jnp.ones((1, d_model), jnp.float32),
            "ln1b": jnp.zeros((1, d_model), jnp.float32),
            "ln2a": jnp.ones((1, d_model), jnp.float32),
            "ln2b": jnp.zeros((1, d_model), jnp.float32),
        }
        layer_params.append(p)
    final_a = jnp.ones((1, d_model), jnp.float32)
    final_b = jnp.zeros((1, d_model), jnp.float32)
    return layer_params, final_a, final_b


if __name__ == "__main__":
    B, S, D, H, D_FF, N = 2, 8, 32, 4, 64, 2

    key = jax.random.PRNGKey(0)
    kx, kp = jax.random.split(key)
    x = jax.random.normal(kx, (B, S, D), jnp.float32)
    mask = jnp.ones((B, 1, S), jnp.float32)  # encoder src mask (all valid)

    layer_params, final_a, final_b = init_params(kp, N, D, D_FF)

    out = encoder_forward(x, mask, layer_params, final_a, final_b, H)
    out = jax.block_until_ready(out)

    # Reference uses the same bf16-rounded weights so the only delta vs the
    # kernel is the bf16 matmul-operand casts / approx softmax reciprocal.
    ref_params = [{k: (v.astype(jnp.bfloat16).astype(jnp.float32)
                       if k in _WEIGHT_KEYS else v)
                   for k, v in p.items()} for p in layer_params]
    ref = _ref_forward(x, mask, ref_params, final_a, final_b, H)

    assert out.shape == (B, S, D)
    assert jnp.allclose(out, ref, atol=3e-2, rtol=3e-2), "mismatch vs reference"

    print("KERNEL_OK")
</pallas_src>

<mosaic_0001>
module attributes {stable_mosaic.version = 11 : i64} {
  func.func @encoder_layer_kernel(%arg0: i32, %arg1: i32, %arg2: memref<1x8x32xf32, #tpu.memory_space<vmem>>, %arg3: memref<1x1x8xf32, #tpu.memory_space<vmem>>, %arg4: memref<32x32xbf16, #tpu.memory_space<vmem>>, %arg5: memref<1x32xf32, #tpu.memory_space<vmem>>, %arg6: memref<32x32xbf16, #tpu.memory_space<vmem>>, %arg7: memref<1x32xf32, #tpu.memory_space<vmem>>, %arg8: memref<32x32xbf16, #tpu.memory_space<vmem>>, %arg9: memref<1x32xf32, #tpu.memory_space<vmem>>, %arg10: memref<32x32xbf16, #tpu.memory_space<vmem>>, %arg11: memref<1x32xf32, #tpu.memory_space<vmem>>, %arg12: memref<32x64xbf16, #tpu.memory_space<vmem>>, %arg13: memref<1x64xf32, #tpu.memory_space<vmem>>, %arg14: memref<64x32xbf16, #tpu.memory_space<vmem>>, %arg15: memref<1x32xf32, #tpu.memory_space<vmem>>, %arg16: memref<1x32xf32, #tpu.memory_space<vmem>>, %arg17: memref<1x32xf32, #tpu.memory_space<vmem>>, %arg18: memref<1x32xf32, #tpu.memory_space<vmem>>, %arg19: memref<1x32xf32, #tpu.memory_space<vmem>>, %arg20: memref<1x32xf32, #tpu.memory_space<vmem>>, %arg21: memref<1x32xf32, #tpu.memory_space<vmem>>, %arg22: memref<1x8x32xf32, #tpu.memory_space<vmem>>, %arg23: memref<8x32xbf16, #tpu.memory_space<vmem>>, %arg24: memref<8x32xbf16, #tpu.memory_space<vmem>>, %arg25: memref<8x32xbf16, #tpu.memory_space<vmem>>, %arg26: memref<8x32xbf16, #tpu.memory_space<vmem>>) attributes {dimension_semantics = [#tpu.dimension_semantics<parallel>, #tpu.dimension_semantics<arbitrary>], iteration_bounds = array<i64: 2, 1>, scalar_prefetch = 0 : i64, scratch_operands = 4 : i64, tpu.core_type = #tpu.core_type<tc>, window_params = [{transform_indices = @transform_0, window_bounds = array<i64: 1, 8, 32>}, {transform_indices = @transform_1, window_bounds = array<i64: 1, 1, 8>}, {pipeline_mode = #tpu.pipeline_mode<synchronous>, transform_indices = @transform_2, window_bounds = array<i64: 32, 32>}, {pipeline_mode = #tpu.pipeline_mode<synchronous>, transform_indices = @transform_3, window_bounds = array<i64: 1, 32>}, {pipeline_mode = #tpu.pipeline_mode<synchronous>, transform_indices = @transform_4, window_bounds = array<i64: 32, 32>}, {pipeline_mode = #tpu.pipeline_mode<synchronous>, transform_indices = @transform_5, window_bounds = array<i64: 1, 32>}, {pipeline_mode = #tpu.pipeline_mode<synchronous>, transform_indices = @transform_6, window_bounds = array<i64: 32, 32>}, {pipeline_mode = #tpu.pipeline_mode<synchronous>, transform_indices = @transform_7, window_bounds = array<i64: 1, 32>}, {pipeline_mode = #tpu.pipeline_mode<synchronous>, transform_indices = @transform_8, window_bounds = array<i64: 32, 32>}, {pipeline_mode = #tpu.pipeline_mode<synchronous>, transform_indices = @transform_9, window_bounds = array<i64: 1, 32>}, {pipeline_mode = #tpu.pipeline_mode<synchronous>, transform_indices = @transform_10, window_bounds = array<i64: 32, 64>}, {pipeline_mode = #tpu.pipeline_mode<synchronous>, transform_indices = @transform_11, window_bounds = array<i64: 1, 64>}, {pipeline_mode = #tpu.pipeline_mode<synchronous>, transform_indices = @transform_12, window_bounds = array<i64: 64, 32>}, {pipeline_mode = #tpu.pipeline_mode<synchronous>, transform_indices = @transform_13, window_bounds = array<i64: 1, 32>}, {pipeline_mode = #tpu.pipeline_mode<synchronous>, transform_indices = @transform_14, window_bounds = array<i64: 1, 32>}, {pipeline_mode = #tpu.pipeline_mode<synchronous>, transform_indices = @transform_15, window_bounds = array<i64: 1, 32>}, {pipeline_mode = #tpu.pipeline_mode<synchronous>, transform_indices = @transform_16, window_bounds = array<i64: 1, 32>}, {pipeline_mode = #tpu.pipeline_mode<synchronous>, transform_indices = @transform_17, window_bounds = array<i64: 1, 32>}, {pipeline_mode = #tpu.pipeline_mode<synchronous>, transform_indices = @transform_18, window_bounds = array<i64: 1, 32>}, {pipeline_mode = #tpu.pipeline_mode<synchronous>, transform_indices = @transform_19, window_bounds = array<i64: 1, 32>}, {transform_indices = @transform_20, window_bounds = array<i64: 1, 8, 32>}]} {
    %c0_i32 = arith.constant 0 : i32
    %0 = arith.cmpi eq, %arg1, %c0_i32 : i32
    %1 = arith.extui %0 : i1 to i32
    %c0_i32_0 = arith.constant 0 : i32
    %2 = arith.cmpi ne, %1, %c0_i32_0 : i32
    scf.if %2 {
      %c0_77 = arith.constant 0 : index
      %c0_78 = arith.constant 0 : index
      %c0_79 = arith.constant 0 : index
      %148 = vector.load %arg2[%c0_77, %c0_78, %c0_79] : memref<1x8x32xf32, #tpu.memory_space<vmem>>, vector<1x8x32xf32>
      %149 = vector.shape_cast %148 : vector<1x8x32xf32> to vector<8x32xf32>
      %c0_80 = arith.constant 0 : index
      %c0_81 = arith.constant 0 : index
      %150 = vector.load %arg16[%c0_80, %c0_81] : memref<1x32xf32, #tpu.memory_space<vmem>>, vector<1x32xf32>
      %c0_82 = arith.constant 0 : index
      %c0_83 = arith.constant 0 : index
      %151 = vector.load %arg17[%c0_82, %c0_83] : memref<1x32xf32, #tpu.memory_space<vmem>>, vector<1x32xf32>
      %cst_84 = arith.constant dense<0.000000e+00> : vector<8xf32>
      %152 = vector.multi_reduction <add>, %149, %cst_84 [1] : vector<8x32xf32> to vector<8xf32>
      %153 = vector.shape_cast %152 : vector<8xf32> to vector<8x1xf32>
      %cst_85 = arith.constant 3.200000e+01 : f32
      %154 = vector.broadcast %cst_85 : f32 to vector<8x1xf32>
      %155 = arith.divf %153, %154 : vector<8x1xf32>
      %156 = vector.broadcast %155 : vector<8x1xf32> to vector<8x32xf32>
      %157 = arith.subf %149, %156 : vector<8x32xf32>
      %158 = arith.mulf %157, %157 : vector<8x32xf32>
      %cst_86 = arith.constant dense<0.000000e+00> : vector<8xf32>
      %159 = vector.multi_reduction <add>, %158, %cst_86 [1] : vector<8x32xf32> to vector<8xf32>
      %160 = vector.shape_cast %159 : vector<8xf32> to vector<8x1xf32>
      %cst_87 = arith.constant 0.0322580636 : f32
      %161 = vector.broadcast %cst_87 : f32 to vector<8x1xf32>
      %162 = arith.mulf %160, %161 : vector<8x1xf32>
      %163 = math.sqrt %162 : vector<8x1xf32>
      %164 = vector.broadcast %150 : vector<1x32xf32> to vector<8x32xf32>
      %165 = arith.mulf %164, %157 : vector<8x32xf32>
      %cst_88 = arith.constant 9.99999997E-7 : f32
      %166 = vector.broadcast %cst_88 : f32 to vector<8x1xf32>
      %167 = arith.addf %163, %166 : vector<8x1xf32>
      %cst_89 = arith.constant 1.000000e+00 : f32
      %168 = vector.broadcast %cst_89 : f32 to vector<8x1xf32>
      %169 = arith.divf %168, %167 : vector<8x1xf32>
      %170 = vector.broadcast %169 : vector<8x1xf32> to vector<8x32xf32>
      %171 = arith.mulf %165, %170 : vector<8x32xf32>
      %172 = vector.broadcast %151 : vector<1x32xf32> to vector<8x32xf32>
      %173 = arith.addf %171, %172 : vector<8x32xf32>
      %174 = arith.truncf %173 : vector<8x32xf32> to vector<8x32xbf16>
      %c0_90 = arith.constant 0 : index
      %c0_91 = arith.constant 0 : index
      %175 = vector.load %arg4[%c0_90, %c0_91] : memref<32x32xbf16, #tpu.memory_space<vmem>>, vector<32x32xbf16>
      %cst_92 = arith.constant dense<0.000000e+00> : vector<8x32xf32>
      %176 = tpu.matmul %174, %175, %cst_92 {dimension_numbers = #tpu.dot_dimension_numbers<[1], [0], [0], [1], [0, 0, 1, 1], [], []>} : vector<8x32xbf16>, vector<32x32xbf16>, vector<8x32xf32> -> vector<8x32xf32>
      %c0_93 = arith.constant 0 : index
      %c0_94 = arith.constant 0 : index
      %177 = vector.load %arg5[%c0_93, %c0_94] : memref<1x32xf32, #tpu.memory_space<vmem>>, vector<1x32xf32>
      %178 = vector.broadcast %177 : vector<1x32xf32> to vector<8x32xf32>
      %179 = arith.addf %176, %178 : vector<8x32xf32>
      %cst_95 = arith.constant 0.353553385 : f32
      %180 = vector.broadcast %cst_95 : f32 to vector<8x32xf32>
      %181 = arith.mulf %179, %180 : vector<8x32xf32>
      %182 = arith.truncf %181 : vector<8x32xf32> to vector<8x32xbf16>
      %c0_96 = arith.constant 0 : index
      %c0_97 = arith.constant 0 : index
      %183 = vector.load %arg23[%c0_96, %c0_97] : memref<8x32xbf16, #tpu.memory_space<vmem>>, vector<8x32xbf16>
      tpu.vector_store %arg23[%c0_96, %c0_97], %182 {strides = array<i32>} : memref<8x32xbf16, #tpu.memory_space<vmem>>, vector<8x32xbf16>,
      %c0_98 = arith.constant 0 : index
      %c0_99 = arith.constant 0 : index
      %184 = vector.load %arg6[%c0_98, %c0_99] : memref<32x32xbf16, #tpu.memory_space<vmem>>, vector<32x32xbf16>
      %cst_100 = arith.constant dense<0.000000e+00> : vector<8x32xf32>
      %185 = tpu.matmul %174, %184, %cst_100 {dimension_numbers = #tpu.dot_dimension_numbers<[1], [0], [0], [1], [0, 0, 1, 1], [], []>} : vector<8x32xbf16>, vector<32x32xbf16>, vector<8x32xf32> -> vector<8x32xf32>
      %c0_101 = arith.constant 0 : index
      %c0_102 = arith.constant 0 : index
      %186 = vector.load %arg7[%c0_101, %c0_102] : memref<1x32xf32, #tpu.memory_space<vmem>>, vector<1x32xf32>
      %187 = vector.broadcast %186 : vector<1x32xf32> to vector<8x32xf32>
      %188 = arith.addf %185, %187 : vector<8x32xf32>
      %189 = arith.truncf %188 : vector<8x32xf32> to vector<8x32xbf16>
      %c0_103 = arith.constant 0 : index
      %c0_104 = arith.constant 0 : index
      %190 = vector.load %arg24[%c0_103, %c0_104] : memref<8x32xbf16, #tpu.memory_space<vmem>>, vector<8x32xbf16>
      tpu.vector_store %arg24[%c0_103, %c0_104], %189 {strides = array<i32>} : memref<8x32xbf16, #tpu.memory_space<vmem>>, vector<8x32xbf16>,
      %c0_105 = arith.constant 0 : index
      %c0_106 = arith.constant 0 : index
      %191 = vector.load %arg8[%c0_105, %c0_106] : memref<32x32xbf16, #tpu.memory_space<vmem>>, vector<32x32xbf16>
      %cst_107 = arith.constant dense<0.000000e+00> : vector<8x32xf32>
      %192 = tpu.matmul %174, %191, %cst_107 {dimension_numbers = #tpu.dot_dimension_numbers<[1], [0], [0], [1], [0, 0, 1, 1], [], []>} : vector<8x32xbf16>, vector<32x32xbf16>, vector<8x32xf32> -> vector<8x32xf32>
      %c0_108 = arith.constant 0 : index
      %c0_109 = arith.constant 0 : index
      %193 = vector.load %arg9[%c0_108, %c0_109] : memref<1x32xf32, #tpu.memory_space<vmem>>, vector<1x32xf32>
      %194 = vector.broadcast %193 : vector<1x32xf32> to vector<8x32xf32>
      %195 = arith.addf %192, %194 : vector<8x32xf32>
      %196 = arith.truncf %195 : vector<8x32xf32> to vector<8x32xbf16>
      %c0_110 = arith.constant 0 : index
      %c0_111 = arith.constant 0 : index
      %197 = vector.load %arg25[%c0_110, %c0_111] : memref<8x32xbf16, #tpu.memory_space<vmem>>, vector<8x32xbf16>
      tpu.vector_store %arg25[%c0_110, %c0_111], %196 {strides = array<i32>} : memref<8x32xbf16, #tpu.memory_space<vmem>>, vector<8x32xbf16>,
    } else {
    }
    %c8_i32 = arith.constant 8 : i32
    %3 = arith.muli %arg1, %c8_i32 : i32
    %4 = tpu.assume_multiple %3, 8 : i32
    %c0 = arith.constant 0 : index
    %5 = arith.index_cast %4 : i32 to index
    %c0_1 = arith.constant 0 : index
    %6 = vector.load %arg2[%c0, %5, %c0_1] : memref<1x8x32xf32, #tpu.memory_space<vmem>>, vector<1x8x32xf32>
    %7 = vector.shape_cast %6 : vector<1x8x32xf32> to vector<8x32xf32>
    %c0_2 = arith.constant 0 : index
    %c0_3 = arith.constant 0 : index
    %c0_4 = arith.constant 0 : index
    %8 = vector.load %arg3[%c0_2, %c0_3, %c0_4] : memref<1x1x8xf32, #tpu.memory_space<vmem>>, vector<1x1x8xf32>
    %9 = vector.shape_cast %8 : vector<1x1x8xf32> to vector<1x8xf32>
    %cst = arith.constant 0.000000e+00 : f32
    %10 = vector.broadcast %cst : f32 to vector<1x8xf32>
    %11 = arith.cmpf one, %9, %10 : vector<1x8xf32>
    %cst_5 = arith.constant 0.000000e+00 : f32
    %cst_6 = arith.constant -1.000000e+09 : f32
    %12 = vector.broadcast %cst_5 : f32 to vector<1x8xf32>
    %13 = vector.broadcast %cst_6 : f32 to vector<1x8xf32>
    %14 = arith.select %11, %12, %13 : vector<1x8xi1>, vector<1x8xf32>
    %15 = arith.index_cast %4 : i32 to index
    %c0_7 = arith.constant 0 : index
    %16 = vector.load %arg23[%15, %c0_7] : memref<8x32xbf16, #tpu.memory_space<vmem>>, vector<8x32xbf16>
    %17 = vector.extract_strided_slice %16 {offsets = [0, 0], sizes = [8, 8], strides = [1, 1]} : vector<8x32xbf16> to vector<8x8xbf16>
    %c0_8 = arith.constant 0 : index
    %c0_9 = arith.constant 0 : index
    %18 = vector.load %arg24[%c0_8, %c0_9] : memref<8x32xbf16, #tpu.memory_space<vmem>>, vector<8x8xbf16>
    %c0_10 = arith.constant 0 : index
    %c0_11 = arith.constant 0 : index
    %19 = vector.load %arg25[%c0_10, %c0_11] : memref<8x32xbf16, #tpu.memory_space<vmem>>, vector<8x8xbf16>
    %cst_12 = arith.constant dense<0.000000e+00> : vector<8x8xf32>
    %20 = tpu.matmul %17, %18, %cst_12 {dimension_numbers = #tpu.dot_dimension_numbers<[1], [1], [0], [0], [0, 0, 1, 0], [], []>} : vector<8x8xbf16>, vector<8x8xbf16>, vector<8x8xf32> -> vector<8x8xf32>
    %21 = vector.broadcast %14 : vector<1x8xf32> to vector<8x8xf32>
    %22 = arith.addf %20, %21 : vector<8x8xf32>
    %cst_13 = arith.constant dense<0xFF800000> : vector<8xf32>
    %23 = vector.multi_reduction <maximumf>, %22, %cst_13 [1] : vector<8x8xf32> to vector<8xf32>
    %24 = vector.shape_cast %23 : vector<8xf32> to vector<8x1xf32>
    %25 = vector.broadcast %24 : vector<8x1xf32> to vector<8x8xf32>
    %26 = arith.subf %22, %25 : vector<8x8xf32>
    %27 = math.exp %26 : vector<8x8xf32>
    %cst_14 = arith.constant dense<0.000000e+00> : vector<8xf32>
    %28 = vector.multi_reduction <add>, %27, %cst_14 [1] : vector<8x8xf32> to vector<8xf32>
    %29 = vector.shape_cast %28 : vector<8xf32> to vector<8x1xf32>
    %30 = tpu.reciprocal %29 {approx = true} : vector<8x1xf32> -> vector<8x1xf32>
    %31 = vector.broadcast %30 : vector<8x1xf32> to vector<8x8xf32>
    %32 = arith.mulf %27, %31 : vector<8x8xf32>
    %33 = arith.truncf %32 : vector<8x8xf32> to vector<8x8xbf16>
    %cst_15 = arith.constant dense<0.000000e+00> : vector<8x8xf32>
    %34 = tpu.matmul %33, %19, %cst_15 {dimension_numbers = #tpu.dot_dimension_numbers<[1], [0], [0], [1], [0, 0, 1, 1], [], []>} : vector<8x8xbf16>, vector<8x8xbf16>, vector<8x8xf32> -> vector<8x8xf32>
    %35 = arith.truncf %34 : vector<8x8xf32> to vector<8x8xbf16>
    %c0_16 = arith.constant 0 : index
    %c0_17 = arith.constant 0 : index
    %36 = vector.load %arg26[%c0_16, %c0_17] : memref<8x32xbf16, #tpu.memory_space<vmem>>, vector<8x8xbf16>
    tpu.vector_store %arg26[%c0_16, %c0_17], %35 {strides = array<i32>} : memref<8x32xbf16, #tpu.memory_space<vmem>>, vector<8x8xbf16>,
    %37 = vector.extract_strided_slice %16 {offsets = [0, 8], sizes = [8, 8], strides = [1, 1]} : vector<8x32xbf16> to vector<8x8xbf16>
    %c0_18 = arith.constant 0 : index
    %c8 = arith.constant 8 : index
    %38 = vector.load %arg24[%c0_18, %c8] : memref<8x32xbf16, #tpu.memory_space<vmem>>, vector<8x8xbf16>
    %c0_19 = arith.constant 0 : index
    %c8_20 = arith.constant 8 : index
    %39 = vector.load %arg25[%c0_19, %c8_20] : memref<8x32xbf16, #tpu.memory_space<vmem>>, vector<8x8xbf16>
    %cst_21 = arith.constant dense<0.000000e+00> : vector<8x8xf32>
    %40 = tpu.matmul %37, %38, %cst_21 {dimension_numbers = #tpu.dot_dimension_numbers<[1], [1], [0], [0], [0, 0, 1, 0], [], []>} : vector<8x8xbf16>, vector<8x8xbf16>, vector<8x8xf32> -> vector<8x8xf32>
    %41 = vector.broadcast %14 : vector<1x8xf32> to vector<8x8xf32>
    %42 = arith.addf %40, %41 : vector<8x8xf32>
    %cst_22 = arith.constant dense<0xFF800000> : vector<8xf32>
    %43 = vector.multi_reduction <maximumf>, %42, %cst_22 [1] : vector<8x8xf32> to vector<8xf32>
    %44 = vector.shape_cast %43 : vector<8xf32> to vector<8x1xf32>
    %45 = vector.broadcast %44 : vector<8x1xf32> to vector<8x8xf32>
    %46 = arith.subf %42, %45 : vector<8x8xf32>
    %47 = math.exp %46 : vector<8x8xf32>
    %cst_23 = arith.constant dense<0.000000e+00> : vector<8xf32>
    %48 = vector.multi_reduction <add>, %47, %cst_23 [1] : vector<8x8xf32> to vector<8xf32>
    %49 = vector.shape_cast %48 : vector<8xf32> to vector<8x1xf32>
    %50 = tpu.reciprocal %49 {approx = true} : vector<8x1xf32> -> vector<8x1xf32>
    %51 = vector.broadcast %50 : vector<8x1xf32> to vector<8x8xf32>
    %52 = arith.mulf %47, %51 : vector<8x8xf32>
    %53 = arith.truncf %52 : vector<8x8xf32> to vector<8x8xbf16>
    %cst_24 = arith.constant dense<0.000000e+00> : vector<8x8xf32>
    %54 = tpu.matmul %53, %39, %cst_24 {dimension_numbers = #tpu.dot_dimension_numbers<[1], [0], [0], [1], [0, 0, 1, 1], [], []>} : vector<8x8xbf16>, vector<8x8xbf16>, vector<8x8xf32> -> vector<8x8xf32>
    %55 = arith.truncf %54 : vector<8x8xf32> to vector<8x8xbf16>
    %c0_25 = arith.constant 0 : index
    %c8_26 = arith.constant 8 : index
    %56 = vector.load %arg26[%c0_25, %c8_26] : memref<8x32xbf16, #tpu.memory_space<vmem>>, vector<8x8xbf16>
    tpu.vector_store %arg26[%c0_25, %c8_26], %55 {strides = array<i32>} : memref<8x32xbf16, #tpu.memory_space<vmem>>, vector<8x8xbf16>,
    %57 = vector.extract_strided_slice %16 {offsets = [0, 16], sizes = [8, 8], strides = [1, 1]} : vector<8x32xbf16> to vector<8x8xbf16>
    %c0_27 = arith.constant 0 : index
    %c16 = arith.constant 16 : index
    %58 = vector.load %arg24[%c0_27, %c16] : memref<8x32xbf16, #tpu.memory_space<vmem>>, vector<8x8xbf16>
    %c0_28 = arith.constant 0 : index
    %c16_29 = arith.constant 16 : index
    %59 = vector.load %arg25[%c0_28, %c16_29] : memref<8x32xbf16, #tpu.memory_space<vmem>>, vector<8x8xbf16>
    %cst_30 = arith.constant dense<0.000000e+00> : vector<8x8xf32>
    %60 = tpu.matmul %57, %58, %cst_30 {dimension_numbers = #tpu.dot_dimension_numbers<[1], [1], [0], [0], [0, 0, 1, 0], [], []>} : vector<8x8xbf16>, vector<8x8xbf16>, vector<8x8xf32> -> vector<8x8xf32>
    %61 = vector.broadcast %14 : vector<1x8xf32> to vector<8x8xf32>
    %62 = arith.addf %60, %61 : vector<8x8xf32>
    %cst_31 = arith.constant dense<0xFF800000> : vector<8xf32>
    %63 = vector.multi_reduction <maximumf>, %62, %cst_31 [1] : vector<8x8xf32> to vector<8xf32>
    %64 = vector.shape_cast %63 : vector<8xf32> to vector<8x1xf32>
    %65 = vector.broadcast %64 : vector<8x1xf32> to vector<8x8xf32>
    %66 = arith.subf %62, %65 : vector<8x8xf32>
    %67 = math.exp %66 : vector<8x8xf32>
    %cst_32 = arith.constant dense<0.000000e+00> : vector<8xf32>
    %68 = vector.multi_reduction <add>, %67, %cst_32 [1] : vector<8x8xf32> to vector<8xf32>
    %69 = vector.shape_cast %68 : vector<8xf32> to vector<8x1xf32>
    %70 = tpu.reciprocal %69 {approx = true} : vector<8x1xf32> -> vector<8x1xf32>
    %71 = vector.broadcast %70 : vector<8x1xf32> to vector<8x8xf32>
    %72 = arith.mulf %67, %71 : vector<8x8xf32>
    %73 = arith.truncf %72 : vector<8x8xf32> to vector<8x8xbf16>
    %cst_33 = arith.constant dense<0.000000e+00> : vector<8x8xf32>
    %74 = tpu.matmul %73, %59, %cst_33 {dimension_numbers = #tpu.dot_dimension_numbers<[1], [0], [0], [1], [0, 0, 1, 1], [], []>} : vector<8x8xbf16>, vector<8x8xbf16>, vector<8x8xf32> -> vector<8x8xf32>
    %75 = arith.truncf %74 : vector<8x8xf32> to vector<8x8xbf16>
    %c0_34 = arith.constant 0 : index
    %c16_35 = arith.constant 16 : index
    %76 = vector.load %arg26[%c0_34, %c16_35] : memref<8x32xbf16, #tpu.memory_space<vmem>>, vector<8x8xbf16>
    tpu.vector_store %arg26[%c0_34, %c16_35], %75 {strides = array<i32>} : memref<8x32xbf16, #tpu.memory_space<vmem>>, vector<8x8xbf16>,
    %77 = vector.extract_strided_slice %16 {offsets = [0, 24], sizes = [8, 8], strides = [1, 1]} : vector<8x32xbf16> to vector<8x8xbf16>
    %c0_36 = arith.constant 0 : index
    %c24 = arith.constant 24 : index
    %78 = vector.load %arg24[%c0_36, %c24] : memref<8x32xbf16, #tpu.memory_space<vmem>>, vector<8x8xbf16>
    %c0_37 = arith.constant 0 : index
    %c24_38 = arith.constant 24 : index
    %79 = vector.load %arg25[%c0_37, %c24_38] : memref<8x32xbf16, #tpu.memory_space<vmem>>, vector<8x8xbf16>
    %cst_39 = arith.constant dense<0.000000e+00> : vector<8x8xf32>
    %80 = tpu.matmul %77, %78, %cst_39 {dimension_numbers = #tpu.dot_dimension_numbers<[1], [1], [0], [0], [0, 0, 1, 0], [], []>} : vector<8x8xbf16>, vector<8x8xbf16>, vector<8x8xf32> -> vector<8x8xf32>
    %81 = vector.broadcast %14 : vector<1x8xf32> to vector<8x8xf32>
    %82 = arith.addf %80, %81 : vector<8x8xf32>
    %cst_40 = arith.constant dense<0xFF800000> : vector<8xf32>
    %83 = vector.multi_reduction <maximumf>, %82, %cst_40 [1] : vector<8x8xf32> to vector<8xf32>
    %84 = vector.shape_cast %83 : vector<8xf32> to vector<8x1xf32>
    %85 = vector.broadcast %84 : vector<8x1xf32> to vector<8x8xf32>
    %86 = arith.subf %82, %85 : vector<8x8xf32>
    %87 = math.exp %86 : vector<8x8xf32>
    %cst_41 = arith.constant dense<0.000000e+00> : vector<8xf32>
    %88 = vector.multi_reduction <add>, %87, %cst_41 [1] : vector<8x8xf32> to vector<8xf32>
    %89 = vector.shape_cast %88 : vector<8xf32> to vector<8x1xf32>
    %90 = tpu.reciprocal %89 {approx = true} : vector<8x1xf32> -> vector<8x1xf32>
    %91 = vector.broadcast %90 : vector<8x1xf32> to vector<8x8xf32>
    %92 = arith.mulf %87, %91 : vector<8x8xf32>
    %93 = arith.truncf %92 : vector<8x8xf32> to vector<8x8xbf16>
    %cst_42 = arith.constant dense<0.000000e+00> : vector<8x8xf32>
    %94 = tpu.matmul %93, %79, %cst_42 {dimension_numbers = #tpu.dot_dimension_numbers<[1], [0], [0], [1], [0, 0, 1, 1], [], []>} : vector<8x8xbf16>, vector<8x8xbf16>, vector<8x8xf32> -> vector<8x8xf32>
    %95 = arith.truncf %94 : vector<8x8xf32> to vector<8x8xbf16>
    %c0_43 = arith.constant 0 : index
    %c24_44 = arith.constant 24 : index
    %96 = vector.load %arg26[%c0_43, %c24_44] : memref<8x32xbf16, #tpu.memory_space<vmem>>, vector<8x8xbf16>
    tpu.vector_store %arg26[%c0_43, %c24_44], %95 {strides = array<i32>} : memref<8x32xbf16, #tpu.memory_space<vmem>>, vector<8x8xbf16>,
    %c0_45 = arith.constant 0 : index
    %c0_46 = arith.constant 0 : index
    %97 = vector.load %arg26[%c0_45, %c0_46] : memref<8x32xbf16, #tpu.memory_space<vmem>>, vector<8x32xbf16>
    %c0_47 = arith.constant 0 : index
    %c0_48 = arith.constant 0 : index
    %98 = vector.load %arg10[%c0_47, %c0_48] : memref<32x32xbf16, #tpu.memory_space<vmem>>, vector<32x32xbf16>
    %cst_49 = arith.constant dense<0.000000e+00> : vector<8x32xf32>
    %99 = tpu.matmul %97, %98, %cst_49 {dimension_numbers = #tpu.dot_dimension_numbers<[1], [0], [0], [1], [0, 0, 1, 1], [], []>} : vector<8x32xbf16>, vector<32x32xbf16>, vector<8x32xf32> -> vector<8x32xf32>
    %100 = arith.addf %7, %99 : vector<8x32xf32>
    %c0_50 = arith.constant 0 : index
    %c0_51 = arith.constant 0 : index
    %101 = vector.load %arg11[%c0_50, %c0_51] : memref<1x32xf32, #tpu.memory_space<vmem>>, vector<1x32xf32>
    %102 = vector.broadcast %101 : vector<1x32xf32> to vector<8x32xf32>
    %103 = arith.addf %100, %102 : vector<8x32xf32>
    %c0_52 = arith.constant 0 : index
    %c0_53 = arith.constant 0 : index
    %104 = vector.load %arg18[%c0_52, %c0_53] : memref<1x32xf32, #tpu.memory_space<vmem>>, vector<1x32xf32>
    %c0_54 = arith.constant 0 : index
    %c0_55 = arith.constant 0 : index
    %105 = vector.load %arg19[%c0_54, %c0_55] : memref<1x32xf32, #tpu.memory_space<vmem>>, vector<1x32xf32>
    %cst_56 = arith.constant dense<0.000000e+00> : vector<8xf32>
    %106 = vector.multi_reduction <add>, %103, %cst_56 [1] : vector<8x32xf32> to vector<8xf32>
    %107 = vector.shape_cast %106 : vector<8xf32> to vector<8x1xf32>
    %cst_57 = arith.constant 3.200000e+01 : f32
    %108 = vector.broadcast %cst_57 : f32 to vector<8x1xf32>
    %109 = arith.divf %107, %108 : vector<8x1xf32>
    %110 = vector.broadcast %109 : vector<8x1xf32> to vector<8x32xf32>
    %111 = arith.subf %103, %110 : vector<8x32xf32>
    %112 = arith.mulf %111, %111 : vector<8x32xf32>
    %cst_58 = arith.constant dense<0.000000e+00> : vector<8xf32>
    %113 = vector.multi_reduction <add>, %112, %cst_58 [1] : vector<8x32xf32> to vector<8xf32>
    %114 = vector.shape_cast %113 : vector<8xf32> to vector<8x1xf32>
    %cst_59 = arith.constant 0.0322580636 : f32
    %115 = vector.broadcast %cst_59 : f32 to vector<8x1xf32>
    %116 = arith.mulf %114, %115 : vector<8x1xf32>
    %117 = math.sqrt %116 : vector<8x1xf32>
    %118 = vector.broadcast %104 : vector<1x32xf32> to vector<8x32xf32>
    %119 = arith.mulf %118, %111 : vector<8x32xf32>
    %cst_60 = arith.constant 9.99999997E-7 : f32
    %120 = vector.broadcast %cst_60 : f32 to vector<8x1xf32>
    %121 = arith.addf %117, %120 : vector<8x1xf32>
    %cst_61 = arith.constant 1.000000e+00 : f32
    %122 = vector.broadcast %cst_61 : f32 to vector<8x1xf32>
    %123 = arith.divf %122, %121 : vector<8x1xf32>
    %124 = vector.broadcast %123 : vector<8x1xf32> to vector<8x32xf32>
    %125 = arith.mulf %119, %124 : vector<8x32xf32>
    %126 = vector.broadcast %105 : vector<1x32xf32> to vector<8x32xf32>
    %127 = arith.addf %125, %126 : vector<8x32xf32>
    %128 = arith.truncf %127 : vector<8x32xf32> to vector<8x32xbf16>
    %cst_62 = arith.constant 0.000000e+00 : f32
    %129 = vector.broadcast %cst_62 : f32 to vector<8x32xf32>
    %c0_63 = arith.constant 0 : index
    %c0_64 = arith.constant 0 : index
    %130 = vector.load %arg12[%c0_63, %c0_64] : memref<32x64xbf16, #tpu.memory_space<vmem>>, vector<32x64xbf16>
    %cst_65 = arith.constant dense<0.000000e+00> : vector<8x64xf32>
    %131 = tpu.matmul %128, %130, %cst_65 {dimension_numbers = #tpu.dot_dimension_numbers<[1], [0], [0], [1], [0, 0, 1, 1], [], []>} : vector<8x32xbf16>, vector<32x64xbf16>, vector<8x64xf32> -> vector<8x64xf32>
    %c0_66 = arith.constant 0 : index
    %c0_67 = arith.constant 0 : index
    %132 = vector.load %arg13[%c0_66, %c0_67] : memref<1x64xf32, #tpu.memory_space<vmem>>, vector<1x64xf32>
    %133 = vector.broadcast %132 : vector<1x64xf32> to vector<8x64xf32>
    %134 = arith.addf %131, %133 : vector<8x64xf32>
    %cst_68 = arith.constant 0.000000e+00 : f32
    %135 = vector.broadcast %cst_68 : f32 to vector<8x64xf32>
    %136 = arith.maximumf %134, %135 : vector<8x64xf32>
    %137 = arith.truncf %136 : vector<8x64xf32> to vector<8x64xbf16>
    %c0_69 = arith.constant 0 : index
    %c0_70 = arith.constant 0 : index
    %138 = vector.load %arg14[%c0_69, %c0_70] : memref<64x32xbf16, #tpu.memory_space<vmem>>, vector<64x32xbf16>
    %cst_71 = arith.constant dense<0.000000e+00> : vector<8x32xf32>
    %139 = tpu.matmul %137, %138, %cst_71 {dimension_numbers = #tpu.dot_dimension_numbers<[1], [0], [0], [1], [0, 0, 1, 1], [], []>} : vector<8x64xbf16>, vector<64x32xbf16>, vector<8x32xf32> -> vector<8x32xf32>
    %140 = arith.addf %129, %139 : vector<8x32xf32>
    %141 = arith.addf %103, %140 : vector<8x32xf32>
    %c0_72 = arith.constant 0 : index
    %c0_73 = arith.constant 0 : index
    %142 = vector.load %arg15[%c0_72, %c0_73] : memref<1x32xf32, #tpu.memory_space<vmem>>, vector<1x32xf32>
    %143 = vector.broadcast %142 : vector<1x32xf32> to vector<8x32xf32>
    %144 = arith.addf %141, %143 : vector<8x32xf32>
    %c0_74 = arith.constant 0 : index
    %c0_75 = arith.constant 0 : index
    %c0_76 = arith.constant 0 : index
    %145 = vector.load %arg22[%c0_74, %c0_75, %c0_76] : memref<1x8x32xf32, #tpu.memory_space<vmem>>, vector<1x8x32xf32>
    %146 = vector.shape_cast %145 : vector<1x8x32xf32> to vector<8x32xf32>
    %147 = vector.shape_cast %144 : vector<8x32xf32> to vector<1x8x32xf32>
    tpu.vector_store %arg22[%c0_74, %c0_75, %c0_76], %147 {strides = array<i32>} : memref<1x8x32xf32, #tpu.memory_space<vmem>>, vector<1x8x32xf32>,
    return
  }
  func.func @transform_0(%arg0: i32, %arg1: i32) -> (i32, i32, i32) {
    %c0_i32 = arith.constant 0 : i32
    %c0_i32_0 = arith.constant 0 : i32
    %c0_i32_1 = arith.constant 0 : i32
    return %arg0, %c0_i32, %c0_i32_0 : i32, i32, i32
  }
  func.func @transform_1(%arg0: i32, %arg1: i32) -> (i32, i32, i32) {
    %c0_i32 = arith.constant 0 : i32
    %c0_i32_0 = arith.constant 0 : i32
    %c0_i32_1 = arith.constant 0 : i32
    return %arg0, %c0_i32, %c0_i32_0 : i32, i32, i32
  }
  func.func @transform_2(%arg0: i32, %arg1: i32) -> (i32, i32) {
    %c0_i32 = arith.constant 0 : i32
    %c0_i32_0 = arith.constant 0 : i32
    %c0_i32_1 = arith.constant 0 : i32
    return %c0_i32, %c0_i32_0 : i32, i32
  }
  func.func @transform_3(%arg0: i32, %arg1: i32) -> (i32, i32) {
    %c0_i32 = arith.constant 0 : i32
    %c0_i32_0 = arith.constant 0 : i32
    %c0_i32_1 = arith.constant 0 : i32
    return %c0_i32, %c0_i32_0 : i32, i32
  }
  func.func @transform_4(%arg0: i32, %arg1: i32) -> (i32, i32) {
    %c0_i32 = arith.constant 0 : i32
    %c0_i32_0 = arith.constant 0 : i32
    %c0_i32_1 = arith.constant 0 : i32
    return %c0_i32, %c0_i32_0 : i32, i32
  }
  func.func @transform_5(%arg0: i32, %arg1: i32) -> (i32, i32) {
    %c0_i32 = arith.constant 0 : i32
    %c0_i32_0 = arith.constant 0 : i32
    %c0_i32_1 = arith.constant 0 : i32
    return %c0_i32, %c0_i32_0 : i32, i32
  }
  func.func @transform_6(%arg0: i32, %arg1: i32) -> (i32, i32) {
    %c0_i32 = arith.constant 0 : i32
    %c0_i32_0 = arith.constant 0 : i32
    %c0_i32_1 = arith.constant 0 : i32
    return %c0_i32, %c0_i32_0 : i32, i32
  }
  func.func @transform_7(%arg0: i32, %arg1: i32) -> (i32, i32) {
    %c0_i32 = arith.constant 0 : i32
    %c0_i32_0 = arith.constant 0 : i32
    %c0_i32_1 = arith.constant 0 : i32
    return %c0_i32, %c0_i32_0 : i32, i32
  }
  func.func @transform_8(%arg0: i32, %arg1: i32) -> (i32, i32) {
    %c0_i32 = arith.constant 0 : i32
    %c0_i32_0 = arith.constant 0 : i32
    %c0_i32_1 = arith.constant 0 : i32
    return %c0_i32, %c0_i32_0 : i32, i32
  }
  func.func @transform_9(%arg0: i32, %arg1: i32) -> (i32, i32) {
    %c0_i32 = arith.constant 0 : i32
    %c0_i32_0 = arith.constant 0 : i32
    %c0_i32_1 = arith.constant 0 : i32
    return %c0_i32, %c0_i32_0 : i32, i32
  }
  func.func @transform_10(%arg0: i32, %arg1: i32) -> (i32, i32) {
    %c0_i32 = arith.constant 0 : i32
    %c0_i32_0 = arith.constant 0 : i32
    %c0_i32_1 = arith.constant 0 : i32
    return %c0_i32, %c0_i32_0 : i32, i32
  }
  func.func @transform_11(%arg0: i32, %arg1: i32) -> (i32, i32) {
    %c0_i32 = arith.constant 0 : i32
    %c0_i32_0 = arith.constant 0 : i32
    %c0_i32_1 = arith.constant 0 : i32
    return %c0_i32, %c0_i32_0 : i32, i32
  }
  func.func @transform_12(%arg0: i32, %arg1: i32) -> (i32, i32) {
    %c0_i32 = arith.constant 0 : i32
    %c0_i32_0 = arith.constant 0 : i32
    %c0_i32_1 = arith.constant 0 : i32
    return %c0_i32, %c0_i32_0 : i32, i32
  }
  func.func @transform_13(%arg0: i32, %arg1: i32) -> (i32, i32) {
    %c0_i32 = arith.constant 0 : i32
    %c0_i32_0 = arith.constant 0 : i32
    %c0_i32_1 = arith.constant 0 : i32
    return %c0_i32, %c0_i32_0 : i32, i32
  }
  func.func @transform_14(%arg0: i32, %arg1: i32) -> (i32, i32) {
    %c0_i32 = arith.constant 0 : i32
    %c0_i32_0 = arith.constant 0 : i32
    %c0_i32_1 = arith.constant 0 : i32
    return %c0_i32, %c0_i32_0 : i32, i32
  }
  func.func @transform_15(%arg0: i32, %arg1: i32) -> (i32, i32) {
    %c0_i32 = arith.constant 0 : i32
    %c0_i32_0 = arith.constant 0 : i32
    %c0_i32_1 = arith.constant 0 : i32
    return %c0_i32, %c0_i32_0 : i32, i32
  }
  func.func @transform_16(%arg0: i32, %arg1: i32) -> (i32, i32) {
    %c0_i32 = arith.constant 0 : i32
    %c0_i32_0 = arith.constant 0 : i32
    %c0_i32_1 = arith.constant 0 : i32
    return %c0_i32, %c0_i32_0 : i32, i32
  }
  func.func @transform_17(%arg0: i32, %arg1: i32) -> (i32, i32) {
    %c0_i32 = arith.constant 0 : i32
    %c0_i32_0 = arith.constant 0 : i32
    %c0_i32_1 = arith.constant 0 : i32
    return %c0_i32, %c0_i32_0 : i32, i32
  }
  func.func @transform_18(%arg0: i32, %arg1: i32) -> (i32, i32) {
    %c0_i32 = arith.constant 0 : i32
    %c0_i32_0 = arith.constant 0 : i32
    %c0_i32_1 = arith.constant 0 : i32
    return %c0_i32, %c0_i32_0 : i32, i32
  }
  func.func @transform_19(%arg0: i32, %arg1: i32) -> (i32, i32) {
    %c0_i32 = arith.constant 0 : i32
    %c0_i32_0 = arith.constant 0 : i32
    %c0_i32_1 = arith.constant 0 : i32
    return %c0_i32, %c0_i32_0 : i32, i32
  }
  func.func @transform_20(%arg0: i32, %arg1: i32) -> (i32, i32, i32) {
    %c0_i32 = arith.constant 0 : i32
    %c0_i32_0 = arith.constant 0 : i32
    return %arg0, %arg1, %c0_i32 : i32, i32, i32
  }
}

module attributes {stable_mosaic.version = 11 : i64} {
  func.func @encoder_layer_kernel(%arg0: i32, %arg1: i32, %arg2: memref<1x8x32xf32, #tpu.memory_space<vmem>>, %arg3: memref<1x1x8xf32, #tpu.memory_space<vmem>>, %arg4: memref<32x32xbf16, #tpu.memory_space<vmem>>, %arg5: memref<1x32xf32, #tpu.memory_space<vmem>>, %arg6: memref<32x32xbf16, #tpu.memory_space<vmem>>, %arg7: memref<1x32xf32, #tpu.memory_space<vmem>>, %arg8: memref<32x32xbf16, #tpu.memory_space<vmem>>, %arg9: memref<1x32xf32, #tpu.memory_space<vmem>>, %arg10: memref<32x32xbf16, #tpu.memory_space<vmem>>, %arg11: memref<1x32xf32, #tpu.memory_space<vmem>>, %arg12: memref<32x64xbf16, #tpu.memory_space<vmem>>, %arg13: memref<1x64xf32, #tpu.memory_space<vmem>>, %arg14: memref<64x32xbf16, #tpu.memory_space<vmem>>, %arg15: memref<1x32xf32, #tpu.memory_space<vmem>>, %arg16: memref<1x32xf32, #tpu.memory_space<vmem>>, %arg17: memref<1x32xf32, #tpu.memory_space<vmem>>, %arg18: memref<1x32xf32, #tpu.memory_space<vmem>>, %arg19: memref<1x32xf32, #tpu.memory_space<vmem>>, %arg20: memref<1x32xf32, #tpu.memory_space<vmem>>, %arg21: memref<1x32xf32, #tpu.memory_space<vmem>>, %arg22: memref<1x8x32xf32, #tpu.memory_space<vmem>>, %arg23: memref<8x32xbf16, #tpu.memory_space<vmem>>, %arg24: memref<8x32xbf16, #tpu.memory_space<vmem>>, %arg25: memref<8x32xbf16, #tpu.memory_space<vmem>>, %arg26: memref<8x32xbf16, #tpu.memory_space<vmem>>) attributes {dimension_semantics = [#tpu.dimension_semantics<parallel>, #tpu.dimension_semantics<arbitrary>], iteration_bounds = array<i64: 2, 1>, scalar_prefetch = 0 : i64, scratch_operands = 4 : i64, tpu.core_type = #tpu.core_type<tc>, window_params = [{transform_indices = @transform_0, window_bounds = array<i64: 1, 8, 32>}, {transform_indices = @transform_1, window_bounds = array<i64: 1, 1, 8>}, {pipeline_mode = #tpu.pipeline_mode<synchronous>, transform_indices = @transform_2, window_bounds = array<i64: 32, 32>}, {pipeline_mode = #tpu.pipeline_mode<synchronous>, transform_indices = @transform_3, window_bounds = array<i64: 1, 32>}, {pipeline_mode = #tpu.pipeline_mode<synchronous>, transform_indices = @transform_4, window_bounds = array<i64: 32, 32>}, {pipeline_mode = #tpu.pipeline_mode<synchronous>, transform_indices = @transform_5, window_bounds = array<i64: 1, 32>}, {pipeline_mode = #tpu.pipeline_mode<synchronous>, transform_indices = @transform_6, window_bounds = array<i64: 32, 32>}, {pipeline_mode = #tpu.pipeline_mode<synchronous>, transform_indices = @transform_7, window_bounds = array<i64: 1, 32>}, {pipeline_mode = #tpu.pipeline_mode<synchronous>, transform_indices = @transform_8, window_bounds = array<i64: 32, 32>}, {pipeline_mode = #tpu.pipeline_mode<synchronous>, transform_indices = @transform_9, window_bounds = array<i64: 1, 32>}, {pipeline_mode = #tpu.pipeline_mode<synchronous>, transform_indices = @transform_10, window_bounds = array<i64: 32, 64>}, {pipeline_mode = #tpu.pipeline_mode<synchronous>, transform_indices = @transform_11, window_bounds = array<i64: 1, 64>}, {pipeline_mode = #tpu.pipeline_mode<synchronous>, transform_indices = @transform_12, window_bounds = array<i64: 64, 32>}, {pipeline_mode = #tpu.pipeline_mode<synchronous>, transform_indices = @transform_13, window_bounds = array<i64: 1, 32>}, {pipeline_mode = #tpu.pipeline_mode<synchronous>, transform_indices = @transform_14, window_bounds = array<i64: 1, 32>}, {pipeline_mode = #tpu.pipeline_mode<synchronous>, transform_indices = @transform_15, window_bounds = array<i64: 1, 32>}, {pipeline_mode = #tpu.pipeline_mode<synchronous>, transform_indices = @transform_16, window_bounds = array<i64: 1, 32>}, {pipeline_mode = #tpu.pipeline_mode<synchronous>, transform_indices = @transform_17, window_bounds = array<i64: 1, 32>}, {pipeline_mode = #tpu.pipeline_mode<synchronous>, transform_indices = @transform_18, window_bounds = array<i64: 1, 32>}, {pipeline_mode = #tpu.pipeline_mode<synchronous>, transform_indices = @transform_19, window_bounds = array<i64: 1, 32>}, {transform_indices = @transform_20, window_bounds = array<i64: 1, 8, 32>}]} {
    %c0_i32 = arith.constant 0 : i32
    %0 = arith.cmpi eq, %arg1, %c0_i32 : i32
    %1 = arith.extui %0 : i1 to i32
    %c0_i32_0 = arith.constant 0 : i32
    %2 = arith.cmpi ne, %1, %c0_i32_0 : i32
    scf.if %2 {
      %c0_77 = arith.constant 0 : index
      %c0_78 = arith.constant 0 : index
      %c0_79 = arith.constant 0 : index
      %148 = vector.load %arg2[%c0_77, %c0_78, %c0_79] : memref<1x8x32xf32, #tpu.memory_space<vmem>>, vector<1x8x32xf32>
      %149 = vector.shape_cast %148 : vector<1x8x32xf32> to vector<8x32xf32>
      %c0_80 = arith.constant 0 : index
      %c0_81 = arith.constant 0 : index
      %150 = vector.load %arg16[%c0_80, %c0_81] : memref<1x32xf32, #tpu.memory_space<vmem>>, vector<1x32xf32>
      %c0_82 = arith.constant 0 : index
      %c0_83 = arith.constant 0 : index
      %151 = vector.load %arg17[%c0_82, %c0_83] : memref<1x32xf32, #tpu.memory_space<vmem>>, vector<1x32xf32>
      %cst_84 = arith.constant dense<0.000000e+00> : vector<8xf32>
      %152 = vector.multi_reduction <add>, %149, %cst_84 [1] : vector<8x32xf32> to vector<8xf32>
      %153 = vector.shape_cast %152 : vector<8xf32> to vector<8x1xf32>
      %cst_85 = arith.constant 3.200000e+01 : f32
      %154 = vector.broadcast %cst_85 : f32 to vector<8x1xf32>
      %155 = arith.divf %153, %154 : vector<8x1xf32>
      %156 = vector.broadcast %155 : vector<8x1xf32> to vector<8x32xf32>
      %157 = arith.subf %149, %156 : vector<8x32xf32>
      %158 = arith.mulf %157, %157 : vector<8x32xf32>
      %cst_86 = arith.constant dense<0.000000e+00> : vector<8xf32>
      %159 = vector.multi_reduction <add>, %158, %cst_86 [1] : vector<8x32xf32> to vector<8xf32>
      %160 = vector.shape_cast %159 : vector<8xf32> to vector<8x1xf32>
      %cst_87 = arith.constant 0.0322580636 : f32
      %161 = vector.broadcast %cst_87 : f32 to vector<8x1xf32>
      %162 = arith.mulf %160, %161 : vector<8x1xf32>
      %163 = math.sqrt %162 : vector<8x1xf32>
      %164 = vector.broadcast %150 : vector<1x32xf32> to vector<8x32xf32>
      %165 = arith.mulf %164, %157 : vector<8x32xf32>
      %cst_88 = arith.constant 9.99999997E-7 : f32
      %166 = vector.broadcast %cst_88 : f32 to vector<8x1xf32>
      %167 = arith.addf %163, %166 : vector<8x1xf32>
      %cst_89 = arith.constant 1.000000e+00 : f32
      %168 = vector.broadcast %cst_89 : f32 to vector<8x1xf32>
      %169 = arith.divf %168, %167 : vector<8x1xf32>
      %170 = vector.broadcast %169 : vector<8x1xf32> to vector<8x32xf32>
      %171 = arith.mulf %165, %170 : vector<8x32xf32>
      %172 = vector.broadcast %151 : vector<1x32xf32> to vector<8x32xf32>
      %173 = arith.addf %171, %172 : vector<8x32xf32>
      %174 = arith.truncf %173 : vector<8x32xf32> to vector<8x32xbf16>
      %c0_90 = arith.constant 0 : index
      %c0_91 = arith.constant 0 : index
      %175 = vector.load %arg4[%c0_90, %c0_91] : memref<32x32xbf16, #tpu.memory_space<vmem>>, vector<32x32xbf16>
      %cst_92 = arith.constant dense<0.000000e+00> : vector<8x32xf32>
      %176 = tpu.matmul %174, %175, %cst_92 {dimension_numbers = #tpu.dot_dimension_numbers<[1], [0], [0], [1], [0, 0, 1, 1], [], []>} : vector<8x32xbf16>, vector<32x32xbf16>, vector<8x32xf32> -> vector<8x32xf32>
      %c0_93 = arith.constant 0 : index
      %c0_94 = arith.constant 0 : index
      %177 = vector.load %arg5[%c0_93, %c0_94] : memref<1x32xf32, #tpu.memory_space<vmem>>, vector<1x32xf32>
      %178 = vector.broadcast %177 : vector<1x32xf32> to vector<8x32xf32>
      %179 = arith.addf %176, %178 : vector<8x32xf32>
      %cst_95 = arith.constant 0.353553385 : f32
      %180 = vector.broadcast %cst_95 : f32 to vector<8x32xf32>
      %181 = arith.mulf %179, %180 : vector<8x32xf32>
      %182 = arith.truncf %181 : vector<8x32xf32> to vector<8x32xbf16>
      %c0_96 = arith.constant 0 : index
      %c0_97 = arith.constant 0 : index
      %183 = vector.load %arg23[%c0_96, %c0_97] : memref<8x32xbf16, #tpu.memory_space<vmem>>, vector<8x32xbf16>
      tpu.vector_store %arg23[%c0_96, %c0_97], %182 {strides = array<i32>} : memref<8x32xbf16, #tpu.memory_space<vmem>>, vector<8x32xbf16>,
      %c0_98 = arith.constant 0 : index
      %c0_99 = arith.constant 0 : index
      %184 = vector.load %arg6[%c0_98, %c0_99] : memref<32x32xbf16, #tpu.memory_space<vmem>>, vector<32x32xbf16>
      %cst_100 = arith.constant dense<0.000000e+00> : vector<8x32xf32>
      %185 = tpu.matmul %174, %184, %cst_100 {dimension_numbers = #tpu.dot_dimension_numbers<[1], [0], [0], [1], [0, 0, 1, 1], [], []>} : vector<8x32xbf16>, vector<32x32xbf16>, vector<8x32xf32> -> vector<8x32xf32>
      %c0_101 = arith.constant 0 : index
      %c0_102 = arith.constant 0 : index
      %186 = vector.load %arg7[%c0_101, %c0_102] : memref<1x32xf32, #tpu.memory_space<vmem>>, vector<1x32xf32>
      %187 = vector.broadcast %186 : vector<1x32xf32> to vector<8x32xf32>
      %188 = arith.addf %185, %187 : vector<8x32xf32>
      %189 = arith.truncf %188 : vector<8x32xf32> to vector<8x32xbf16>
      %c0_103 = arith.constant 0 : index
      %c0_104 = arith.constant 0 : index
      %190 = vector.load %arg24[%c0_103, %c0_104] : memref<8x32xbf16, #tpu.memory_space<vmem>>, vector<8x32xbf16>
      tpu.vector_store %arg24[%c0_103, %c0_104], %189 {strides = array<i32>} : memref<8x32xbf16, #tpu.memory_space<vmem>>, vector<8x32xbf16>,
      %c0_105 = arith.constant 0 : index
      %c0_106 = arith.constant 0 : index
      %191 = vector.load %arg8[%c0_105, %c0_106] : memref<32x32xbf16, #tpu.memory_space<vmem>>, vector<32x32xbf16>
      %cst_107 = arith.constant dense<0.000000e+00> : vector<8x32xf32>
      %192 = tpu.matmul %174, %191, %cst_107 {dimension_numbers = #tpu.dot_dimension_numbers<[1], [0], [0], [1], [0, 0, 1, 1], [], []>} : vector<8x32xbf16>, vector<32x32xbf16>, vector<8x32xf32> -> vector<8x32xf32>
      %c0_108 = arith.constant 0 : index
      %c0_109 = arith.constant 0 : index
      %193 = vector.load %arg9[%c0_108, %c0_109] : memref<1x32xf32, #tpu.memory_space<vmem>>, vector<1x32xf32>
      %194 = vector.broadcast %193 : vector<1x32xf32> to vector<8x32xf32>
      %195 = arith.addf %192, %194 : vector<8x32xf32>
      %196 = arith.truncf %195 : vector<8x32xf32> to vector<8x32xbf16>
      %c0_110 = arith.constant 0 : index
      %c0_111 = arith.constant 0 : index
      %197 = vector.load %arg25[%c0_110, %c0_111] : memref<8x32xbf16, #tpu.memory_space<vmem>>, vector<8x32xbf16>
      tpu.vector_store %arg25[%c0_110, %c0_111], %196 {strides = array<i32>} : memref<8x32xbf16, #tpu.memory_space<vmem>>, vector<8x32xbf16>,
    } else {
    }
    %c8_i32 = arith.constant 8 : i32
    %3 = arith.muli %arg1, %c8_i32 : i32
    %4 = tpu.assume_multiple %3, 8 : i32
    %c0 = arith.constant 0 : index
    %5 = arith.index_cast %4 : i32 to index
    %c0_1 = arith.constant 0 : index
    %6 = vector.load %arg2[%c0, %5, %c0_1] : memref<1x8x32xf32, #tpu.memory_space<vmem>>, vector<1x8x32xf32>
    %7 = vector.shape_cast %6 : vector<1x8x32xf32> to vector<8x32xf32>
    %c0_2 = arith.constant 0 : index
    %c0_3 = arith.constant 0 : index
    %c0_4 = arith.constant 0 : index
    %8 = vector.load %arg3[%c0_2, %c0_3, %c0_4] : memref<1x1x8xf32, #tpu.memory_space<vmem>>, vector<1x1x8xf32>
    %9 = vector.shape_cast %8 : vector<1x1x8xf32> to vector<1x8xf32>
    %cst = arith.constant 0.000000e+00 : f32
    %10 = vector.broadcast %cst : f32 to vector<1x8xf32>
    %11 = arith.cmpf one, %9, %10 : vector<1x8xf32>
    %cst_5 = arith.constant 0.000000e+00 : f32
    %cst_6 = arith.constant -1.000000e+09 : f32
    %12 = vector.broadcast %cst_5 : f32 to vector<1x8xf32>
    %13 = vector.broadcast %cst_6 : f32 to vector<1x8xf32>
    %14 = arith.select %11, %12, %13 : vector<1x8xi1>, vector<1x8xf32>
    %15 = arith.index_cast %4 : i32 to index
    %c0_7 = arith.constant 0 : index
    %16 = vector.load %arg23[%15, %c0_7] : memref<8x32xbf16, #tpu.memory_space<vmem>>, vector<8x32xbf16>
    %17 = vector.extract_strided_slice %16 {offsets = [0, 0], sizes = [8, 8], strides = [1, 1]} : vector<8x32xbf16> to vector<8x8xbf16>
    %c0_8 = arith.constant 0 : index
    %c0_9 = arith.constant 0 : index
    %18 = vector.load %arg24[%c0_8, %c0_9] : memref<8x32xbf16, #tpu.memory_space<vmem>>, vector<8x8xbf16>
    %c0_10 = arith.constant 0 : index
    %c0_11 = arith.constant 0 : index
    %19 = vector.load %arg25[%c0_10, %c0_11] : memref<8x32xbf16, #tpu.memory_space<vmem>>, vector<8x8xbf16>
    %cst_12 = arith.constant dense<0.000000e+00> : vector<8x8xf32>
    %20 = tpu.matmul %17, %18, %cst_12 {dimension_numbers = #tpu.dot_dimension_numbers<[1], [1], [0], [0], [0, 0, 1, 0], [], []>} : vector<8x8xbf16>, vector<8x8xbf16>, vector<8x8xf32> -> vector<8x8xf32>
    %21 = vector.broadcast %14 : vector<1x8xf32> to vector<8x8xf32>
    %22 = arith.addf %20, %21 : vector<8x8xf32>
    %cst_13 = arith.constant dense<0xFF800000> : vector<8xf32>
    %23 = vector.multi_reduction <maximumf>, %22, %cst_13 [1] : vector<8x8xf32> to vector<8xf32>
    %24 = vector.shape_cast %23 : vector<8xf32> to vector<8x1xf32>
    %25 = vector.broadcast %24 : vector<8x1xf32> to vector<8x8xf32>
    %26 = arith.subf %22, %25 : vector<8x8xf32>
    %27 = math.exp %26 : vector<8x8xf32>
    %cst_14 = arith.constant dense<0.000000e+00> : vector<8xf32>
    %28 = vector.multi_reduction <add>, %27, %cst_14 [1] : vector<8x8xf32> to vector<8xf32>
    %29 = vector.shape_cast %28 : vector<8xf32> to vector<8x1xf32>
    %30 = tpu.reciprocal %29 {approx = true} : vector<8x1xf32> -> vector<8x1xf32>
    %31 = vector.broadcast %30 : vector<8x1xf32> to vector<8x8xf32>
    %32 = arith.mulf %27, %31 : vector<8x8xf32>
    %33 = arith.truncf %32 : vector<8x8xf32> to vector<8x8xbf16>
    %cst_15 = arith.constant dense<0.000000e+00> : vector<8x8xf32>
    %34 = tpu.matmul %33, %19, %cst_15 {dimension_numbers = #tpu.dot_dimension_numbers<[1], [0], [0], [1], [0, 0, 1, 1], [], []>} : vector<8x8xbf16>, vector<8x8xbf16>, vector<8x8xf32> -> vector<8x8xf32>
    %35 = arith.truncf %34 : vector<8x8xf32> to vector<8x8xbf16>
    %c0_16 = arith.constant 0 : index
    %c0_17 = arith.constant 0 : index
    %36 = vector.load %arg26[%c0_16, %c0_17] : memref<8x32xbf16, #tpu.memory_space<vmem>>, vector<8x8xbf16>
    tpu.vector_store %arg26[%c0_16, %c0_17], %35 {strides = array<i32>} : memref<8x32xbf16, #tpu.memory_space<vmem>>, vector<8x8xbf16>,
    %37 = vector.extract_strided_slice %16 {offsets = [0, 8], sizes = [8, 8], strides = [1, 1]} : vector<8x32xbf16> to vector<8x8xbf16>
    %c0_18 = arith.constant 0 : index
    %c8 = arith.constant 8 : index
    %38 = vector.load %arg24[%c0_18, %c8] : memref<8x32xbf16, #tpu.memory_space<vmem>>, vector<8x8xbf16>
    %c0_19 = arith.constant 0 : index
    %c8_20 = arith.constant 8 : index
    %39 = vector.load %arg25[%c0_19, %c8_20] : memref<8x32xbf16, #tpu.memory_space<vmem>>, vector<8x8xbf16>
    %cst_21 = arith.constant dense<0.000000e+00> : vector<8x8xf32>
    %40 = tpu.matmul %37, %38, %cst_21 {dimension_numbers = #tpu.dot_dimension_numbers<[1], [1], [0], [0], [0, 0, 1, 0], [], []>} : vector<8x8xbf16>, vector<8x8xbf16>, vector<8x8xf32> -> vector<8x8xf32>
    %41 = vector.broadcast %14 : vector<1x8xf32> to vector<8x8xf32>
    %42 = arith.addf %40, %41 : vector<8x8xf32>
    %cst_22 = arith.constant dense<0xFF800000> : vector<8xf32>
    %43 = vector.multi_reduction <maximumf>, %42, %cst_22 [1] : vector<8x8xf32> to vector<8xf32>
    %44 = vector.shape_cast %43 : vector<8xf32> to vector<8x1xf32>
    %45 = vector.broadcast %44 : vector<8x1xf32> to vector<8x8xf32>
    %46 = arith.subf %42, %45 : vector<8x8xf32>
    %47 = math.exp %46 : vector<8x8xf32>
    %cst_23 = arith.constant dense<0.000000e+00> : vector<8xf32>
    %48 = vector.multi_reduction <add>, %47, %cst_23 [1] : vector<8x8xf32> to vector<8xf32>
    %49 = vector.shape_cast %48 : vector<8xf32> to vector<8x1xf32>
    %50 = tpu.reciprocal %49 {approx = true} : vector<8x1xf32> -> vector<8x1xf32>
    %51 = vector.broadcast %50 : vector<8x1xf32> to vector<8x8xf32>
    %52 = arith.mulf %47, %51 : vector<8x8xf32>
    %53 = arith.truncf %52 : vector<8x8xf32> to vector<8x8xbf16>
    %cst_24 = arith.constant dense<0.000000e+00> : vector<8x8xf32>
    %54 = tpu.matmul %53, %39, %cst_24 {dimension_numbers = #tpu.dot_dimension_numbers<[1], [0], [0], [1], [0, 0, 1, 1], [], []>} : vector<8x8xbf16>, vector<8x8xbf16>, vector<8x8xf32> -> vector<8x8xf32>
    %55 = arith.truncf %54 : vector<8x8xf32> to vector<8x8xbf16>
    %c0_25 = arith.constant 0 : index
    %c8_26 = arith.constant 8 : index
    %56 = vector.load %arg26[%c0_25, %c8_26] : memref<8x32xbf16, #tpu.memory_space<vmem>>, vector<8x8xbf16>
    tpu.vector_store %arg26[%c0_25, %c8_26], %55 {strides = array<i32>} : memref<8x32xbf16, #tpu.memory_space<vmem>>, vector<8x8xbf16>,
    %57 = vector.extract_strided_slice %16 {offsets = [0, 16], sizes = [8, 8], strides = [1, 1]} : vector<8x32xbf16> to vector<8x8xbf16>
    %c0_27 = arith.constant 0 : index
    %c16 = arith.constant 16 : index
    %58 = vector.load %arg24[%c0_27, %c16] : memref<8x32xbf16, #tpu.memory_space<vmem>>, vector<8x8xbf16>
    %c0_28 = arith.constant 0 : index
    %c16_29 = arith.constant 16 : index
    %59 = vector.load %arg25[%c0_28, %c16_29] : memref<8x32xbf16, #tpu.memory_space<vmem>>, vector<8x8xbf16>
    %cst_30 = arith.constant dense<0.000000e+00> : vector<8x8xf32>
    %60 = tpu.matmul %57, %58, %cst_30 {dimension_numbers = #tpu.dot_dimension_numbers<[1], [1], [0], [0], [0, 0, 1, 0], [], []>} : vector<8x8xbf16>, vector<8x8xbf16>, vector<8x8xf32> -> vector<8x8xf32>
    %61 = vector.broadcast %14 : vector<1x8xf32> to vector<8x8xf32>
    %62 = arith.addf %60, %61 : vector<8x8xf32>
    %cst_31 = arith.constant dense<0xFF800000> : vector<8xf32>
    %63 = vector.multi_reduction <maximumf>, %62, %cst_31 [1] : vector<8x8xf32> to vector<8xf32>
    %64 = vector.shape_cast %63 : vector<8xf32> to vector<8x1xf32>
    %65 = vector.broadcast %64 : vector<8x1xf32> to vector<8x8xf32>
    %66 = arith.subf %62, %65 : vector<8x8xf32>
    %67 = math.exp %66 : vector<8x8xf32>
    %cst_32 = arith.constant dense<0.000000e+00> : vector<8xf32>
    %68 = vector.multi_reduction <add>, %67, %cst_32 [1] : vector<8x8xf32> to vector<8xf32>
    %69 = vector.shape_cast %68 : vector<8xf32> to vector<8x1xf32>
    %70 = tpu.reciprocal %69 {approx = true} : vector<8x1xf32> -> vector<8x1xf32>
    %71 = vector.broadcast %70 : vector<8x1xf32> to vector<8x8xf32>
    %72 = arith.mulf %67, %71 : vector<8x8xf32>
    %73 = arith.truncf %72 : vector<8x8xf32> to vector<8x8xbf16>
    %cst_33 = arith.constant dense<0.000000e+00> : vector<8x8xf32>
    %74 = tpu.matmul %73, %59, %cst_33 {dimension_numbers = #tpu.dot_dimension_numbers<[1], [0], [0], [1], [0, 0, 1, 1], [], []>} : vector<8x8xbf16>, vector<8x8xbf16>, vector<8x8xf32> -> vector<8x8xf32>
    %75 = arith.truncf %74 : vector<8x8xf32> to vector<8x8xbf16>
    %c0_34 = arith.constant 0 : index
    %c16_35 = arith.constant 16 : index
    %76 = vector.load %arg26[%c0_34, %c16_35] : memref<8x32xbf16, #tpu.memory_space<vmem>>, vector<8x8xbf16>
    tpu.vector_store %arg26[%c0_34, %c16_35], %75 {strides = array<i32>} : memref<8x32xbf16, #tpu.memory_space<vmem>>, vector<8x8xbf16>,
    %77 = vector.extract_strided_slice %16 {offsets = [0, 24], sizes = [8, 8], strides = [1, 1]} : vector<8x32xbf16> to vector<8x8xbf16>
    %c0_36 = arith.constant 0 : index
    %c24 = arith.constant 24 : index
    %78 = vector.load %arg24[%c0_36, %c24] : memref<8x32xbf16, #tpu.memory_space<vmem>>, vector<8x8xbf16>
    %c0_37 = arith.constant 0 : index
    %c24_38 = arith.constant 24 : index
    %79 = vector.load %arg25[%c0_37, %c24_38] : memref<8x32xbf16, #tpu.memory_space<vmem>>, vector<8x8xbf16>
    %cst_39 = arith.constant dense<0.000000e+00> : vector<8x8xf32>
    %80 = tpu.matmul %77, %78, %cst_39 {dimension_numbers = #tpu.dot_dimension_numbers<[1], [1], [0], [0], [0, 0, 1, 0], [], []>} : vector<8x8xbf16>, vector<8x8xbf16>, vector<8x8xf32> -> vector<8x8xf32>
    %81 = vector.broadcast %14 : vector<1x8xf32> to vector<8x8xf32>
    %82 = arith.addf %80, %81 : vector<8x8xf32>
    %cst_40 = arith.constant dense<0xFF800000> : vector<8xf32>
    %83 = vector.multi_reduction <maximumf>, %82, %cst_40 [1] : vector<8x8xf32> to vector<8xf32>
    %84 = vector.shape_cast %83 : vector<8xf32> to vector<8x1xf32>
    %85 = vector.broadcast %84 : vector<8x1xf32> to vector<8x8xf32>
    %86 = arith.subf %82, %85 : vector<8x8xf32>
    %87 = math.exp %86 : vector<8x8xf32>
    %cst_41 = arith.constant dense<0.000000e+00> : vector<8xf32>
    %88 = vector.multi_reduction <add>, %87, %cst_41 [1] : vector<8x8xf32> to vector<8xf32>
    %89 = vector.shape_cast %88 : vector<8xf32> to vector<8x1xf32>
    %90 = tpu.reciprocal %89 {approx = true} : vector<8x1xf32> -> vector<8x1xf32>
    %91 = vector.broadcast %90 : vector<8x1xf32> to vector<8x8xf32>
    %92 = arith.mulf %87, %91 : vector<8x8xf32>
    %93 = arith.truncf %92 : vector<8x8xf32> to vector<8x8xbf16>
    %cst_42 = arith.constant dense<0.000000e+00> : vector<8x8xf32>
    %94 = tpu.matmul %93, %79, %cst_42 {dimension_numbers = #tpu.dot_dimension_numbers<[1], [0], [0], [1], [0, 0, 1, 1], [], []>} : vector<8x8xbf16>, vector<8x8xbf16>, vector<8x8xf32> -> vector<8x8xf32>
    %95 = arith.truncf %94 : vector<8x8xf32> to vector<8x8xbf16>
    %c0_43 = arith.constant 0 : index
    %c24_44 = arith.constant 24 : index
    %96 = vector.load %arg26[%c0_43, %c24_44] : memref<8x32xbf16, #tpu.memory_space<vmem>>, vector<8x8xbf16>
    tpu.vector_store %arg26[%c0_43, %c24_44], %95 {strides = array<i32>} : memref<8x32xbf16, #tpu.memory_space<vmem>>, vector<8x8xbf16>,
    %c0_45 = arith.constant 0 : index
    %c0_46 = arith.constant 0 : index
    %97 = vector.load %arg26[%c0_45, %c0_46] : memref<8x32xbf16, #tpu.memory_space<vmem>>, vector<8x32xbf16>
    %c0_47 = arith.constant 0 : index
    %c0_48 = arith.constant 0 : index
    %98 = vector.load %arg10[%c0_47, %c0_48] : memref<32x32xbf16, #tpu.memory_space<vmem>>, vector<32x32xbf16>
    %cst_49 = arith.constant dense<0.000000e+00> : vector<8x32xf32>
    %99 = tpu.matmul %97, %98, %cst_49 {dimension_numbers = #tpu.dot_dimension_numbers<[1], [0], [0], [1], [0, 0, 1, 1], [], []>} : vector<8x32xbf16>, vector<32x32xbf16>, vector<8x32xf32> -> vector<8x32xf32>
    %100 = arith.addf %7, %99 : vector<8x32xf32>
    %c0_50 = arith.constant 0 : index
    %c0_51 = arith.constant 0 : index
    %101 = vector.load %arg11[%c0_50, %c0_51] : memref<1x32xf32, #tpu.memory_space<vmem>>, vector<1x32xf32>
    %102 = vector.broadcast %101 : vector<1x32xf32> to vector<8x32xf32>
    %103 = arith.addf %100, %102 : vector<8x32xf32>
    %c0_52 = arith.constant 0 : index
    %c0_53 = arith.constant 0 : index
    %104 = vector.load %arg18[%c0_52, %c0_53] : memref<1x32xf32, #tpu.memory_space<vmem>>, vector<1x32xf32>
    %c0_54 = arith.constant 0 : index
    %c0_55 = arith.constant 0 : index
    %105 = vector.load %arg19[%c0_54, %c0_55] : memref<1x32xf32, #tpu.memory_space<vmem>>, vector<1x32xf32>
    %cst_56 = arith.constant dense<0.000000e+00> : vector<8xf32>
    %106 = vector.multi_reduction <add>, %103, %cst_56 [1] : vector<8x32xf32> to vector<8xf32>
    %107 = vector.shape_cast %106 : vector<8xf32> to vector<8x1xf32>
    %cst_57 = arith.constant 3.200000e+01 : f32
    %108 = vector.broadcast %cst_57 : f32 to vector<8x1xf32>
    %109 = arith.divf %107, %108 : vector<8x1xf32>
    %110 = vector.broadcast %109 : vector<8x1xf32> to vector<8x32xf32>
    %111 = arith.subf %103, %110 : vector<8x32xf32>
    %112 = arith.mulf %111, %111 : vector<8x32xf32>
    %cst_58 = arith.constant dense<0.000000e+00> : vector<8xf32>
    %113 = vector.multi_reduction <add>, %112, %cst_58 [1] : vector<8x32xf32> to vector<8xf32>
    %114 = vector.shape_cast %113 : vector<8xf32> to vector<8x1xf32>
    %cst_59 = arith.constant 0.0322580636 : f32
    %115 = vector.broadcast %cst_59 : f32 to vector<8x1xf32>
    %116 = arith.mulf %114, %115 : vector<8x1xf32>
    %117 = math.sqrt %116 : vector<8x1xf32>
    %118 = vector.broadcast %104 : vector<1x32xf32> to vector<8x32xf32>
    %119 = arith.mulf %118, %111 : vector<8x32xf32>
    %cst_60 = arith.constant 9.99999997E-7 : f32
    %120 = vector.broadcast %cst_60 : f32 to vector<8x1xf32>
    %121 = arith.addf %117, %120 : vector<8x1xf32>
    %cst_61 = arith.constant 1.000000e+00 : f32
    %122 = vector.broadcast %cst_61 : f32 to vector<8x1xf32>
    %123 = arith.divf %122, %121 : vector<8x1xf32>
    %124 = vector.broadcast %123 : vector<8x1xf32> to vector<8x32xf32>
    %125 = arith.mulf %119, %124 : vector<8x32xf32>
    %126 = vector.broadcast %105 : vector<1x32xf32> to vector<8x32xf32>
    %127 = arith.addf %125, %126 : vector<8x32xf32>
    %128 = arith.truncf %127 : vector<8x32xf32> to vector<8x32xbf16>
    %cst_62 = arith.constant 0.000000e+00 : f32
    %129 = vector.broadcast %cst_62 : f32 to vector<8x32xf32>
    %c0_63 = arith.constant 0 : index
    %c0_64 = arith.constant 0 : index
    %130 = vector.load %arg12[%c0_63, %c0_64] : memref<32x64xbf16, #tpu.memory_space<vmem>>, vector<32x64xbf16>
    %cst_65 = arith.constant dense<0.000000e+00> : vector<8x64xf32>
    %131 = tpu.matmul %128, %130, %cst_65 {dimension_numbers = #tpu.dot_dimension_numbers<[1], [0], [0], [1], [0, 0, 1, 1], [], []>} : vector<8x32xbf16>, vector<32x64xbf16>, vector<8x64xf32> -> vector<8x64xf32>
    %c0_66 = arith.constant 0 : index
    %c0_67 = arith.constant 0 : index
    %132 = vector.load %arg13[%c0_66, %c0_67] : memref<1x64xf32, #tpu.memory_space<vmem>>, vector<1x64xf32>
    %133 = vector.broadcast %132 : vector<1x64xf32> to vector<8x64xf32>
    %134 = arith.addf %131, %133 : vector<8x64xf32>
    %cst_68 = arith.constant 0.000000e+00 : f32
    %135 = vector.broadcast %cst_68 : f32 to vector<8x64xf32>
    %136 = arith.maximumf %134, %135 : vector<8x64xf32>
    %137 = arith.truncf %136 : vector<8x64xf32> to vector<8x64xbf16>
    %c0_69 = arith.constant 0 : index
    %c0_70 = arith.constant 0 : index
    %138 = vector.load %arg14[%c0_69, %c0_70] : memref<64x32xbf16, #tpu.memory_space<vmem>>, vector<64x32xbf16>
    %cst_71 = arith.constant dense<0.000000e+00> : vector<8x32xf32>
    %139 = tpu.matmul %137, %138, %cst_71 {dimension_numbers = #tpu.dot_dimension_numbers<[1], [0], [0], [1], [0, 0, 1, 1], [], []>} : vector<8x64xbf16>, vector<64x32xbf16>, vector<8x32xf32> -> vector<8x32xf32>
    %140 = arith.addf %129, %139 : vector<8x32xf32>
    %141 = arith.addf %103, %140 : vector<8x32xf32>
    %c0_72 = arith.constant 0 : index
    %c0_73 = arith.constant 0 : index
    %142 = vector.load %arg15[%c0_72, %c0_73] : memref<1x32xf32, #tpu.memory_space<vmem>>, vector<1x32xf32>
    %143 = vector.broadcast %142 : vector<1x32xf32> to vector<8x32xf32>
    %144 = arith.addf %141, %143 : vector<8x32xf32>
    %c0_74 = arith.constant 0 : index
    %c0_75 = arith.constant 0 : index
    %c0_76 = arith.constant 0 : index
    %145 = vector.load %arg22[%c0_74, %c0_75, %c0_76] : memref<1x8x32xf32, #tpu.memory_space<vmem>>, vector<1x8x32xf32>
    %146 = vector.shape_cast %145 : vector<1x8x32xf32> to vector<8x32xf32>
    %147 = vector.shape_cast %144 : vector<8x32xf32> to vector<1x8x32xf32>
    tpu.vector_store %arg22[%c0_74, %c0_75, %c0_76], %147 {strides = array<i32>} : memref<1x8x32xf32, #tpu.memory_space<vmem>>, vector<1x8x32xf32>,
    return
  }
  func.func @transform_0(%arg0: i32, %arg1: i32) -> (i32, i32, i32) {
    %c0_i32 = arith.constant 0 : i32
    %c0_i32_0 = arith.constant 0 : i32
    %c0_i32_1 = arith.constant 0 : i32
    return %arg0, %c0_i32, %c0_i32_0 : i32, i32, i32
  }
  func.func @transform_1(%arg0: i32, %arg1: i32) -> (i32, i32, i32) {
    %c0_i32 = arith.constant 0 : i32
    %c0_i32_0 = arith.constant 0 : i32
    %c0_i32_1 = arith.constant 0 : i32
    return %arg0, %c0_i32, %c0_i32_0 : i32, i32, i32
  }
  func.func @transform_2(%arg0: i32, %arg1: i32) -> (i32, i32) {
    %c0_i32 = arith.constant 0 : i32
    %c0_i32_0 = arith.constant 0 : i32
    %c0_i32_1 = arith.constant 0 : i32
    return %c0_i32, %c0_i32_0 : i32, i32
  }
  func.func @transform_3(%arg0: i32, %arg1: i32) -> (i32, i32) {
    %c0_i32 = arith.constant 0 : i32
    %c0_i32_0 = arith.constant 0 : i32
    %c0_i32_1 = arith.constant 0 : i32
    return %c0_i32, %c0_i32_0 : i32, i32
  }
  func.func @transform_4(%arg0: i32, %arg1: i32) -> (i32, i32) {
    %c0_i32 = arith.constant 0 : i32
    %c0_i32_0 = arith.constant 0 : i32
    %c0_i32_1 = arith.constant 0 : i32
    return %c0_i32, %c0_i32_0 : i32, i32
  }
  func.func @transform_5(%arg0: i32, %arg1: i32) -> (i32, i32) {
    %c0_i32 = arith.constant 0 : i32
    %c0_i32_0 = arith.constant 0 : i32
    %c0_i32_1 = arith.constant 0 : i32
    return %c0_i32, %c0_i32_0 : i32, i32
  }
  func.func @transform_6(%arg0: i32, %arg1: i32) -> (i32, i32) {
    %c0_i32 = arith.constant 0 : i32
    %c0_i32_0 = arith.constant 0 : i32
    %c0_i32_1 = arith.constant 0 : i32
    return %c0_i32, %c0_i32_0 : i32, i32
  }
  func.func @transform_7(%arg0: i32, %arg1: i32) -> (i32, i32) {
    %c0_i32 = arith.constant 0 : i32
    %c0_i32_0 = arith.constant 0 : i32
    %c0_i32_1 = arith.constant 0 : i32
    return %c0_i32, %c0_i32_0 : i32, i32
  }
  func.func @transform_8(%arg0: i32, %arg1: i32) -> (i32, i32) {
    %c0_i32 = arith.constant 0 : i32
    %c0_i32_0 = arith.constant 0 : i32
    %c0_i32_1 = arith.constant 0 : i32
    return %c0_i32, %c0_i32_0 : i32, i32
  }
  func.func @transform_9(%arg0: i32, %arg1: i32) -> (i32, i32) {
    %c0_i32 = arith.constant 0 : i32
    %c0_i32_0 = arith.constant 0 : i32
    %c0_i32_1 = arith.constant 0 : i32
    return %c0_i32, %c0_i32_0 : i32, i32
  }
  func.func @transform_10(%arg0: i32, %arg1: i32) -> (i32, i32) {
    %c0_i32 = arith.constant 0 : i32
    %c0_i32_0 = arith.constant 0 : i32
    %c0_i32_1 = arith.constant 0 : i32
    return %c0_i32, %c0_i32_0 : i32, i32
  }
  func.func @transform_11(%arg0: i32, %arg1: i32) -> (i32, i32) {
    %c0_i32 = arith.constant 0 : i32
    %c0_i32_0 = arith.constant 0 : i32
    %c0_i32_1 = arith.constant 0 : i32
    return %c0_i32, %c0_i32_0 : i32, i32
  }
  func.func @transform_12(%arg0: i32, %arg1: i32) -> (i32, i32) {
    %c0_i32 = arith.constant 0 : i32
    %c0_i32_0 = arith.constant 0 : i32
    %c0_i32_1 = arith.constant 0 : i32
    return %c0_i32, %c0_i32_0 : i32, i32
  }
  func.func @transform_13(%arg0: i32, %arg1: i32) -> (i32, i32) {
    %c0_i32 = arith.constant 0 : i32
    %c0_i32_0 = arith.constant 0 : i32
    %c0_i32_1 = arith.constant 0 : i32
    return %c0_i32, %c0_i32_0 : i32, i32
  }
  func.func @transform_14(%arg0: i32, %arg1: i32) -> (i32, i32) {
    %c0_i32 = arith.constant 0 : i32
    %c0_i32_0 = arith.constant 0 : i32
    %c0_i32_1 = arith.constant 0 : i32
    return %c0_i32, %c0_i32_0 : i32, i32
  }
  func.func @transform_15(%arg0: i32, %arg1: i32) -> (i32, i32) {
    %c0_i32 = arith.constant 0 : i32
    %c0_i32_0 = arith.constant 0 : i32
    %c0_i32_1 = arith.constant 0 : i32
    return %c0_i32, %c0_i32_0 : i32, i32
  }
  func.func @transform_16(%arg0: i32, %arg1: i32) -> (i32, i32) {
    %c0_i32 = arith.constant 0 : i32
    %c0_i32_0 = arith.constant 0 : i32
    %c0_i32_1 = arith.constant 0 : i32
    return %c0_i32, %c0_i32_0 : i32, i32
  }
  func.func @transform_17(%arg0: i32, %arg1: i32) -> (i32, i32) {
    %c0_i32 = arith.constant 0 : i32
    %c0_i32_0 = arith.constant 0 : i32
    %c0_i32_1 = arith.constant 0 : i32
    return %c0_i32, %c0_i32_0 : i32, i32
  }
  func.func @transform_18(%arg0: i32, %arg1: i32) -> (i32, i32) {
    %c0_i32 = arith.constant 0 : i32
    %c0_i32_0 = arith.constant 0 : i32
    %c0_i32_1 = arith.constant 0 : i32
    return %c0_i32, %c0_i32_0 : i32, i32
  }
  func.func @transform_19(%arg0: i32, %arg1: i32) -> (i32, i32) {
    %c0_i32 = arith.constant 0 : i32
    %c0_i32_0 = arith.constant 0 : i32
    %c0_i32_1 = arith.constant 0 : i32
    return %c0_i32, %c0_i32_0 : i32, i32
  }
  func.func @transform_20(%arg0: i32, %arg1: i32) -> (i32, i32, i32) {
    %c0_i32 = arith.constant 0 : i32
    %c0_i32_0 = arith.constant 0 : i32
    return %arg0, %arg1, %c0_i32 : i32, i32, i32
  }
}

</mosaic_0001>

<llo_original>
// kernel: tpu_custom_call.1
$region0: #{tpu_custom_call.1}
  #allocation0 [shape = 'u32[]', space=smem, size = 0x4, offset = 0x4, fixed_abs, tag = 'smem constant byte address 0x4 - core index']
  #allocation1 [shape = 'u32[144,128]{1,0:T(1,128)}', space=vmem, size = 0x12000, scoped, tag = 'internal scratch']
  #allocation2 [shape = 'bf16[8,32]{1,0:T(8,128)(2,1)}', space=vmem, size = 0x800, scoped, tag = 'scratch operand']
  #allocation3 [shape = 'bf16[8,32]{1,0:T(8,128)(2,1)}', space=vmem, size = 0x800, scoped, tag = 'scratch operand']
  #allocation4 [shape = 'bf16[8,32]{1,0:T(8,128)(2,1)}', space=vmem, size = 0x800, scoped, tag = 'scratch operand']
  #allocation5 [shape = 'bf16[8,32]{1,0:T(8,128)(2,1)}', space=vmem, size = 0x800, scoped, tag = 'scratch operand']
  %s0 = inlined_call_operand.vmem [shape: f32[2,8,32], index: 0, kind: input, shape index: {}]
  %s1 = inlined_call_operand.hbm [shape: f32[2,1,8], index: 1, kind: input, shape index: {}]
  %s2 = inlined_call_operand.vmem [shape: bf16[32,32], index: 2, kind: input, shape index: {}]
  %s3 = inlined_call_operand.hbm [shape: f32[1,32], index: 3, kind: input, shape index: {}]
  %s4 = inlined_call_operand.vmem [shape: bf16[32,32], index: 4, kind: input, shape index: {}]
  %s5 = inlined_call_operand.hbm [shape: f32[1,32], index: 5, kind: input, shape index: {}]
  %s6 = inlined_call_operand.hbm [shape: bf16[32,32], index: 6, kind: input, shape index: {}]
  %s7 = inlined_call_operand.hbm [shape: f32[1,32], index: 7, kind: input, shape index: {}]
  %s8 = inlined_call_operand.hbm [shape: bf16[32,32], index: 8, kind: input, shape index: {}]
  %s9 = inlined_call_operand.hbm [shape: f32[1,32], index: 9, kind: input, shape index: {}]
  %s10 = inlined_call_operand.vmem [shape: bf16[32,64], index: 10, kind: input, shape index: {}]
  %s11 = inlined_call_operand.vmem [shape: f32[1,64], index: 11, kind: input, shape index: {}]
  %s12 = inlined_call_operand.vmem [shape: bf16[64,32], index: 12, kind: input, shape index: {}]
  %s13 = inlined_call_operand.vmem [shape: f32[1,32], index: 13, kind: input, shape index: {}]
  %s14 = inlined_call_operand.vmem [shape: f32[1,32], index: 14, kind: input, shape index: {}]
  %s15 = inlined_call_operand.vmem [shape: f32[1,32], index: 15, kind: input, shape index: {}]
  %s16 = inlined_call_operand.vmem [shape: f32[1,32], index: 16, kind: input, shape index: {}]
  %s17 = inlined_call_operand.vmem [shape: f32[1,32], index: 17, kind: input, shape index: {}]
  %s18 = inlined_call_operand.vmem [shape: f32[1,32], index: 18, kind: input, shape index: {}]
  %s19 = inlined_call_operand.vmem [shape: f32[1,32], index: 19, kind: input, shape index: {}]
  %s20 = inlined_call_operand.hbm [shape: f32[2,8,32], index: 20, kind: output, shape index: {}]
  %s21 = sld [smem:[#allocation0]]
  $region145: #{tpu_custom_call.1} parent=0
    _
  %s23 = ssub.s32 1, %s21
  %s24 = scalar_select 0, %s23, %s21
  $region1: #{tpu_custom_call.1} parent=0
    #allocation6 [shape = 'u8[1024]{0}', space=vmem, size = 0x400, scoped, tag = 'input window, operand 1']
    #allocation7 [shape = 's32[2]{0}', space=sflag, size = 0x8, scoped, tag = 'scoped memory for tpu_custom_call.1']
    #allocation8 [shape = 's32[2]{0}', space=sflag, size = 0x8, scoped, tag = 'scoped memory for tpu_custom_call.1']
    #allocation9 [shape = 'u8[512]{0}', space=vmem, size = 0x400, scoped, tag = 'input window, operand 3, single buffered']
    #allocation10 [shape = 's32[1]{0}', space=sflag, size = 0x4, scoped, tag = 'scoped memory for tpu_custom_call.1']
    #allocation11 [shape = 'u8[512]{0}', space=vmem, size = 0x400, scoped, tag = 'input window, operand 5, single buffered']
    #allocation12 [shape = 'u8[8192]{0}', space=vmem, size = 0x2000, scoped, tag = 'input window, operand 6, single buffered']
    #allocation13 [shape = 's32[1]{0}', space=sflag, size = 0x4, scoped, tag = 'scoped memory for tpu_custom_call.1']
    #allocation14 [shape = 'u8[512]{0}', space=vmem, size = 0x400, scoped, tag = 'input window, operand 7, single buffered']
    #allocation15 [shape = 'u8[8192]{0}', space=vmem, size = 0x2000, scoped, tag = 'input window, operand 8, single buffered']
    #allocation16 [shape = 's32[1]{0}', space=sflag, size = 0x4, scoped, tag = 'scoped memory for tpu_custom_call.1']
    #allocation17 [shape = 'u8[512]{0}', space=vmem, size = 0x400, scoped, tag = 'input window, operand 9, single buffered']
    #allocation18 [shape = 'u8[8192]{0}', space=vmem, size = 0x2000, scoped, tag = 'output window, operand 0']
    %25 = vsyncpa [#allocation7], 0
    %s26 = scalar_lea.sflag [#allocation7], 1
    %27 = vsyncpa %s26, 0
    %28 = vsyncpa [#allocation10], 0
    %29 = vsyncpa [#allocation13], 0
    %30 = vsyncpa [#allocation16], 0
    %31 = vsyncpa [#allocation8], 0
    %s32 = scalar_lea.sflag [#allocation8], 1
    %33 = vsyncpa %s32, 0
    loop: start=0, step=1, limit=4
    $region2: #{tpu_custom_call.1} parent=1 // loop_pre_header
      _
    $region3: #{tpu_custom_call.1} parent=1 // loop_header
      %s35 = sphi 0, %s39
      %p36 = scmp.ge.s32.totalorder %s35, 4
      %s42 = sphi 0, %s54
      %s43 = sphi 0, %s50
      %s44 = sphi 0, %s42
      %s45 = sphi 0, %s43
      %s46 = sphi 0, %s44
      %s47 = sphi 0, %s45
      %s57 = sphi 0, %s59
      %s60 = sphi 0, %s57
      %s61 = sphi 0, %s60
      %s77 = sphi 0, %s61
      %s83 = sphi 0, %s85
      %s86 = sphi 0, %s83
      %s87 = sphi 0, %s86
      %s103 = sphi 0, %s87
      %s107 = sphi 0, %s107
      %s109 = sphi 0, %s107
      %s110 = sphi 0, %s109
      %s124 = sphi 0, %s110
      %s128 = sphi 0, %s128
      %s130 = sphi 0, %s128
      %s131 = sphi 0, %s130
      %s145 = sphi 0, %s131
      %s149 = sphi 0, %s149
      %s151 = sphi 0, %s149
      %s152 = sphi 0, %s151
      %s166 = sphi 0, %s152
      %s170 = sphi 0, %s170
      %s172 = sphi 0, %s170
      %s173 = sphi 0, %s172
      %s187 = sphi 0, %s173
      %s191 = sphi 0, %s191
      %s193 = sphi 0, %s191
      %s194 = sphi 0, %s193
      %s208 = sphi 0, %s194
      %s212 = sphi 0, %s212
      %s214 = sphi 0, %s212
      %s215 = sphi 0, %s214
      %s229 = sphi 0, %s215
      %s233 = sphi 0, %s233
      %s235 = sphi 0, %s233
      %s236 = sphi 0, %s235
      %s250 = sphi 0, %s236
      %s254 = sphi 0, %s254
      %s256 = sphi 0, %s254
      %s257 = sphi 0, %s256
      %s271 = sphi 0, %s257
      %s275 = sphi 0, %s275
      %s277 = sphi 0, %s275
      %s278 = sphi 0, %s277
      %s292 = sphi 0, %s278
      %s296 = sphi 0, %s296
      %s298 = sphi 0, %s296
      %s299 = sphi 0, %s298
      %s313 = sphi 0, %s299
      %s317 = sphi 0, %s317
      %s319 = sphi 0, %s317
      %s320 = sphi 0, %s319
      %s334 = sphi 0, %s320
      %s338 = sphi 0, %s338
      %s340 = sphi 0, %s338
      %s341 = sphi 0, %s340
      %s355 = sphi 0, %s341
      %s359 = sphi 0, %s359
      %s361 = sphi 0, %s359
      %s362 = sphi 0, %s361
      %s376 = sphi 0, %s362
      %s380 = sphi 0, %s380
      %s382 = sphi 0, %s380
      %s383 = sphi 0, %s382
      %s397 = sphi 0, %s383
      %s401 = sphi 0, %s401
      %s403 = sphi 0, %s401
      %s404 = sphi 0, %s403
      %s418 = sphi 0, %s404
      %s422 = sphi 0, %s422
      %s424 = sphi 0, %s422
      %s425 = sphi 0, %s424
      %s439 = sphi 0, %s425
      %s443 = sphi 0, %s443
      %s445 = sphi 0, %s443
      %s446 = sphi 0, %s445
      %s460 = sphi 0, %s446
      %s464 = sphi 0, %s464
      %s466 = sphi 0, %s464
      %s467 = sphi 0, %s466
      %s481 = sphi 0, %s467
      %s489 = sphi 0, %s491
      %s492 = sphi 0, %s489
      %s493 = sphi 0, %s492
      %s509 = sphi 0, %s493
    $region4: #{tpu_custom_call.1} parent=1 // loop_header_branch
      %38 = sbr.rel (%p36) target = $region8
    $region5: #{tpu_custom_call.1} parent=1 // loop_body
      %s40 = ssub.s32 %s35, 1
      %s41 = ssub.s32 %s35, 2
      %s48 = sadd.s32 1, %s43
      %p49 = scmp.ge.s32.totalorder %s48, 1
      %s50 = scalar_select %p49, 0, %s48
      %s51 = sadd.s32 1, %s42
      %s52 = scalar_select %p49, %s51, %s42
      %p53 = scmp.ge.s32.totalorder %s52, 2
      %s54 = scalar_select %p53, 0, %s52
      %s55 = ssub.s32 %s42, %s54
      %p56 = scmp.eq.s32.totalorder %s55, 0
      %s58 = sadd.s32 %s57, 1
      %s59 = scalar_select %p56, %s57, %s58
      %p62 = pneg %p56
      %p63 = scmp.eq.s32.totalorder %s35, 1
      %p64 = por %p62, %p63
      %p65 = scmp.ne.s32.totalorder %s57, %s60
      %p66 = scmp.eq.s32.totalorder %s35, 0
      %p67 = por %p65, %p66
      %p68 = scmp.ne.s32.totalorder %s57, %s60
      %p69 = scmp.eq.s32.totalorder %s40, 1
      %p70 = por %p68, %p69
      %p71 = scmp.ne.s32.totalorder %s60, %s61
      %p72 = scmp.eq.s32.totalorder %s40, 0
      %p73 = por %p71, %p72
      %p74 = scmp.ne.s32.totalorder %s60, %s61
      %p75 = scmp.eq.s32.totalorder %s41, 1
      %p76 = por %p74, %p75
      %p78 = scmp.ne.s32.totalorder %s61, %s77
      %p79 = scmp.eq.s32.totalorder %s41, 0
      %p80 = por %p78, %p79
      %s81 = ssub.s32 %s42, %s54
      %p82 = scmp.eq.s32.totalorder %s81, 0
      %s84 = sadd.s32 %s83, 1
      %s85 = scalar_select %p82, %s83, %s84
      %p88 = pneg %p82
      %p89 = scmp.eq.s32.totalorder %s35, 1
      %p90 = por %p88, %p89
      %p91 = scmp.ne.s32.totalorder %s83, %s86
      %p92 = scmp.eq.s32.totalorder %s35, 0
      %p93 = por %p91, %p92
      %p94 = scmp.ne.s32.totalorder %s83, %s86
      %p95 = scmp.eq.s32.totalorder %s40, 1
      %p96 = por %p94, %p95
      %p97 = scmp.ne.s32.totalorder %s86, %s87
      %p98 = scmp.eq.s32.totalorder %s40, 0
      %p99 = por %p97, %p98
      %p100 = scmp.ne.s32.totalorder %s86, %s87
      %p101 = scmp.eq.s32.totalorder %s41, 1
      %p102 = por %p100, %p101
      %p104 = scmp.ne.s32.totalorder %s87, %s103
      %p105 = scmp.eq.s32.totalorder %s41, 0
      %p106 = por %p104, %p105
      %s108 = sadd.s32 %s107, 1
      %p111 = scmp.eq.s32.totalorder %s35, 1
      %p112 = scmp.ne.s32.totalorder %s107, %s109
      %p113 = scmp.eq.s32.totalorder %s35, 0
      %p114 = por %p112, %p113
      %p115 = scmp.ne.s32.totalorder %s107, %s109
      %p116 = scmp.eq.s32.totalorder %s40, 1
      %p117 = por %p115, %p116
      %p118 = scmp.ne.s32.totalorder %s109, %s110
      %p119 = scmp.eq.s32.totalorder %s40, 0
      %p120 = por %p118, %p119
      %p121 = scmp.ne.s32.totalorder %s109, %s110
      %p122 = scmp.eq.s32.totalorder %s41, 1
      %p123 = por %p121, %p122
      %p125 = scmp.ne.s32.totalorder %s110, %s124
      %p126 = scmp.eq.s32.totalorder %s41, 0
      %p127 = por %p125, %p126
      %s129 = sadd.s32 %s128, 1
      %p132 = scmp.eq.s32.totalorder %s35, 1
      %p133 = scmp.ne.s32.totalorder %s128, %s130
      %p134 = scmp.eq.s32.totalorder %s35, 0
      %p135 = por %p133, %p134
      %p136 = scmp.ne.s32.totalorder %s128, %s130
      %p137 = scmp.eq.s32.totalorder %s40, 1
      %p138 = por %p136, %p137
      %p139 = scmp.ne.s32.totalorder %s130, %s131
      %p140 = scmp.eq.s32.totalorder %s40, 0
      %p141 = por %p139, %p140
      %p142 = scmp.ne.s32.totalorder %s130, %s131
      %p143 = scmp.eq.s32.totalorder %s41, 1
      %p144 = por %p142, %p143
      %p146 = scmp.ne.s32.totalorder %s131, %s145
      %p147 = scmp.eq.s32.totalorder %s41, 0
      %p148 = por %p146, %p147
      %s150 = sadd.s32 %s149, 1
      %p153 = scmp.eq.s32.totalorder %s35, 1
      %p154 = scmp.ne.s32.totalorder %s149, %s151
      %p155 = scmp.eq.s32.totalorder %s35, 0
      %p156 = por %p154, %p155
      %p157 = scmp.ne.s32.totalorder %s149, %s151
      %p158 = scmp.eq.s32.totalorder %s40, 1
      %p159 = por %p157, %p158
      %p160 = scmp.ne.s32.totalorder %s151, %s152
      %p161 = scmp.eq.s32.totalorder %s40, 0
      %p162 = por %p160, %p161
      %p163 = scmp.ne.s32.totalorder %s151, %s152
      %p164 = scmp.eq.s32.totalorder %s41, 1
      %p165 = por %p163, %p164
      %p167 = scmp.ne.s32.totalorder %s152, %s166
      %p168 = scmp.eq.s32.totalorder %s41, 0
      %p169 = por %p167, %p168
      %s171 = sadd.s32 %s170, 1
      %p174 = scmp.eq.s32.totalorder %s35, 1
      %p175 = scmp.ne.s32.totalorder %s170, %s172
      %p176 = scmp.eq.s32.totalorder %s35, 0
      %p177 = por %p175, %p176
      %p178 = scmp.ne.s32.totalorder %s170, %s172
      %p179 = scmp.eq.s32.totalorder %s40, 1
      %p180 = por %p178, %p179
      %p181 = scmp.ne.s32.totalorder %s172, %s173
      %p182 = scmp.eq.s32.totalorder %s40, 0
      %p183 = por %p181, %p182
      %p184 = scmp.ne.s32.totalorder %s172, %s173
      %p185 = scmp.eq.s32.totalorder %s41, 1
      %p186 = por %p184, %p185
      %p188 = scmp.ne.s32.totalorder %s173, %s187
      %p189 = scmp.eq.s32.totalorder %s41, 0
      %p190 = por %p188, %p189
      %s192 = sadd.s32 %s191, 1
      %p195 = scmp.eq.s32.totalorder %s35, 1
      %p196 = scmp.ne.s32.totalorder %s191, %s193
      %p197 = scmp.eq.s32.totalorder %s35, 0
      %p198 = por %p196, %p197
      %p199 = scmp.ne.s32.totalorder %s191, %s193
      %p200 = scmp.eq.s32.totalorder %s40, 1
      %p201 = por %p199, %p200
      %p202 = scmp.ne.s32.totalorder %s193, %s194
      %p203 = scmp.eq.s32.totalorder %s40, 0
      %p204 = por %p202, %p203
      %p205 = scmp.ne.s32.totalorder %s193, %s194
      %p206 = scmp.eq.s32.totalorder %s41, 1
      %p207 = por %p205, %p206
      %p209 = scmp.ne.s32.totalorder %s194, %s208
      %p210 = scmp.eq.s32.totalorder %s41, 0
      %p211 = por %p209, %p210
      %s213 = sadd.s32 %s212, 1
      %p216 = scmp.eq.s32.totalorder %s35, 1
      %p217 = scmp.ne.s32.totalorder %s212, %s214
      %p218 = scmp.eq.s32.totalorder %s35, 0
      %p219 = por %p217, %p218
      %p220 = scmp.ne.s32.totalorder %s212, %s214
      %p221 = scmp.eq.s32.totalorder %s40, 1
      %p222 = por %p220, %p221
      %p223 = scmp.ne.s32.totalorder %s214, %s215
      %p224 = scmp.eq.s32.totalorder %s40, 0
      %p225 = por %p223, %p224
      %p226 = scmp.ne.s32.totalorder %s214, %s215
      %p227 = scmp.eq.s32.totalorder %s41, 1
      %p228 = por %p226, %p227
      %p230 = scmp.ne.s32.totalorder %s215, %s229
      %p231 = scmp.eq.s32.totalorder %s41, 0
      %p232 = por %p230, %p231
      %s234 = sadd.s32 %s233, 1
      %p237 = scmp.eq.s32.totalorder %s35, 1
      %p238 = scmp.ne.s32.totalorder %s233, %s235
      %p239 = scmp.eq.s32.totalorder %s35, 0
      %p240 = por %p238, %p239
      %p241 = scmp.ne.s32.totalorder %s233, %s235
      %p242 = scmp.eq.s32.totalorder %s40, 1
      %p243 = por %p241, %p242
      %p244 = scmp.ne.s32.totalorder %s235, %s236
      %p245 = scmp.eq.s32.totalorder %s40, 0
      %p246 = por %p244, %p245
      %p247 = scmp.ne.s32.totalorder %s235, %s236
      %p248 = scmp.eq.s32.totalorder %s41, 1
      %p249 = por %p247, %p248
      %p251 = scmp.ne.s32.totalorder %s236, %s250
      %p252 = scmp.eq.s32.totalorder %s41, 0
      %p253 = por %p251, %p252
      %s255 = sadd.s32 %s254, 1
      %p258 = scmp.eq.s32.totalorder %s35, 1
      %p259 = scmp.ne.s32.totalorder %s254, %s256
      %p260 = scmp.eq.s32.totalorder %s35, 0
      %p261 = por %p259, %p260
      %p262 = scmp.ne.s32.totalorder %s254, %s256
      %p263 = scmp.eq.s32.totalorder %s40, 1
      %p264 = por %p262, %p263
      %p265 = scmp.ne.s32.totalorder %s256, %s257
      %p266 = scmp.eq.s32.totalorder %s40, 0
      %p267 = por %p265, %p266
      %p268 = scmp.ne.s32.totalorder %s256, %s257
      %p269 = scmp.eq.s32.totalorder %s41, 1
      %p270 = por %p268, %p269
      %p272 = scmp.ne.s32.totalorder %s257, %s271
      %p273 = scmp.eq.s32.totalorder %s41, 0
      %p274 = por %p272, %p273
      %s276 = sadd.s32 %s275, 1
      %p279 = scmp.eq.s32.totalorder %s35, 1
      %p280 = scmp.ne.s32.totalorder %s275, %s277
      %p281 = scmp.eq.s32.totalorder %s35, 0
      %p282 = por %p280, %p281
      %p283 = scmp.ne.s32.totalorder %s275, %s277
      %p284 = scmp.eq.s32.totalorder %s40, 1
      %p285 = por %p283, %p284
      %p286 = scmp.ne.s32.totalorder %s277, %s278
      %p287 = scmp.eq.s32.totalorder %s40, 0
      %p288 = por %p286, %p287
      %p289 = scmp.ne.s32.totalorder %s277, %s278
      %p290 = scmp.eq.s32.totalorder %s41, 1
      %p291 = por %p289, %p290
      %p293 = scmp.ne.s32.totalorder %s278, %s292
      %p294 = scmp.eq.s32.totalorder %s41, 0
      %p295 = por %p293, %p294
      %s297 = sadd.s32 %s296, 1
      %p300 = scmp.eq.s32.totalorder %s35, 1
      %p301 = scmp.ne.s32.totalorder %s296, %s298
      %p302 = scmp.eq.s32.totalorder %s35, 0
      %p303 = por %p301, %p302
      %p304 = scmp.ne.s32.totalorder %s296, %s298
      %p305 = scmp.eq.s32.totalorder %s40, 1
      %p306 = por %p304, %p305
      %p307 = scmp.ne.s32.totalorder %s298, %s299
      %p308 = scmp.eq.s32.totalorder %s40, 0
      %p309 = por %p307, %p308
      %p310 = scmp.ne.s32.totalorder %s298, %s299
      %p311 = scmp.eq.s32.totalorder %s41, 1
      %p312 = por %p310, %p311
      %p314 = scmp.ne.s32.totalorder %s299, %s313
      %p315 = scmp.eq.s32.totalorder %s41, 0
      %p316 = por %p314, %p315
      %s318 = sadd.s32 %s317, 1
      %p321 = scmp.eq.s32.totalorder %s35, 1
      %p322 = scmp.ne.s32.totalorder %s317, %s319
      %p323 = scmp.eq.s32.totalorder %s35, 0
      %p324 = por %p322, %p323
      %p325 = scmp.ne.s32.totalorder %s317, %s319
      %p326 = scmp.eq.s32.totalorder %s40, 1
      %p327 = por %p325, %p326
      %p328 = scmp.ne.s32.totalorder %s319, %s320
      %p329 = scmp.eq.s32.totalorder %s40, 0
      %p330 = por %p328, %p329
      %p331 = scmp.ne.s32.totalorder %s319, %s320
      %p332 = scmp.eq.s32.totalorder %s41, 1
      %p333 = por %p331, %p332
      %p335 = scmp.ne.s32.totalorder %s320, %s334
      %p336 = scmp.eq.s32.totalorder %s41, 0
      %p337 = por %p335, %p336
      %s339 = sadd.s32 %s338, 1
      %p342 = scmp.eq.s32.totalorder %s35, 1
      %p343 = scmp.ne.s32.totalorder %s338, %s340
      %p344 = scmp.eq.s32.totalorder %s35, 0
      %p345 = por %p343, %p344
      %p346 = scmp.ne.s32.totalorder %s338, %s340
      %p347 = scmp.eq.s32.totalorder %s40, 1
      %p348 = por %p346, %p347
      %p349 = scmp.ne.s32.totalorder %s340, %s341
      %p350 = scmp.eq.s32.totalorder %s40, 0
      %p351 = por %p349, %p350
      %p352 = scmp.ne.s32.totalorder %s340, %s341
      %p353 = scmp.eq.s32.totalorder %s41, 1
      %p354 = por %p352, %p353
      %p356 = scmp.ne.s32.totalorder %s341, %s355
      %p357 = scmp.eq.s32.totalorder %s41, 0
      %p358 = por %p356, %p357
      %s360 = sadd.s32 %s359, 1
      %p363 = scmp.eq.s32.totalorder %s35, 1
      %p364 = scmp.ne.s32.totalorder %s359, %s361
      %p365 = scmp.eq.s32.totalorder %s35, 0
      %p366 = por %p364, %p365
      %p367 = scmp.ne.s32.totalorder %s359, %s361
      %p368 = scmp.eq.s32.totalorder %s40, 1
      %p369 = por %p367, %p368
      %p370 = scmp.ne.s32.totalorder %s361, %s362
      %p371 = scmp.eq.s32.totalorder %s40, 0
      %p372 = por %p370, %p371
      %p373 = scmp.ne.s32.totalorder %s361, %s362
      %p374 = scmp.eq.s32.totalorder %s41, 1
      %p375 = por %p373, %p374
      %p377 = scmp.ne.s32.totalorder %s362, %s376
      %p378 = scmp.eq.s32.totalorder %s41, 0
      %p379 = por %p377, %p378
      %s381 = sadd.s32 %s380, 1
      %p384 = scmp.eq.s32.totalorder %s35, 1
      %p385 = scmp.ne.s32.totalorder %s380, %s382
      %p386 = scmp.eq.s32.totalorder %s35, 0
      %p387 = por %p385, %p386
      %p388 = scmp.ne.s32.totalorder %s380, %s382
      %p389 = scmp.eq.s32.totalorder %s40, 1
      %p390 = por %p388, %p389
      %p391 = scmp.ne.s32.totalorder %s382, %s383
      %p392 = scmp.eq.s32.totalorder %s40, 0
      %p393 = por %p391, %p392
      %p394 = scmp.ne.s32.totalorder %s382, %s383
      %p395 = scmp.eq.s32.totalorder %s41, 1
      %p396 = por %p394, %p395
      %p398 = scmp.ne.s32.totalorder %s383, %s397
      %p399 = scmp.eq.s32.totalorder %s41, 0
      %p400 = por %p398, %p399
      %s402 = sadd.s32 %s401, 1
      %p405 = scmp.eq.s32.totalorder %s35, 1
      %p406 = scmp.ne.s32.totalorder %s401, %s403
      %p407 = scmp.eq.s32.totalorder %s35, 0
      %p408 = por %p406, %p407
      %p409 = scmp.ne.s32.totalorder %s401, %s403
      %p410 = scmp.eq.s32.totalorder %s40, 1
      %p411 = por %p409, %p410
      %p412 = scmp.ne.s32.totalorder %s403, %s404
      %p413 = scmp.eq.s32.totalorder %s40, 0
      %p414 = por %p412, %p413
      %p415 = scmp.ne.s32.totalorder %s403, %s404
      %p416 = scmp.eq.s32.totalorder %s41, 1
      %p417 = por %p415, %p416
      %p419 = scmp.ne.s32.totalorder %s404, %s418
      %p420 = scmp.eq.s32.totalorder %s41, 0
      %p421 = por %p419, %p420
      %s423 = sadd.s32 %s422, 1
      %p426 = scmp.eq.s32.totalorder %s35, 1
      %p427 = scmp.ne.s32.totalorder %s422, %s424
      %p428 = scmp.eq.s32.totalorder %s35, 0
      %p429 = por %p427, %p428
      %p430 = scmp.ne.s32.totalorder %s422, %s424
      %p431 = scmp.eq.s32.totalorder %s40, 1
      %p432 = por %p430, %p431
      %p433 = scmp.ne.s32.totalorder %s424, %s425
      %p434 = scmp.eq.s32.totalorder %s40, 0
      %p435 = por %p433, %p434
      %p436 = scmp.ne.s32.totalorder %s424, %s425
      %p437 = scmp.eq.s32.totalorder %s41, 1
      %p438 = por %p436, %p437
      %p440 = scmp.ne.s32.totalorder %s425, %s439
      %p441 = scmp.eq.s32.totalorder %s41, 0
      %p442 = por %p440, %p441
      %s444 = sadd.s32 %s443, 1
      %p447 = scmp.eq.s32.totalorder %s35, 1
      %p448 = scmp.ne.s32.totalorder %s443, %s445
      %p449 = scmp.eq.s32.totalorder %s35, 0
      %p450 = por %p448, %p449
      %p451 = scmp.ne.s32.totalorder %s443, %s445
      %p452 = scmp.eq.s32.totalorder %s40, 1
      %p453 = por %p451, %p452
      %p454 = scmp.ne.s32.totalorder %s445, %s446
      %p455 = scmp.eq.s32.totalorder %s40, 0
      %p456 = por %p454, %p455
      %p457 = scmp.ne.s32.totalorder %s445, %s446
      %p458 = scmp.eq.s32.totalorder %s41, 1
      %p459 = por %p457, %p458
      %p461 = scmp.ne.s32.totalorder %s446, %s460
      %p462 = scmp.eq.s32.totalorder %s41, 0
      %p463 = por %p461, %p462
      %s465 = sadd.s32 %s464, 1
      %p468 = scmp.eq.s32.totalorder %s35, 1
      %p469 = scmp.ne.s32.totalorder %s464, %s466
      %p470 = scmp.eq.s32.totalorder %s35, 0
      %p471 = por %p469, %p470
      %p472 = scmp.ne.s32.totalorder %s464, %s466
      %p473 = scmp.eq.s32.totalorder %s40, 1
      %p474 = por %p472, %p473
      %p475 = scmp.ne.s32.totalorder %s466, %s467
      %p476 = scmp.eq.s32.totalorder %s40, 0
      %p477 = por %p475, %p476
      %p478 = scmp.ne.s32.totalorder %s466, %s467
      %p479 = scmp.eq.s32.totalorder %s41, 1
      %p480 = por %p478, %p479
      %p482 = scmp.ne.s32.totalorder %s467, %s481
      %p483 = scmp.eq.s32.totalorder %s41, 0
      %p484 = por %p482, %p483
      %s485 = ssub.s32 %s42, %s54
      %s486 = ssub.s32 %s43, %s50
      %s487 = sor.u32 %s485, %s486
      %p488 = scmp.eq.s32.totalorder %s487, 0
      %s490 = sadd.s32 %s489, 1
      %s491 = scalar_select %p488, %s489, %s490
      %p494 = pneg %p488
      %p495 = scmp.eq.s32.totalorder %s35, 1
      %p496 = por %p494, %p495
      %p497 = scmp.ne.s32.totalorder %s489, %s492
      %p498 = scmp.eq.s32.totalorder %s35, 0
      %p499 = por %p497, %p498
      %p500 = scmp.ne.s32.totalorder %s489, %s492
      %p501 = scmp.eq.s32.totalorder %s40, 1
      %p502 = por %p500, %p501
      %p503 = scmp.ne.s32.totalorder %s492, %s493
      %p504 = scmp.eq.s32.totalorder %s40, 0
      %p505 = por %p503, %p504
      %p506 = scmp.ne.s32.totalorder %s492, %s493
      %p507 = scmp.eq.s32.totalorder %s41, 1
      %p508 = por %p506, %p507
      %p510 = scmp.ne.s32.totalorder %s493, %s509
      %p511 = scmp.eq.s32.totalorder %s41, 0
      %p512 = por %p510, %p511
      %p513 = scmp.le.s32.totalorder 1, %s35
      %p514 = scmp.lt.s32.totalorder %s35, 3
      %p515 = pnand %p513, %p514
      %p516 = pneg %p515
      // Predicated region
      $region9: #{tpu_custom_call.1} parent=5 // pred_check
        _
      $region10: #{tpu_custom_call.1} parent=5 // pred_check_branch
        %518 = sbr.rel (%p515) target = $region12
      $region11: #{tpu_custom_call.1} parent=5 // pred_region
        %s519 = ssub.s32 %s35, 1
        // Predicated region
        $region13: #{tpu_custom_call.1} parent=11 // pred_check
          %p520 = pneg %p120
        $region14: #{tpu_custom_call.1} parent=11 // pred_check_branch
          %522 = sbr.rel (%p520) target = $region16
        $region15: #{tpu_custom_call.1} parent=11 // pred_region
          _
        $region16: #{tpu_custom_call.1} parent=11 // pred_fallthru
          _
        // Predicated region
        $region17: #{tpu_custom_call.1} parent=11 // pred_check
          %p523 = pneg %p141
        $region18: #{tpu_custom_call.1} parent=11 // pred_check_branch
          %525 = sbr.rel (%p523) target = $region20
        $region19: #{tpu_custom_call.1} parent=11 // pred_region
          %s527 = ssub.s32 16, 16
          %528 = vsyncadd [#allocation10], %s527
          %s530 = sshll.u32 [#allocation9], 4
          %s531 = int_to_ptr.vmem [resolvable:$true] %s530
          %533 = dma.hbm_to_vmem [thread:$0]  %s3, 16, %s531, [#allocation10]
        $region20: #{tpu_custom_call.1} parent=11 // pred_fallthru
          _
        // Predicated region
        $region21: #{tpu_custom_call.1} parent=11 // pred_check
          %p534 = pneg %p162
        $region22: #{tpu_custom_call.1} parent=11 // pred_check_branch
          %536 = sbr.rel (%p534) target = $region24
        $region23: #{tpu_custom_call.1} parent=11 // pred_region
          _
        $region24: #{tpu_custom_call.1} parent=11 // pred_fallthru
          _
        // Predicated region
        $region25: #{tpu_custom_call.1} parent=11 // pred_check
          %p537 = pneg %p183
        $region26: #{tpu_custom_call.1} parent=11 // pred_check_branch
          %539 = sbr.rel (%p537) target = $region28
        $region27: #{tpu_custom_call.1} parent=11 // pred_region
          %s541 = ssub.s32 16, 16
          %542 = vsyncadd [#allocation10], %s541
          %s544 = sshll.u32 [#allocation11], 4
          %s545 = int_to_ptr.vmem [resolvable:$true] %s544
          %547 = dma.hbm_to_vmem [thread:$0]  %s5, 16, %s545, [#allocation10]
        $region28: #{tpu_custom_call.1} parent=11 // pred_fallthru
          _
        // Predicated region
        $region29: #{tpu_custom_call.1} parent=11 // pred_check
          %p548 = pneg %p204
        $region30: #{tpu_custom_call.1} parent=11 // pred_check_branch
          %550 = sbr.rel (%p548) target = $region32
        $region31: #{tpu_custom_call.1} parent=11 // pred_region
          %s552 = ssub.s32 256, 256
          %553 = vsyncadd [#allocation13], %s552
          %s554 = sshll.u32 [#allocation12], 4
          %s555 = int_to_ptr.vmem [resolvable:$true] %s554
          %560 = dma.hbm_to_vmem [thread:$0]  %s6, 256, %s555, [#allocation13], 64, 64, 4
        $region32: #{tpu_custom_call.1} parent=11 // pred_fallthru
          _
        // Predicated region
        $region33: #{tpu_custom_call.1} parent=11 // pred_check
          %p561 = pneg %p225
        $region34: #{tpu_custom_call.1} parent=11 // pred_check_branch
          %563 = sbr.rel (%p561) target = $region36
        $region35: #{tpu_custom_call.1} parent=11 // pred_region
          %s565 = ssub.s32 16, 16
          %566 = vsyncadd [#allocation13], %s565
          %s568 = sshll.u32 [#allocation14], 4
          %s569 = int_to_ptr.vmem [resolvable:$true] %s568
          %571 = dma.hbm_to_vmem [thread:$0]  %s7, 16, %s569, [#allocation13]
        $region36: #{tpu_custom_call.1} parent=11 // pred_fallthru
          _
        // Predicated region
        $region37: #{tpu_custom_call.1} parent=11 // pred_check
          %p572 = pneg %p246
        $region38: #{tpu_custom_call.1} parent=11 // pred_check_branch
          %574 = sbr.rel (%p572) target = $region40
        $region39: #{tpu_custom_call.1} parent=11 // pred_region
          %s576 = ssub.s32 256, 256
          %577 = vsyncadd [#allocation16], %s576
          %s578 = sshll.u32 [#allocation15], 4
          %s579 = int_to_ptr.vmem [resolvable:$true] %s578
          %584 = dma.hbm_to_vmem [thread:$0]  %s8, 256, %s579, [#allocation16], 64, 64, 4
        $region40: #{tpu_custom_call.1} parent=11 // pred_fallthru
          _
        // Predicated region
        $region41: #{tpu_custom_call.1} parent=11 // pred_check
          %p585 = pneg %p267
        $region42: #{tpu_custom_call.1} parent=11 // pred_check_branch
          %587 = sbr.rel (%p585) target = $region44
        $region43: #{tpu_custom_call.1} parent=11 // pred_region
          %s589 = ssub.s32 16, 16
          %590 = vsyncadd [#allocation16], %s589
          %s592 = sshll.u32 [#allocation17], 4
          %s593 = int_to_ptr.vmem [resolvable:$true] %s592
          %595 = dma.hbm_to_vmem [thread:$0]  %s9, 16, %s593, [#allocation16]
        $region44: #{tpu_custom_call.1} parent=11 // pred_fallthru
          _
        // Predicated region
        $region45: #{tpu_custom_call.1} parent=11 // pred_check
          %p596 = pneg %p288
        $region46: #{tpu_custom_call.1} parent=11 // pred_check_branch
          %598 = sbr.rel (%p596) target = $region48
        $region47: #{tpu_custom_call.1} parent=11 // pred_region
          _
        $region48: #{tpu_custom_call.1} parent=11 // pred_fallthru
          _
        // Predicated region
        $region49: #{tpu_custom_call.1} parent=11 // pred_check
          %p599 = pneg %p309
        $region50: #{tpu_custom_call.1} parent=11 // pred_check_branch
          %601 = sbr.rel (%p599) target = $region52
        $region51: #{tpu_custom_call.1} parent=11 // pred_region
          _
        $region52: #{tpu_custom_call.1} parent=11 // pred_fallthru
          _
        // Predicated region
        $region53: #{tpu_custom_call.1} parent=11 // pred_check
          %p602 = pneg %p330
        $region54: #{tpu_custom_call.1} parent=11 // pred_check_branch
          %604 = sbr.rel (%p602) target = $region56
        $region55: #{tpu_custom_call.1} parent=11 // pred_region
          _
        $region56: #{tpu_custom_call.1} parent=11 // pred_fallthru
          _
        // Predicated region
        $region57: #{tpu_custom_call.1} parent=11 // pred_check
          %p605 = pneg %p351
        $region58: #{tpu_custom_call.1} parent=11 // pred_check_branch
          %607 = sbr.rel (%p605) target = $region60
        $region59: #{tpu_custom_call.1} parent=11 // pred_region
          _
        $region60: #{tpu_custom_call.1} parent=11 // pred_fallthru
          _
        // Predicated region
        $region61: #{tpu_custom_call.1} parent=11 // pred_check
          %p608 = pneg %p372
        $region62: #{tpu_custom_call.1} parent=11 // pred_check_branch
          %610 = sbr.rel (%p608) target = $region64
        $region63: #{tpu_custom_call.1} parent=11 // pred_region
          _
        $region64: #{tpu_custom_call.1} parent=11 // pred_fallthru
          _
        // Predicated region
        $region65: #{tpu_custom_call.1} parent=11 // pred_check
          %p611 = pneg %p393
        $region66: #{tpu_custom_call.1} parent=11 // pred_check_branch
          %613 = sbr.rel (%p611) target = $region68
        $region67: #{tpu_custom_call.1} parent=11 // pred_region
          _
        $region68: #{tpu_custom_call.1} parent=11 // pred_fallthru
          _
        // Predicated region
        $region69: #{tpu_custom_call.1} parent=11 // pred_check
          %p614 = pneg %p414
        $region70: #{tpu_custom_call.1} parent=11 // pred_check_branch
          %616 = sbr.rel (%p614) target = $region72
        $region71: #{tpu_custom_call.1} parent=11 // pred_region
          _
        $region72: #{tpu_custom_call.1} parent=11 // pred_fallthru
          _
        // Predicated region
        $region73: #{tpu_custom_call.1} parent=11 // pred_check
          %p617 = pneg %p435
        $region74: #{tpu_custom_call.1} parent=11 // pred_check_branch
          %619 = sbr.rel (%p617) target = $region76
        $region75: #{tpu_custom_call.1} parent=11 // pred_region
          _
        $region76: #{tpu_custom_call.1} parent=11 // pred_fallthru
          _
        // Predicated region
        $region77: #{tpu_custom_call.1} parent=11 // pred_check
          %p620 = pneg %p456
        $region78: #{tpu_custom_call.1} parent=11 // pred_check_branch
          %622 = sbr.rel (%p620) target = $region80
        $region79: #{tpu_custom_call.1} parent=11 // pred_region
          _
        $region80: #{tpu_custom_call.1} parent=11 // pred_fallthru
          _
        // Predicated region
        $region81: #{tpu_custom_call.1} parent=11 // pred_check
          %p623 = pneg %p477
        $region82: #{tpu_custom_call.1} parent=11 // pred_check_branch
          %625 = sbr.rel (%p623) target = $region84
        $region83: #{tpu_custom_call.1} parent=11 // pred_region
          _
        $region84: #{tpu_custom_call.1} parent=11 // pred_fallthru
          _
      $region12: #{tpu_custom_call.1} parent=5 // pred_fallthru
        _
      %p626 = scmp.lt.s32.totalorder %s35, 2
      // Predicated region
      $region85: #{tpu_custom_call.1} parent=5 // pred_check
        %p627 = pneg %p626
      $region86: #{tpu_custom_call.1} parent=5 // pred_check_branch
        %629 = sbr.rel (%p627) target = $region88
      $region87: #{tpu_custom_call.1} parent=5 // pred_region
        // Predicated region
        $region89: #{tpu_custom_call.1} parent=87 // pred_check
          %p630 = pneg %p67
        $region90: #{tpu_custom_call.1} parent=87 // pred_check_branch
          %632 = sbr.rel (%p630) target = $region92
        $region91: #{tpu_custom_call.1} parent=87 // pred_region
          %p633 = scmp.lt.s32.totalorder %s42, 1
          %s634 = scalar_select %p633, %s42, 1
          %s635 = smul.addr %s634, 8
          %s636 = scalar_lea.vmem %s0, %s635
        $region92: #{tpu_custom_call.1} parent=87 // pred_fallthru
          _
        // Predicated region
        $region93: #{tpu_custom_call.1} parent=87 // pred_check
          %p637 = pneg %p93
        $region94: #{tpu_custom_call.1} parent=87 // pred_check_branch
          %639 = sbr.rel (%p637) target = $region96
        $region95: #{tpu_custom_call.1} parent=87 // pred_region
          %s640 = sand.u32 %s83, 1
          %s641 = scalar_lea.sflag [#allocation7], %s640
          %s642 = sand.u32 %s83, 1
          %s643 = scalar_lea.vmem [#allocation6], %s642
          %s645 = ssub.s32 16, 16
          %646 = vsyncadd %s641, %s645
          %s647 = smul.addr %s42, 16
          %s648 = scalar_lea.hbm %s1, %s647
          %s650 = sshll.u32 %s643, 4
          %s651 = int_to_ptr.vmem [resolvable:$true] %s650
          %653 = dma.hbm_to_vmem [thread:$0]  %s648, 16, %s651, %s641
        $region96: #{tpu_custom_call.1} parent=87 // pred_fallthru
          _
      $region88: #{tpu_custom_call.1} parent=5 // pred_fallthru
        _
      %p654 = scmp.le.s32.totalorder 1, %s35
      %p655 = scmp.lt.s32.totalorder %s35, 3
      %p656 = pnand %p654, %p655
      %p657 = pneg %p656
      // Predicated region
      $region97: #{tpu_custom_call.1} parent=5 // pred_check
        _
      $region98: #{tpu_custom_call.1} parent=5 // pred_check_branch
        %659 = sbr.rel (%p656) target = $region100
      $region99: #{tpu_custom_call.1} parent=5 // pred_region
        %s660 = ssub.s32 %s35, 1
        %s661 = sand.u32 %s86, 1
        %s662 = scalar_lea.sflag [#allocation7], %s661
        %s663 = sand.u32 %s86, 1
        %s664 = scalar_lea.vmem [#allocation6], %s663
        // Predicated region
        $region101: #{tpu_custom_call.1} parent=99 // pred_check
          %p665 = pneg %p99
        $region102: #{tpu_custom_call.1} parent=99 // pred_check_branch
          %667 = sbr.rel (%p665) target = $region104
        $region103: #{tpu_custom_call.1} parent=99 // pred_region
          %668 = dma.done %s662, 16
        $region104: #{tpu_custom_call.1} parent=99 // pred_fallthru
          _
        // Predicated region
        $region105: #{tpu_custom_call.1} parent=99 // pred_check
          %p669 = pneg %p141
        $region106: #{tpu_custom_call.1} parent=99 // pred_check_branch
          %671 = sbr.rel (%p669) target = $region108
        $region107: #{tpu_custom_call.1} parent=99 // pred_region
          %672 = dma.done [#allocation10], 16
        $region108: #{tpu_custom_call.1} parent=99 // pred_fallthru
          _
        // Predicated region
        $region109: #{tpu_custom_call.1} parent=99 // pred_check
          %p673 = pneg %p183
        $region110: #{tpu_custom_call.1} parent=99 // pred_check_branch
          %675 = sbr.rel (%p673) target = $region112
        $region111: #{tpu_custom_call.1} parent=99 // pred_region
          %676 = dma.done [#allocation10], 16
        $region112: #{tpu_custom_call.1} parent=99 // pred_fallthru
          _
        // Predicated region
        $region113: #{tpu_custom_call.1} parent=99 // pred_check
          %p677 = pneg %p204
        $region114: #{tpu_custom_call.1} parent=99 // pred_check_branch
          %679 = sbr.rel (%p677) target = $region116
        $region115: #{tpu_custom_call.1} parent=99 // pred_region
          %680 = dma.done [#allocation13], 256
        $region116: #{tpu_custom_call.1} parent=99 // pred_fallthru
          _
        // Predicated region
        $region117: #{tpu_custom_call.1} parent=99 // pred_check
          %p681 = pneg %p225
        $region118: #{tpu_custom_call.1} parent=99 // pred_check_branch
          %683 = sbr.rel (%p681) target = $region120
        $region119: #{tpu_custom_call.1} parent=99 // pred_region
          %684 = dma.done [#allocation13], 16
        $region120: #{tpu_custom_call.1} parent=99 // pred_fallthru
          _
        // Predicated region
        $region121: #{tpu_custom_call.1} parent=99 // pred_check
          %p685 = pneg %p246
        $region122: #{tpu_custom_call.1} parent=99 // pred_check_branch
          %687 = sbr.rel (%p685) target = $region124
        $region123: #{tpu_custom_call.1} parent=99 // pred_region
          %688 = dma.done [#allocation16], 256
        $region124: #{tpu_custom_call.1} parent=99 // pred_fallthru
          _
        // Predicated region
        $region125: #{tpu_custom_call.1} parent=99 // pred_check
          %p689 = pneg %p267
        $region126: #{tpu_custom_call.1} parent=99 // pred_check_branch
          %691 = sbr.rel (%p689) target = $region128
        $region127: #{tpu_custom_call.1} parent=99 // pred_region
          %692 = dma.done [#allocation16], 16
        $region128: #{tpu_custom_call.1} parent=99 // pred_fallthru
          _
        %p693 = scmp.lt.s32.totalorder %s44, 1
        %s694 = scalar_select %p693, %s44, 1
        %s695 = smul.addr %s694, 8
        %s696 = scalar_lea.vmem %s0, %s695
        %p697 = pneg %p73
        %p698 = pneg %p70
        %s699 = sand.u32 %s86, 1
        %s700 = scalar_lea.sflag [#allocation7], %s699
        %s701 = sand.u32 %s86, 1
        %s702 = scalar_lea.vmem [#allocation6], %s701
        %p703 = pneg %p99
        %p704 = pneg %p96
        %p705 = pneg %p120
        %p706 = pneg %p117
        %p707 = pneg %p141
        %p708 = pneg %p138
        %p709 = pneg %p162
        %p710 = pneg %p159
        %p711 = pneg %p183
        %p712 = pneg %p180
        %p713 = pneg %p204
        %p714 = pneg %p201
        %p715 = pneg %p225
        %p716 = pneg %p222
        %p717 = pneg %p246
        %p718 = pneg %p243
        %p719 = pneg %p267
        %p720 = pneg %p264
        %p721 = pneg %p288
        %p722 = pneg %p285
        %p723 = pneg %p309
        %p724 = pneg %p306
        %p725 = pneg %p330
        %p726 = pneg %p327
        %p727 = pneg %p351
        %p728 = pneg %p348
        %p729 = pneg %p372
        %p730 = pneg %p369
        %p731 = pneg %p393
        %p732 = pneg %p390
        %p733 = pneg %p414
        %p734 = pneg %p411
        %p735 = pneg %p435
        %p736 = pneg %p432
        %p737 = pneg %p456
        %p738 = pneg %p453
        %p739 = pneg %p477
        %p740 = pneg %p474
        %p741 = pneg %p505
        %p742 = pneg %p502
        %s743 = sand.u32 %s492, 1
        %s744 = scalar_lea.sflag [#allocation8], %s743
        %s745 = sand.u32 %s492, 1
        %s746 = smul.addr %s745, 8
        %s747 = scalar_lea.vmem [#allocation18], %s746
        %p748 = scmp.lt.s32.totalorder %s44, 1
        %s749 = scalar_select %p748, %s44, 1
        %s750 = smul.addr %s749, 8
        %s751 = scalar_lea.vmem %s0, %s750
        %p753 = scmp.eq.s32.totalorder %s45, 0
        // Predicated region
        $region129: #{tpu_custom_call.1} parent=99 // pred_check
          %p754 = pneg %p753
        $region130: #{tpu_custom_call.1} parent=99 // pred_check_branch
          %756 = sbr.rel (%p754) target = $region132
        $region131: #{tpu_custom_call.1} parent=99 // pred_region
          %v757 = vld [vmem:[%s751] sm:$0xff]
          %v758 = vld [vmem:[%s14] sm:$0x1]
          %v759 = vld [vmem:[%s15] sm:$0x1]
          %vm760 = vcmask 261120
          %v761 = vsel %vm760, %v757, 0.0
          %762 = vadd.xlane.f32.xlu0 %v761
          %v763 = vpop.xlane.xlu0 %762
          %v764 = vrcp.pop 32.0
          %v765 = vmul.f32 %v763, %v764
          %v766 = vsub.f32 %v757, %v765
          %v767 = vmul.f32 %v766, %v766
          %v768 = vsel %vm760, %v767, 0.0
          %769 = vadd.xlane.f32.xlu0 %v768
          %v770 = vpop.xlane.xlu0 %769
          %v771 = vmul.f32 %v770, 0.032258064
          %v772 = vrsqrt.pop %v771
          %v773 = vmul.f32 %v771, %v772
          %vm774 = vcmp.eq.f32.partialorder %v771, inf
          %v775 = vsel %vm774, %v771, %v773
          %vm776 = vcmp.eq.f32.partialorder %v771, 0.0
          %v777 = vand.u32 %v771, 2147483648
          %v778 = vsel %vm776, %v777, %v775
          %v780 = vlaneseq
          %v781 = vshrl.u32 %v780, 7
          %v782 = vsub.s32 0, %v781
          %v783 = vrot.slane %v758, %v782
          %v785 = vmul.f32 %v783, %v766
          %v786 = vadd.f32 %v778, 1e-06
          %v787 = vrcp.pop %v786
          %v788 = vmul.f32 1.0, %v787
          %v789 = vmul.f32 %v785, %v788
          %v791 = vlaneseq
          %v792 = vshrl.u32 %v791, 7
          %v793 = vsub.s32 0, %v792
          %v794 = vrot.slane %v759, %v793
          %v796 = vadd.f32 %v789, %v794
          %v797 = vpack.c.bf16 %v796, %v796
          %v798 = vld [vmem:[%s2] sm:$0xf]
          %v799 = vld [vmem:[%s2 + $0x4] sm:$0xf]
          %v800 = vld [vmem:[%s2 + $0x8] sm:$0xf]
          %v801 = vld [vmem:[%s2 + $0xc] sm:$0xf]
          %v802 = vld [vmem:[#allocation9] sm:$0x1]
          %v804 = vlaneseq
          %v805 = vshrl.u32 %v804, 7
          %v806 = vsub.s32 0, %v805
          %v807 = vrot.slane %v802, %v806
          %v813 = vunpack.c.l.b16 %v798
          %v814 = vunpack.c.l.b16 %v799
          %v815 = vunpack.c.l.b16 %v800
          %v816 = vunpack.c.l.b16 %v801
          %v817 = vpack.c.b16 %v814, %v813
          %v818 = vpack.c.b16 %v816, %v815
          %v822 = vsel %vm760, %v797, 0
          %824 = vmatprep.subr.bf16.mxu0 0
          %825 = vmatpush1.bf16.msra.mxu0 0
          %826 = vmatprep.subr.bf16.mxu0 0
          %827 = vmatpush1.bf16.msra.mxu0 0
          %828 = vmatprep.subr.bf16.mxu0 0
          %829 = vmatpush1.bf16.msra.mxu0 0
          %830 = vmatprep.subr.bf16.mxu0 0
          %831 = vmatpush1.bf16.msra.mxu0 0
          %832 = vmatprep.subr.bf16.mxu0 0
          %833 = vmatpush1.bf16.msra.mxu0 0
          %834 = vmatprep.subr.bf16.mxu0 0
          %835 = vmatpush1.bf16.msra.mxu0 0
          %836 = vmatprep.subr.bf16.mxu0 0
          %837 = vmatpush1.bf16.msra.mxu0 %v818
          %838 = vmatprep.subr.bf16.mxu0 0
          %839 = vmatpush1.bf16.msra.mxu0 %v817
          %840 = vmatprep.subr.bf16.mxu0 0
          %841 = vmatpush2.bf16.msra.mxu0 0
          %842 = vmatprep.subr.bf16.mxu0 0
          %843 = vmatpush2.bf16.msra.mxu0 0
          %844 = vmatprep.subr.bf16.mxu0 0
          %845 = vmatpush2.bf16.msra.mxu0 0
          %846 = vmatprep.subr.bf16.mxu0 0
          %847 = vmatpush2.bf16.msra.mxu0 0
          %848 = vmatprep.subr.bf16.mxu0 0
          %849 = vmatpush2.bf16.msra.mxu0 0
          %850 = vmatprep.subr.bf16.mxu0 0
          %851 = vmatpush2.bf16.msra.mxu0 0
          %852 = vmatprep.subr.bf16.mxu0 0
          %853 = vmatpush2.bf16.msra.mxu0 0
          %854 = vmatprep.subr.bf16.mxu0 0
          %855 = vmatpush2.bf16.msra.mxu0 0
          %856 = vmatprep.mubr.bf16.mxu0 0
          %857 = vmatmul.mubr.bf16.gmra.mxu0 %v822
          %v858 = vpop.f32.mrf.mxu0
          %v859 = vadd.f32 %v807, %v858
          %v860 = vpop.f32.mrf.mxu0
          %v861 = vpop.f32.mrf.mxu0
          %v862 = vpop.f32.mrf.mxu0
          %863 = vdwg.mxu0
          %v864 = vmul.f32 %v859, 0.35355338
          %v865 = vpack.c.bf16 %v864, %v864
          %vm866 = vcmask 257024
          %867 = vst.msk [vmem:[#allocation2] sm:$0xf] %vm866, %v865
          %v868 = vld [vmem:[%s4] sm:$0xf]
          %v869 = vld [vmem:[%s4 + $0x4] sm:$0xf]
          %v870 = vld [vmem:[%s4 + $0x8] sm:$0xf]
          %v871 = vld [vmem:[%s4 + $0xc] sm:$0xf]
          %v872 = vld [vmem:[#allocation11] sm:$0x1]
          %v874 = vlaneseq
          %v875 = vshrl.u32 %v874, 7
          %v876 = vsub.s32 0, %v875
          %v877 = vrot.slane %v872, %v876
          %v883 = vunpack.c.l.b16 %v868
          %v884 = vunpack.c.l.b16 %v869
          %v885 = vunpack.c.l.b16 %v870
          %v886 = vunpack.c.l.b16 %v871
          %v887 = vpack.c.b16 %v884, %v883
          %v888 = vpack.c.b16 %v886, %v885
          %891 = vmatprep.subr.bf16.mxu0 0
          %892 = vmatpush1.bf16.msra.mxu0 0
          %893 = vmatprep.subr.bf16.mxu0 0
          %894 = vmatpush1.bf16.msra.mxu0 0
          %895 = vmatprep.subr.bf16.mxu0 0
          %896 = vmatpush1.bf16.msra.mxu0 0
          %897 = vmatprep.subr.bf16.mxu0 0
          %898 = vmatpush1.bf16.msra.mxu0 0
          %899 = vmatprep.subr.bf16.mxu0 0
          %900 = vmatpush1.bf16.msra.mxu0 0
          %901 = vmatprep.subr.bf16.mxu0 0
          %902 = vmatpush1.bf16.msra.mxu0 0
          %903 = vmatprep.subr.bf16.mxu0 0
          %904 = vmatpush1.bf16.msra.mxu0 %v888
          %905 = vmatprep.subr.bf16.mxu0 0
          %906 = vmatpush1.bf16.msra.mxu0 %v887
          %907 = vmatprep.subr.bf16.mxu0 0
          %908 = vmatpush2.bf16.msra.mxu0 0
          %909 = vmatprep.subr.bf16.mxu0 0
          %910 = vmatpush2.bf16.msra.mxu0 0
          %911 = vmatprep.subr.bf16.mxu0 0
          %912 = vmatpush2.bf16.msra.mxu0 0
          %913 = vmatprep.subr.bf16.mxu0 0
          %914 = vmatpush2.bf16.msra.mxu0 0
          %915 = vmatprep.subr.bf16.mxu0 0
          %916 = vmatpush2.bf16.msra.mxu0 0
          %917 = vmatprep.subr.bf16.mxu0 0
          %918 = vmatpush2.bf16.msra.mxu0 0
          %919 = vmatprep.subr.bf16.mxu0 0
          %920 = vmatpush2.bf16.msra.mxu0 0
          %921 = vmatprep.subr.bf16.mxu0 0
          %922 = vmatpush2.bf16.msra.mxu0 0
          %923 = vmatprep.mubr.bf16.mxu0 0
          %924 = vmatmul.mubr.bf16.gmra.mxu0 %v822
          %v925 = vpop.f32.mrf.mxu0
          %v926 = vadd.f32 %v877, %v925
          %v927 = vpop.f32.mrf.mxu0
          %v928 = vpop.f32.mrf.mxu0
          %v929 = vpop.f32.mrf.mxu0
          %930 = vdwg.mxu0
          %v931 = vpack.c.bf16 %v926, %v926
          %932 = vst.msk [vmem:[#allocation3] sm:$0xf] %vm866, %v931
          %v933 = vld [vmem:[#allocation12] sm:$0xf]
          %v934 = vld [vmem:[#allocation12 + $0x4] sm:$0xf]
          %v935 = vld [vmem:[#allocation12 + $0x8] sm:$0xf]
          %v936 = vld [vmem:[#allocation12 + $0xc] sm:$0xf]
          %v937 = vld [vmem:[#allocation14] sm:$0x1]
          %v939 = vlaneseq
          %v940 = vshrl.u32 %v939, 7
          %v941 = vsub.s32 0, %v940
          %v942 = vrot.slane %v937, %v941
          %v948 = vunpack.c.l.b16 %v933
          %v949 = vunpack.c.l.b16 %v934
          %v950 = vunpack.c.l.b16 %v935
          %v951 = vunpack.c.l.b16 %v936
          %v952 = vpack.c.b16 %v949, %v948
          %v953 = vpack.c.b16 %v951, %v950
          %956 = vmatprep.subr.bf16.mxu0 0
          %957 = vmatpush1.bf16.msra.mxu0 0
          %958 = vmatprep.subr.bf16.mxu0 0
          %959 = vmatpush1.bf16.msra.mxu0 0
          %960 = vmatprep.subr.bf16.mxu0 0
          %961 = vmatpush1.bf16.msra.mxu0 0
          %962 = vmatprep.subr.bf16.mxu0 0
          %963 = vmatpush1.bf16.msra.mxu0 0
          %964 = vmatprep.subr.bf16.mxu0 0
          %965 = vmatpush1.bf16.msra.mxu0 0
          %966 = vmatprep.subr.bf16.mxu0 0
          %967 = vmatpush1.bf16.msra.mxu0 0
          %968 = vmatprep.subr.bf16.mxu0 0
          %969 = vmatpush1.bf16.msra.mxu0 %v953
          %970 = vmatprep.subr.bf16.mxu0 0
          %971 = vmatpush1.bf16.msra.mxu0 %v952
          %972 = vmatprep.subr.bf16.mxu0 0
          %973 = vmatpush2.bf16.msra.mxu0 0
          %974 = vmatprep.subr.bf16.mxu0 0
          %975 = vmatpush2.bf16.msra.mxu0 0
          %976 = vmatprep.subr.bf16.mxu0 0
          %977 = vmatpush2.bf16.msra.mxu0 0
          %978 = vmatprep.subr.bf16.mxu0 0
          %979 = vmatpush2.bf16.msra.mxu0 0
          %980 = vmatprep.subr.bf16.mxu0 0
          %981 = vmatpush2.bf16.msra.mxu0 0
          %982 = vmatprep.subr.bf16.mxu0 0
          %983 = vmatpush2.bf16.msra.mxu0 0
          %984 = vmatprep.subr.bf16.mxu0 0
          %985 = vmatpush2.bf16.msra.mxu0 0
          %986 = vmatprep.subr.bf16.mxu0 0
          %987 = vmatpush2.bf16.msra.mxu0 0
          %988 = vmatprep.mubr.bf16.mxu0 0
          %989 = vmatmul.mubr.bf16.gmra.mxu0 %v822
          %v990 = vpop.f32.mrf.mxu0
          %v991 = vadd.f32 %v942, %v990
          %v992 = vpop.f32.mrf.mxu0
          %v993 = vpop.f32.mrf.mxu0
          %v994 = vpop.f32.mrf.mxu0
          %995 = vdwg.mxu0
          %v996 = vpack.c.bf16 %v991, %v991
          %997 = vst.msk [vmem:[#allocation4] sm:$0xf] %vm866, %v996
        $region132: #{tpu_custom_call.1} parent=99 // pred_fallthru
          _
        %s998 = smul.u32 %s45, 8
        %s999 = scalar_lea.vmem %s751, %s998
        %v1000 = vld [vmem:[%s999] sm:$0xff]
        %v1001 = vld [vmem:[%s664] sm:$0x1]
        %vm1002 = vcmp.ne.f32.partialorder %v1001, 0.0
        %v1003 = vsel %vm1002, 0.0, -1e+09
        %s1004 = sshra.s32 %s998, 3
        %s1005 = sand.u32 %s998, 7
        %s1006 = smul.addr %s1004, 4
        %s1007 = scalar_lea.vmem [#allocation2], %s1006
        %v1008 = vld [vmem:[%s1007] sm:$0xf]
        %v1009 = vld [vmem:[#allocation3] sm:$0xf]
        %v1010 = vld [vmem:[#allocation4] sm:$0xf]
        %v1012 = vlaneseq
        %v1013 = vshrl.u32 %v1012, 7
        %v1014 = vsub.s32 0, %v1013
        %v1015 = vrot.slane %v1003, %v1014
        %vm1017 = vcmask 64512
        %v1019 = vsel %vm1017, %v1008, 0
        %v1022 = vsel %vm1017, %v1009, 0
        %1024 = vmatprep.subr.bf16.mxu0 0
        %1025 = vmatpush1.bf16.xpose.msra.mxu0 0
        %1026 = vmatprep.subr.bf16.mxu0 0
        %1027 = vmatpush1.bf16.xpose.msra.mxu0 0
        %1028 = vmatprep.subr.bf16.mxu0 0
        %1029 = vmatpush1.bf16.xpose.msra.mxu0 0
        %1030 = vmatprep.subr.bf16.mxu0 0
        %1031 = vmatpush1.bf16.xpose.msra.mxu0 0
        %1032 = vmatprep.subr.bf16.mxu0 0
        %1033 = vmatpush1.bf16.xpose.msra.mxu0 0
        %1034 = vmatprep.subr.bf16.mxu0 0
        %1035 = vmatpush1.bf16.xpose.msra.mxu0 0
        %1036 = vmatprep.subr.bf16.mxu0 0
        %1037 = vmatpush1.bf16.xpose.msra.mxu0 0
        %1038 = vmatprep.subr.bf16.mxu0 0
        %1039 = vmatpush1.bf16.xpose.msra.mxu0 %v1022
        %1040 = vmatprep.subr.bf16.mxu0 0
        %1041 = vmatpush2.bf16.xpose.msra.mxu0 0
        %1042 = vmatprep.subr.bf16.mxu0 0
        %1043 = vmatpush2.bf16.xpose.msra.mxu0 0
        %1044 = vmatprep.subr.bf16.mxu0 0
        %1045 = vmatpush2.bf16.xpose.msra.mxu0 0
        %1046 = vmatprep.subr.bf16.mxu0 0
        %1047 = vmatpush2.bf16.xpose.msra.mxu0 0
        %1048 = vmatprep.subr.bf16.mxu0 0
        %1049 = vmatpush2.bf16.xpose.msra.mxu0 0
        %1050 = vmatprep.subr.bf16.mxu0 0
        %1051 = vmatpush2.bf16.xpose.msra.mxu0 0
        %1052 = vmatprep.subr.bf16.mxu0 0
        %1053 = vmatpush2.bf16.xpose.msra.mxu0 0
        %1054 = vmatprep.subr.bf16.mxu0 0
        %1055 = vmatpush2.bf16.xpose.msra.mxu0 0
        %1056 = vmatprep.mubr.bf16.mxu0 0
        %1057 = vmatmul.mubr.bf16.gmra.mxu0 %v1019
        %v1058 = vpop.f32.mrf.mxu0
        %v1059 = vadd.f32 %v1015, %v1058
        %v1060 = vpop.f32.mrf.mxu0
        %v1061 = vpop.f32.mrf.mxu0
        %v1062 = vpop.f32.mrf.mxu0
        %1063 = vdwg.mxu0
        %v1064 = vsel %vm1017, %v1059, -inf
        %1065 = vmax.xlane.f32.xlu0 %v1064
        %v1066 = vpop.xlane.xlu0 %1065
        %v1067 = vsub.f32 %v1059, %v1066
        %v1068 = vmul.f32 %v1067, 1.442695
        %v1069 = vpow.pop %v1068
        %v1070 = vsel %vm1017, %v1069, 0.0
        %1071 = vadd.xlane.f32.xlu0 %v1070
        %v1072 = vpop.xlane.xlu0 %1071
        %v1073 = vrcp.pop %v1072
        %v1074 = vmul.f32 %v1069, %v1073
        %v1075 = vpack.c.bf16 %v1074, %v1074
        %v1077 = vsel %vm1017, %v1075, 0
        %vm1079 = vcmask 1043456
        %v1081 = vsel %vm1079, %v1010, 0
        %1083 = vmatprep.subr.bf16.mxu0 0
        %1084 = vmatpush1.bf16.msra.mxu0 0
        %1085 = vmatprep.subr.bf16.mxu0 0
        %1086 = vmatpush1.bf16.msra.mxu0 0
        %1087 = vmatprep.subr.bf16.mxu0 0
        %1088 = vmatpush1.bf16.msra.mxu0 0
        %1089 = vmatprep.subr.bf16.mxu0 0
        %1090 = vmatpush1.bf16.msra.mxu0 0
        %1091 = vmatprep.subr.bf16.mxu0 0
        %1092 = vmatpush1.bf16.msra.mxu0 0
        %1093 = vmatprep.subr.bf16.mxu0 0
        %1094 = vmatpush1.bf16.msra.mxu0 0
        %1095 = vmatprep.subr.bf16.mxu0 0
        %1096 = vmatpush1.bf16.msra.mxu0 0
        %1097 = vmatprep.subr.bf16.mxu0 0
        %1098 = vmatpush1.bf16.msra.mxu0 %v1081
        %1099 = vmatprep.subr.bf16.mxu0 0
        %1100 = vmatpush2.bf16.msra.mxu0 0
        %1101 = vmatprep.subr.bf16.mxu0 0
        %1102 = vmatpush2.bf16.msra.mxu0 0
        %1103 = vmatprep.subr.bf16.mxu0 0
        %1104 = vmatpush2.bf16.msra.mxu0 0
        %1105 = vmatprep.subr.bf16.mxu0 0
        %1106 = vmatpush2.bf16.msra.mxu0 0
        %1107 = vmatprep.subr.bf16.mxu0 0
        %1108 = vmatpush2.bf16.msra.mxu0 0
        %1109 = vmatprep.subr.bf16.mxu0 0
        %1110 = vmatpush2.bf16.msra.mxu0 0
        %1111 = vmatprep.subr.bf16.mxu0 0
        %1112 = vmatpush2.bf16.msra.mxu0 0
        %1113 = vmatprep.subr.bf16.mxu0 0
        %1114 = vmatpush2.bf16.msra.mxu0 0
        %1115 = vmatprep.mubr.bf16.mxu0 0
        %1116 = vmatmul.mubr.bf16.gmra.mxu0 %v1077
        %v1117 = vpop.f32.mrf.mxu0
        %v1118 = vadd.f32 0.0, %v1117
        %v1119 = vpop.f32.mrf.mxu0
        %v1120 = vpop.f32.mrf.mxu0
        %v1121 = vpop.f32.mrf.mxu0
        %1122 = vdwg.mxu0
        %v1123 = vpack.c.bf16 %v1118, %v1118
        %vm1124 = vcmask 60416
        %1125 = vst.msk [vmem:[#allocation5] sm:$0xf] %vm1124, %v1123
        %v1126 = vld [vmem:[#allocation3] sm:$0xf]
        %v1127 = vld [vmem:[#allocation4] sm:$0xf]
        %v1129 = vunpack.c.l.b16 %v1008
        %v1130 = vpack.c.b16 %v1129, %v1129
        %1131 = vrot.lane.b32.xlu0 %v1130, 120
        %v1132 = vpop.permute.xlu0 %1131
        %v1134 = vunpack.c.l.b16 %v1126
        %v1135 = vpack.c.b16 %v1134, %v1134
        %1136 = vrot.lane.b32.xlu0 %v1135, 120
        %v1137 = vpop.permute.xlu0 %1136
        %v1139 = vsel %vm1017, %v1132, 0
        %v1142 = vsel %vm1017, %v1137, 0
        %1144 = vmatprep.subr.bf16.mxu0 0
        %1145 = vmatpush1.bf16.xpose.msra.mxu0 0
        %1146 = vmatprep.subr.bf16.mxu0 0
        %1147 = vmatpush1.bf16.xpose.msra.mxu0 0
        %1148 = vmatprep.subr.bf16.mxu0 0
        %1149 = vmatpush1.bf16.xpose.msra.mxu0 0
        %1150 = vmatprep.subr.bf16.mxu0 0
        %1151 = vmatpush1.bf16.xpose.msra.mxu0 0
        %1152 = vmatprep.subr.bf16.mxu0 0
        %1153 = vmatpush1.bf16.xpose.msra.mxu0 0
        %1154 = vmatprep.subr.bf16.mxu0 0
        %1155 = vmatpush1.bf16.xpose.msra.mxu0 0
        %1156 = vmatprep.subr.bf16.mxu0 0
        %1157 = vmatpush1.bf16.xpose.msra.mxu0 0
        %1158 = vmatprep.subr.bf16.mxu0 0
        %1159 = vmatpush1.bf16.xpose.msra.mxu0 %v1142
        %1160 = vmatprep.subr.bf16.mxu0 0
        %1161 = vmatpush2.bf16.xpose.msra.mxu0 0
        %1162 = vmatprep.subr.bf16.mxu0 0
        %1163 = vmatpush2.bf16.xpose.msra.mxu0 0
        %1164 = vmatprep.subr.bf16.mxu0 0
        %1165 = vmatpush2.bf16.xpose.msra.mxu0 0
        %1166 = vmatprep.subr.bf16.mxu0 0
        %1167 = vmatpush2.bf16.xpose.msra.mxu0 0
        %1168 = vmatprep.subr.bf16.mxu0 0
        %1169 = vmatpush2.bf16.xpose.msra.mxu0 0
        %1170 = vmatprep.subr.bf16.mxu0 0
        %1171 = vmatpush2.bf16.xpose.msra.mxu0 0
        %1172 = vmatprep.subr.bf16.mxu0 0
        %1173 = vmatpush2.bf16.xpose.msra.mxu0 0
        %1174 = vmatprep.subr.bf16.mxu0 0
        %1175 = vmatpush2.bf16.xpose.msra.mxu0 0
        %1176 = vmatprep.mubr.bf16.mxu0 0
        %1177 = vmatmul.mubr.bf16.gmra.mxu0 %v1139
        %v1178 = vpop.f32.mrf.mxu0
        %v1179 = vadd.f32 %v1015, %v1178
        %v1180 = vpop.f32.mrf.mxu0
        %v1181 = vpop.f32.mrf.mxu0
        %v1182 = vpop.f32.mrf.mxu0
        %1183 = vdwg.mxu0
        %v1184 = vsel %vm1017, %v1179, -inf
        %1185 = vmax.xlane.f32.xlu0 %v1184
        %v1186 = vpop.xlane.xlu0 %1185
        %v1187 = vsub.f32 %v1179, %v1186
        %v1188 = vmul.f32 %v1187, 1.442695
        %v1189 = vpow.pop %v1188
        %v1190 = vsel %vm1017, %v1189, 0.0
        %1191 = vadd.xlane.f32.xlu0 %v1190
        %v1192 = vpop.xlane.xlu0 %1191
        %v1193 = vrcp.pop %v1192
        %v1194 = vmul.f32 %v1189, %v1193
        %v1195 = vpack.c.bf16 %v1194, %v1194
        %v1197 = vunpack.c.l.b16 %v1127
        %v1198 = vpack.c.b16 %v1197, %v1197
        %1199 = vrot.lane.b32.xlu0 %v1198, 120
        %v1200 = vpop.permute.xlu0 %1199
        %v1202 = vsel %vm1017, %v1195, 0
        %v1205 = vsel %vm1079, %v1200, 0
        %1207 = vmatprep.subr.bf16.mxu0 0
        %1208 = vmatpush1.bf16.msra.mxu0 0
        %1209 = vmatprep.subr.bf16.mxu0 0
        %1210 = vmatpush1.bf16.msra.mxu0 0
        %1211 = vmatprep.subr.bf16.mxu0 0
        %1212 = vmatpush1.bf16.msra.mxu0 0
        %1213 = vmatprep.subr.bf16.mxu0 0
        %1214 = vmatpush1.bf16.msra.mxu0 0
        %1215 = vmatprep.subr.bf16.mxu0 0
        %1216 = vmatpush1.bf16.msra.mxu0 0
        %1217 = vmatprep.subr.bf16.mxu0 0
        %1218 = vmatpush1.bf16.msra.mxu0 0
        %1219 = vmatprep.subr.bf16.mxu0 0
        %1220 = vmatpush1.bf16.msra.mxu0 0
        %1221 = vmatprep.subr.bf16.mxu0 0
        %1222 = vmatpush1.bf16.msra.mxu0 %v1205
        %1223 = vmatprep.subr.bf16.mxu0 0
        %1224 = vmatpush2.bf16.msra.mxu0 0
        %1225 = vmatprep.subr.bf16.mxu0 0
        %1226 = vmatpush2.bf16.msra.mxu0 0
        %1227 = vmatprep.subr.bf16.mxu0 0
        %1228 = vmatpush2.bf16.msra.mxu0 0
        %1229 = vmatprep.subr.bf16.mxu0 0
        %1230 = vmatpush2.bf16.msra.mxu0 0
        %1231 = vmatprep.subr.bf16.mxu0 0
        %1232 = vmatpush2.bf16.msra.mxu0 0
        %1233 = vmatprep.subr.bf16.mxu0 0
        %1234 = vmatpush2.bf16.msra.mxu0 0
        %1235 = vmatprep.subr.bf16.mxu0 0
        %1236 = vmatpush2.bf16.msra.mxu0 0
        %1237 = vmatprep.subr.bf16.mxu0 0
        %1238 = vmatpush2.bf16.msra.mxu0 0
        %1239 = vmatprep.mubr.bf16.mxu0 0
        %1240 = vmatmul.mubr.bf16.gmra.mxu0 %v1202
        %v1241 = vpop.f32.mrf.mxu0
        %v1242 = vadd.f32 0.0, %v1241
        %v1243 = vpop.f32.mrf.mxu0
        %v1244 = vpop.f32.mrf.mxu0
        %v1245 = vpop.f32.mrf.mxu0
        %1246 = vdwg.mxu0
        %v1247 = vpack.c.bf16 %v1242, %v1242
        %v1249 = vunpack.c.l.b16 %v1247
        %v1250 = vpack.c.b16 %v1249, %v1249
        %1251 = vrot.lane.b32.xlu0 %v1250, 8
        %v1252 = vpop.permute.xlu0 %1251
        %vm1254 = vcmask 126016
        %1255 = vst.msk [vmem:[#allocation5] sm:$0xf] %vm1254, %v1252
        %v1256 = vld [vmem:[#allocation3] sm:$0xf]
        %v1257 = vld [vmem:[#allocation4] sm:$0xf]
        %1258 = vrot.lane.b32.xlu0 %v1130, 112
        %v1259 = vpop.permute.xlu0 %1258
        %v1261 = vunpack.c.l.b16 %v1256
        %v1262 = vpack.c.b16 %v1261, %v1261
        %1263 = vrot.lane.b32.xlu0 %v1262, 112
        %v1264 = vpop.permute.xlu0 %1263
        %v1266 = vsel %vm1017, %v1259, 0
        %v1269 = vsel %vm1017, %v1264, 0
        %1271 = vmatprep.subr.bf16.mxu0 0
        %1272 = vmatpush1.bf16.xpose.msra.mxu0 0
        %1273 = vmatprep.subr.bf16.mxu0 0
        %1274 = vmatpush1.bf16.xpose.msra.mxu0 0
        %1275 = vmatprep.subr.bf16.mxu0 0
        %1276 = vmatpush1.bf16.xpose.msra.mxu0 0
        %1277 = vmatprep.subr.bf16.mxu0 0
        %1278 = vmatpush1.bf16.xpose.msra.mxu0 0
        %1279 = vmatprep.subr.bf16.mxu0 0
        %1280 = vmatpush1.bf16.xpose.msra.mxu0 0
        %1281 = vmatprep.subr.bf16.mxu0 0
        %1282 = vmatpush1.bf16.xpose.msra.mxu0 0
        %1283 = vmatprep.subr.bf16.mxu0 0
        %1284 = vmatpush1.bf16.xpose.msra.mxu0 0
        %1285 = vmatprep.subr.bf16.mxu0 0
        %1286 = vmatpush1.bf16.xpose.msra.mxu0 %v1269
        %1287 = vmatprep.subr.bf16.mxu0 0
        %1288 = vmatpush2.bf16.xpose.msra.mxu0 0
        %1289 = vmatprep.subr.bf16.mxu0 0
        %1290 = vmatpush2.bf16.xpose.msra.mxu0 0
        %1291 = vmatprep.subr.bf16.mxu0 0
        %1292 = vmatpush2.bf16.xpose.msra.mxu0 0
        %1293 = vmatprep.subr.bf16.mxu0 0
        %1294 = vmatpush2.bf16.xpose.msra.mxu0 0
        %1295 = vmatprep.subr.bf16.mxu0 0
        %1296 = vmatpush2.bf16.xpose.msra.mxu0 0
        %1297 = vmatprep.subr.bf16.mxu0 0
        %1298 = vmatpush2.bf16.xpose.msra.mxu0 0
        %1299 = vmatprep.subr.bf16.mxu0 0
        %1300 = vmatpush2.bf16.xpose.msra.mxu0 0
        %1301 = vmatprep.subr.bf16.mxu0 0
        %1302 = vmatpush2.bf16.xpose.msra.mxu0 0
        %1303 = vmatprep.mubr.bf16.mxu0 0
        %1304 = vmatmul.mubr.bf16.gmra.mxu0 %v1266
        %v1305 = vpop.f32.mrf.mxu0
        %v1306 = vadd.f32 %v1015, %v1305
        %v1307 = vpop.f32.mrf.mxu0
        %v1308 = vpop.f32.mrf.mxu0
        %v1309 = vpop.f32.mrf.mxu0
        %1310 = vdwg.mxu0
        %v1311 = vsel %vm1017, %v1306, -inf
        %1312 = vmax.xlane.f32.xlu0 %v1311
        %v1313 = vpop.xlane.xlu0 %1312
        %v1314 = vsub.f32 %v1306, %v1313
        %v1315 = vmul.f32 %v1314, 1.442695
        %v1316 = vpow.pop %v1315
        %v1317 = vsel %vm1017, %v1316, 0.0
        %1318 = vadd.xlane.f32.xlu0 %v1317
        %v1319 = vpop.xlane.xlu0 %1318
        %v1320 = vrcp.pop %v1319
        %v1321 = vmul.f32 %v1316, %v1320
        %v1322 = vpack.c.bf16 %v1321, %v1321
        %v1324 = vunpack.c.l.b16 %v1257
        %v1325 = vpack.c.b16 %v1324, %v1324
        %1326 = vrot.lane.b32.xlu0 %v1325, 112
        %v1327 = vpop.permute.xlu0 %1326
        %v1329 = vsel %vm1017, %v1322, 0
        %v1332 = vsel %vm1079, %v1327, 0
        %1334 = vmatprep.subr.bf16.mxu0 0
        %1335 = vmatpush1.bf16.msra.mxu0 0
        %1336 = vmatprep.subr.bf16.mxu0 0
        %1337 = vmatpush1.bf16.msra.mxu0 0
        %1338 = vmatprep.subr.bf16.mxu0 0
        %1339 = vmatpush1.bf16.msra.mxu0 0
        %1340 = vmatprep.subr.bf16.mxu0 0
        %1341 = vmatpush1.bf16.msra.mxu0 0
        %1342 = vmatprep.subr.bf16.mxu0 0
        %1343 = vmatpush1.bf16.msra.mxu0 0
        %1344 = vmatprep.subr.bf16.mxu0 0
        %1345 = vmatpush1.bf16.msra.mxu0 0
        %1346 = vmatprep.subr.bf16.mxu0 0
        %1347 = vmatpush1.bf16.msra.mxu0 0
        %1348 = vmatprep.subr.bf16.mxu0 0
        %1349 = vmatpush1.bf16.msra.mxu0 %v1332
        %1350 = vmatprep.subr.bf16.mxu0 0
        %1351 = vmatpush2.bf16.msra.mxu0 0
        %1352 = vmatprep.subr.bf16.mxu0 0
        %1353 = vmatpush2.bf16.msra.mxu0 0
        %1354 = vmatprep.subr.bf16.mxu0 0
        %1355 = vmatpush2.bf16.msra.mxu0 0
        %1356 = vmatprep.subr.bf16.mxu0 0
        %1357 = vmatpush2.bf16.msra.mxu0 0
        %1358 = vmatprep.subr.bf16.mxu0 0
        %1359 = vmatpush2.bf16.msra.mxu0 0
        %1360 = vmatprep.subr.bf16.mxu0 0
        %1361 = vmatpush2.bf16.msra.mxu0 0
        %1362 = vmatprep.subr.bf16.mxu0 0
        %1363 = vmatpush2.bf16.msra.mxu0 0
        %1364 = vmatprep.subr.bf16.mxu0 0
        %1365 = vmatpush2.bf16.msra.mxu0 0
        %1366 = vmatprep.mubr.bf16.mxu0 0
        %1367 = vmatmul.mubr.bf16.gmra.mxu0 %v1329
        %v1368 = vpop.f32.mrf.mxu0
        %v1369 = vadd.f32 0.0, %v1368
        %v1370 = vpop.f32.mrf.mxu0
        %v1371 = vpop.f32.mrf.mxu0
        %v1372 = vpop.f32.mrf.mxu0
        %1373 = vdwg.mxu0
        %v1374 = vpack.c.bf16 %v1369, %v1369
        %v1376 = vunpack.c.l.b16 %v1374
        %v1377 = vpack.c.b16 %v1376, %v1376
        %1378 = vrot.lane.b32.xlu0 %v1377, 16
        %v1379 = vpop.permute.xlu0 %1378
        %vm1381 = vcmask 191616
        %1382 = vst.msk [vmem:[#allocation5] sm:$0xf] %vm1381, %v1379
        %v1383 = vld [vmem:[#allocation3] sm:$0xf]
        %v1384 = vld [vmem:[#allocation4] sm:$0xf]
        %1385 = vrot.lane.b32.xlu0 %v1130, 104
        %v1386 = vpop.permute.xlu0 %1385
        %v1388 = vunpack.c.l.b16 %v1383
        %v1389 = vpack.c.b16 %v1388, %v1388
        %1390 = vrot.lane.b32.xlu0 %v1389, 104
        %v1391 = vpop.permute.xlu0 %1390
        %v1393 = vsel %vm1017, %v1386, 0
        %v1396 = vsel %vm1017, %v1391, 0
        %1398 = vmatprep.subr.bf16.mxu0 0
        %1399 = vmatpush1.bf16.xpose.msra.mxu0 0
        %1400 = vmatprep.subr.bf16.mxu0 0
        %1401 = vmatpush1.bf16.xpose.msra.mxu0 0
        %1402 = vmatprep.subr.bf16.mxu0 0
        %1403 = vmatpush1.bf16.xpose.msra.mxu0 0
        %1404 = vmatprep.subr.bf16.mxu0 0
        %1405 = vmatpush1.bf16.xpose.msra.mxu0 0
        %1406 = vmatprep.subr.bf16.mxu0 0
        %1407 = vmatpush1.bf16.xpose.msra.mxu0 0
        %1408 = vmatprep.subr.bf16.mxu0 0
        %1409 = vmatpush1.bf16.xpose.msra.mxu0 0
        %1410 = vmatprep.subr.bf16.mxu0 0
        %1411 = vmatpush1.bf16.xpose.msra.mxu0 0
        %1412 = vmatprep.subr.bf16.mxu0 0
        %1413 = vmatpush1.bf16.xpose.msra.mxu0 %v1396
        %1414 = vmatprep.subr.bf16.mxu0 0
        %1415 = vmatpush2.bf16.xpose.msra.mxu0 0
        %1416 = vmatprep.subr.bf16.mxu0 0
        %1417 = vmatpush2.bf16.xpose.msra.mxu0 0
        %1418 = vmatprep.subr.bf16.mxu0 0
        %1419 = vmatpush2.bf16.xpose.msra.mxu0 0
        %1420 = vmatprep.subr.bf16.mxu0 0
        %1421 = vmatpush2.bf16.xpose.msra.mxu0 0
        %1422 = vmatprep.subr.bf16.mxu0 0
        %1423 = vmatpush2.bf16.xpose.msra.mxu0 0
        %1424 = vmatprep.subr.bf16.mxu0 0
        %1425 = vmatpush2.bf16.xpose.msra.mxu0 0
        %1426 = vmatprep.subr.bf16.mxu0 0
        %1427 = vmatpush2.bf16.xpose.msra.mxu0 0
        %1428 = vmatprep.subr.bf16.mxu0 0
        %1429 = vmatpush2.bf16.xpose.msra.mxu0 0
        %1430 = vmatprep.mubr.bf16.mxu0 0
        %1431 = vmatmul.mubr.bf16.gmra.mxu0 %v1393
        %v1432 = vpop.f32.mrf.mxu0
        %v1433 = vadd.f32 %v1015, %v1432
        %v1434 = vpop.f32.mrf.mxu0
        %v1435 = vpop.f32.mrf.mxu0
        %v1436 = vpop.f32.mrf.mxu0
        %1437 = vdwg.mxu0
        %v1438 = vsel %vm1017, %v1433, -inf
        %1439 = vmax.xlane.f32.xlu0 %v1438
        %v1440 = vpop.xlane.xlu0 %1439
        %v1441 = vsub.f32 %v1433, %v1440
        %v1442 = vmul.f32 %v1441, 1.442695
        %v1443 = vpow.pop %v1442
        %v1444 = vsel %vm1017, %v1443, 0.0
        %1445 = vadd.xlane.f32.xlu0 %v1444
        %v1446 = vpop.xlane.xlu0 %1445
        %v1447 = vrcp.pop %v1446
        %v1448 = vmul.f32 %v1443, %v1447
        %v1449 = vpack.c.bf16 %v1448, %v1448
        %v1451 = vunpack.c.l.b16 %v1384
        %v1452 = vpack.c.b16 %v1451, %v1451
        %1453 = vrot.lane.b32.xlu0 %v1452, 104
        %v1454 = vpop.permute.xlu0 %1453
        %v1456 = vsel %vm1017, %v1449, 0
        %v1459 = vsel %vm1079, %v1454, 0
        %1461 = vmatprep.subr.bf16.mxu0 0
        %1462 = vmatpush1.bf16.msra.mxu0 0
        %1463 = vmatprep.subr.bf16.mxu0 0
        %1464 = vmatpush1.bf16.msra.mxu0 0
        %1465 = vmatprep.subr.bf16.mxu0 0
        %1466 = vmatpush1.bf16.msra.mxu0 0
        %1467 = vmatprep.subr.bf16.mxu0 0
        %1468 = vmatpush1.bf16.msra.mxu0 0
        %1469 = vmatprep.subr.bf16.mxu0 0
        %1470 = vmatpush1.bf16.msra.mxu0 0
        %1471 = vmatprep.subr.bf16.mxu0 0
        %1472 = vmatpush1.bf16.msra.mxu0 0
        %1473 = vmatprep.subr.bf16.mxu0 0
        %1474 = vmatpush1.bf16.msra.mxu0 0
        %1475 = vmatprep.subr.bf16.mxu0 0
        %1476 = vmatpush1.bf16.msra.mxu0 %v1459
        %1477 = vmatprep.subr.bf16.mxu0 0
        %1478 = vmatpush2.bf16.msra.mxu0 0
        %1479 = vmatprep.subr.bf16.mxu0 0
        %1480 = vmatpush2.bf16.msra.mxu0 0
        %1481 = vmatprep.subr.bf16.mxu0 0
        %1482 = vmatpush2.bf16.msra.mxu0 0
        %1483 = vmatprep.subr.bf16.mxu0 0
        %1484 = vmatpush2.bf16.msra.mxu0 0
        %1485 = vmatprep.subr.bf16.mxu0 0
        %1486 = vmatpush2.bf16.msra.mxu0 0
        %1487 = vmatprep.subr.bf16.mxu0 0
        %1488 = vmatpush2.bf16.msra.mxu0 0
        %1489 = vmatprep.subr.bf16.mxu0 0
        %1490 = vmatpush2.bf16.msra.mxu0 0
        %1491 = vmatprep.subr.bf16.mxu0 0
        %1492 = vmatpush2.bf16.msra.mxu0 0
        %1493 = vmatprep.mubr.bf16.mxu0 0
        %1494 = vmatmul.mubr.bf16.gmra.mxu0 %v1456
        %v1495 = vpop.f32.mrf.mxu0
        %v1496 = vadd.f32 0.0, %v1495
        %v1497 = vpop.f32.mrf.mxu0
        %v1498 = vpop.f32.mrf.mxu0
        %v1499 = vpop.f32.mrf.mxu0
        %1500 = vdwg.mxu0
        %v1501 = vpack.c.bf16 %v1496, %v1496
        %v1503 = vunpack.c.l.b16 %v1501
        %v1504 = vpack.c.b16 %v1503, %v1503
        %1505 = vrot.lane.b32.xlu0 %v1504, 24
        %v1506 = vpop.permute.xlu0 %1505
        %vm1508 = vcmask 257216
        %1509 = vst.msk [vmem:[#allocation5] sm:$0xf] %vm1508, %v1506
        %v1510 = vld [vmem:[#allocation5] sm:$0xf]
        %v1511 = vld [vmem:[#allocation15] sm:$0xf]
        %v1512 = vld [vmem:[#allocation15 + $0x4] sm:$0xf]
        %v1513 = vld [vmem:[#allocation15 + $0x8] sm:$0xf]
        %v1514 = vld [vmem:[#allocation15 + $0xc] sm:$0xf]
        %v1519 = vunpack.c.l.b16 %v1511
        %v1520 = vunpack.c.l.b16 %v1512
        %v1521 = vunpack.c.l.b16 %v1513
        %v1522 = vunpack.c.l.b16 %v1514
        %v1523 = vpack.c.b16 %v1520, %v1519
        %v1524 = vpack.c.b16 %v1522, %v1521
        %vm1527 = vcmask 261120
        %v1529 = vsel %vm1527, %v1510, 0
        %1531 = vmatprep.subr.bf16.mxu0 0
        %1532 = vmatpush1.bf16.msra.mxu0 0
        %1533 = vmatprep.subr.bf16.mxu0 0
        %1534 = vmatpush1.bf16.msra.mxu0 0
        %1535 = vmatprep.subr.bf16.mxu0 0
        %1536 = vmatpush1.bf16.msra.mxu0 0
        %1537 = vmatprep.subr.bf16.mxu0 0
        %1538 = vmatpush1.bf16.msra.mxu0 0
        %1539 = vmatprep.subr.bf16.mxu0 0
        %1540 = vmatpush1.bf16.msra.mxu0 0
        %1541 = vmatprep.subr.bf16.mxu0 0
        %1542 = vmatpush1.bf16.msra.mxu0 0
        %1543 = vmatprep.subr.bf16.mxu0 0
        %1544 = vmatpush1.bf16.msra.mxu0 %v1524
        %1545 = vmatprep.subr.bf16.mxu0 0
        %1546 = vmatpush1.bf16.msra.mxu0 %v1523
        %1547 = vmatprep.subr.bf16.mxu0 0
        %1548 = vmatpush2.bf16.msra.mxu0 0
        %1549 = vmatprep.subr.bf16.mxu0 0
        %1550 = vmatpush2.bf16.msra.mxu0 0
        %1551 = vmatprep.subr.bf16.mxu0 0
        %1552 = vmatpush2.bf16.msra.mxu0 0
        %1553 = vmatprep.subr.bf16.mxu0 0
        %1554 = vmatpush2.bf16.msra.mxu0 0
        %1555 = vmatprep.subr.bf16.mxu0 0
        %1556 = vmatpush2.bf16.msra.mxu0 0
        %1557 = vmatprep.subr.bf16.mxu0 0
        %1558 = vmatpush2.bf16.msra.mxu0 0
        %1559 = vmatprep.subr.bf16.mxu0 0
        %1560 = vmatpush2.bf16.msra.mxu0 0
        %1561 = vmatprep.subr.bf16.mxu0 0
        %1562 = vmatpush2.bf16.msra.mxu0 0
        %1563 = vmatprep.mubr.bf16.mxu0 0
        %1564 = vmatmul.mubr.bf16.gmra.mxu0 %v1529
        %v1565 = vpop.f32.mrf.mxu0
        %v1566 = vadd.f32 0.0, %v1565
        %v1567 = vpop.f32.mrf.mxu0
        %v1568 = vpop.f32.mrf.mxu0
        %v1569 = vpop.f32.mrf.mxu0
        %1570 = vdwg.mxu0
        %v1571 = vadd.f32 %v1000, %v1566
        %v1572 = vld [vmem:[#allocation17] sm:$0x1]
        %v1574 = vlaneseq
        %v1575 = vshrl.u32 %v1574, 7
        %v1576 = vsub.s32 0, %v1575
        %v1577 = vrot.slane %v1572, %v1576
        %v1579 = vadd.f32 %v1571, %v1577
        %v1580 = vld [vmem:[%s16] sm:$0x1]
        %v1581 = vld [vmem:[%s17] sm:$0x1]
        %v1582 = vsel %vm1527, %v1579, 0.0
        %1583 = vadd.xlane.f32.xlu0 %v1582
        %v1584 = vpop.xlane.xlu0 %1583
        %v1585 = vrcp.pop 32.0
        %v1586 = vmul.f32 %v1584, %v1585
        %v1587 = vsub.f32 %v1579, %v1586
        %v1588 = vmul.f32 %v1587, %v1587
        %v1589 = vsel %vm1527, %v1588, 0.0
        %1590 = vadd.xlane.f32.xlu0 %v1589
        %v1591 = vpop.xlane.xlu0 %1590
        %v1592 = vmul.f32 %v1591, 0.032258064
        %v1593 = vrsqrt.pop %v1592
        %v1594 = vmul.f32 %v1592, %v1593
        %vm1595 = vcmp.eq.f32.partialorder %v1592, inf
        %v1596 = vsel %vm1595, %v1592, %v1594
        %vm1597 = vcmp.eq.f32.partialorder %v1592, 0.0
        %v1598 = vand.u32 %v1592, 2147483648
        %v1599 = vsel %vm1597, %v1598, %v1596
        %v1601 = vlaneseq
        %v1602 = vshrl.u32 %v1601, 7
        %v1603 = vsub.s32 0, %v1602
        %v1604 = vrot.slane %v1580, %v1603
        %v1606 = vmul.f32 %v1604, %v1587
        %v1607 = vadd.f32 %v1599, 1e-06
        %v1608 = vrcp.pop %v1607
        %v1609 = vmul.f32 1.0, %v1608
        %v1610 = vmul.f32 %v1606, %v1609
        %v1612 = vlaneseq
        %v1613 = vshrl.u32 %v1612, 7
        %v1614 = vsub.s32 0, %v1613
        %v1615 = vrot.slane %v1581, %v1614
        %v1617 = vadd.f32 %v1610, %v1615
        %v1618 = vpack.c.bf16 %v1617, %v1617
        %v1619 = vld [vmem:[%s10] sm:$0xf]
        %v1620 = vld [vmem:[%s10 + $0x4] sm:$0xf]
        %v1621 = vld [vmem:[%s10 + $0x8] sm:$0xf]
        %v1622 = vld [vmem:[%s10 + $0xc] sm:$0xf]
        %v1623 = vld [vmem:[%s11] sm:$0x1]
        %v1625 = vlaneseq
        %v1626 = vshrl.u32 %v1625, 7
        %v1627 = vsub.s32 0, %v1626
        %v1628 = vrot.slane %v1623, %v1627
        %v1634 = vunpack.c.l.b16 %v1619
        %v1635 = vunpack.c.l.b16 %v1620
        %v1636 = vunpack.c.l.b16 %v1621
        %v1637 = vunpack.c.l.b16 %v1622
        %v1638 = vpack.c.b16 %v1635, %v1634
        %v1639 = vpack.c.b16 %v1637, %v1636
        %v1643 = vsel %vm1527, %v1618, 0
        %1645 = vmatprep.subr.bf16.mxu0 0
        %1646 = vmatpush1.bf16.msra.mxu0 0
        %1647 = vmatprep.subr.bf16.mxu0 0
        %1648 = vmatpush1.bf16.msra.mxu0 0
        %1649 = vmatprep.subr.bf16.mxu0 0
        %1650 = vmatpush1.bf16.msra.mxu0 0
        %1651 = vmatprep.subr.bf16.mxu0 0
        %1652 = vmatpush1.bf16.msra.mxu0 0
        %1653 = vmatprep.subr.bf16.mxu0 0
        %1654 = vmatpush1.bf16.msra.mxu0 0
        %1655 = vmatprep.subr.bf16.mxu0 0
        %1656 = vmatpush1.bf16.msra.mxu0 0
        %1657 = vmatprep.subr.bf16.mxu0 0
        %1658 = vmatpush1.bf16.msra.mxu0 %v1639
        %1659 = vmatprep.subr.bf16.mxu0 0
        %1660 = vmatpush1.bf16.msra.mxu0 %v1638
        %1661 = vmatprep.subr.bf16.mxu0 0
        %1662 = vmatpush2.bf16.msra.mxu0 0
        %1663 = vmatprep.subr.bf16.mxu0 0
        %1664 = vmatpush2.bf16.msra.mxu0 0
        %1665 = vmatprep.subr.bf16.mxu0 0
        %1666 = vmatpush2.bf16.msra.mxu0 0
        %1667 = vmatprep.subr.bf16.mxu0 0
        %1668 = vmatpush2.bf16.msra.mxu0 0
        %1669 = vmatprep.subr.bf16.mxu0 0
        %1670 = vmatpush2.bf16.msra.mxu0 0
        %1671 = vmatprep.subr.bf16.mxu0 0
        %1672 = vmatpush2.bf16.msra.mxu0 0
        %1673 = vmatprep.subr.bf16.mxu0 0
        %1674 = vmatpush2.bf16.msra.mxu0 0
        %1675 = vmatprep.subr.bf16.mxu0 0
        %1676 = vmatpush2.bf16.msra.mxu0 0
        %1677 = vmatprep.mubr.bf16.mxu0 0
        %1678 = vmatmul.mubr.bf16.gmra.mxu0 %v1643
        %v1679 = vpop.f32.mrf.mxu0
        %v1680 = vadd.f32 %v1628, %v1679
        %v1681 = vpop.f32.mrf.mxu0
        %v1682 = vpop.f32.mrf.mxu0
        %v1683 = vpop.f32.mrf.mxu0
        %1684 = vdwg.mxu0
        %v1685 = vmax.f32 %v1680, 0.0
        %v1686 = vpack.c.bf16 %v1685, %v1685
        %v1687 = vld [vmem:[%s12] sm:$0xf]
        %v1688 = vld [vmem:[%s12 + $0x4] sm:$0xf]
        %v1689 = vld [vmem:[%s12 + $0x8] sm:$0xf]
        %v1690 = vld [vmem:[%s12 + $0xc] sm:$0xf]
        %v1691 = vld [vmem:[%s12 + $0x10] sm:$0xf]
        %v1692 = vld [vmem:[%s12 + $0x14] sm:$0xf]
        %v1693 = vld [vmem:[%s12 + $0x18] sm:$0xf]
        %v1694 = vld [vmem:[%s12 + $0x1c] sm:$0xf]
        %v1703 = vunpack.c.l.b16 %v1687
        %v1704 = vunpack.c.l.b16 %v1688
        %v1705 = vunpack.c.l.b16 %v1689
        %v1706 = vunpack.c.l.b16 %v1690
        %v1707 = vunpack.c.l.b16 %v1691
        %v1708 = vunpack.c.l.b16 %v1692
        %v1709 = vunpack.c.l.b16 %v1693
        %v1710 = vunpack.c.l.b16 %v1694
        %v1711 = vpack.c.b16 %v1704, %v1703
        %v1712 = vpack.c.b16 %v1706, %v1705
        %v1713 = vpack.c.b16 %v1708, %v1707
        %v1714 = vpack.c.b16 %v1710, %v1709
        %vm1719 = vcmask 523264
        %v1721 = vsel %vm1719, %v1686, 0
        %1723 = vmatprep.subr.bf16.mxu0 0
        %1724 = vmatpush1.bf16.msra.mxu0 0
        %1725 = vmatprep.subr.bf16.mxu0 0
        %1726 = vmatpush1.bf16.msra.mxu0 0
        %1727 = vmatprep.subr.bf16.mxu0 0
        %1728 = vmatpush1.bf16.msra.mxu0 0
        %1729 = vmatprep.subr.bf16.mxu0 0
        %1730 = vmatpush1.bf16.msra.mxu0 0
        %1731 = vmatprep.subr.bf16.mxu0 0
        %1732 = vmatpush1.bf16.msra.mxu0 %v1714
        %1733 = vmatprep.subr.bf16.mxu0 0
        %1734 = vmatpush1.bf16.msra.mxu0 %v1713
        %1735 = vmatprep.subr.bf16.mxu0 0
        %1736 = vmatpush1.bf16.msra.mxu0 %v1712
        %1737 = vmatprep.subr.bf16.mxu0 0
        %1738 = vmatpush1.bf16.msra.mxu0 %v1711
        %1739 = vmatprep.subr.bf16.mxu0 0
        %1740 = vmatpush2.bf16.msra.mxu0 0
        %1741 = vmatprep.subr.bf16.mxu0 0
        %1742 = vmatpush2.bf16.msra.mxu0 0
        %1743 = vmatprep.subr.bf16.mxu0 0
        %1744 = vmatpush2.bf16.msra.mxu0 0
        %1745 = vmatprep.subr.bf16.mxu0 0
        %1746 = vmatpush2.bf16.msra.mxu0 0
        %1747 = vmatprep.subr.bf16.mxu0 0
        %1748 = vmatpush2.bf16.msra.mxu0 0
        %1749 = vmatprep.subr.bf16.mxu0 0
        %1750 = vmatpush2.bf16.msra.mxu0 0
        %1751 = vmatprep.subr.bf16.mxu0 0
        %1752 = vmatpush2.bf16.msra.mxu0 0
        %1753 = vmatprep.subr.bf16.mxu0 0
        %1754 = vmatpush2.bf16.msra.mxu0 0
        %1755 = vmatprep.mubr.bf16.mxu0 0
        %1756 = vmatmul.mubr.bf16.gmra.mxu0 %v1721
        %v1757 = vpop.f32.mrf.mxu0
        %v1758 = vadd.f32 0.0, %v1757
        %v1759 = vpop.f32.mrf.mxu0
        %v1760 = vpop.f32.mrf.mxu0
        %v1761 = vpop.f32.mrf.mxu0
        %1762 = vdwg.mxu0
        %v1763 = vadd.f32 %v1579, %v1758
        %v1764 = vld [vmem:[%s13] sm:$0x1]
        %v1766 = vlaneseq
        %v1767 = vshrl.u32 %v1766, 7
        %v1768 = vsub.s32 0, %v1767
        %v1769 = vrot.slane %v1764, %v1768
        %v1771 = vadd.f32 %v1763, %v1769
        %1772 = vst.msk [vmem:[%s747] sm:$0xff] %vm1527, %v1771
        %s1773 = sand.u32 %s492, 1
        %s1774 = scalar_lea.sflag [#allocation8], %s1773
        %s1775 = sand.u32 %s492, 1
        %s1776 = smul.addr %s1775, 8
        %s1777 = scalar_lea.vmem [#allocation18], %s1776
        // Predicated region
        $region133: #{tpu_custom_call.1} parent=99 // pred_check
          %p1778 = pneg %p502
        $region134: #{tpu_custom_call.1} parent=99 // pred_check_branch
          %1780 = sbr.rel (%p1778) target = $region136
        $region135: #{tpu_custom_call.1} parent=99 // pred_region
          %s1782 = ssub.s32 128, 128
          %1783 = vsyncadd %s1774, %s1782
          %s1784 = sadd.s32 %s45, %s44
          %s1785 = smul.addr %s1784, 128
          %s1786 = scalar_lea.hbm %s20, %s1785
          %s1788 = sshll.u32 %s1777, 4
          %s1789 = int_to_ptr.vmem [resolvable:$true] %s1788
          %1791 = dma.vmem_to_hbm [thread:$0]  %s1789, 128, %s1786, %s1774
        $region136: #{tpu_custom_call.1} parent=99 // pred_fallthru
          _
      $region100: #{tpu_custom_call.1} parent=5 // pred_fallthru
        _
      %p1792 = scmp.le.s32.totalorder 2, %s35
      // Predicated region
      $region137: #{tpu_custom_call.1} parent=5 // pred_check
        %p1793 = pneg %p1792
      $region138: #{tpu_custom_call.1} parent=5 // pred_check_branch
        %1795 = sbr.rel (%p1793) target = $region140
      $region139: #{tpu_custom_call.1} parent=5 // pred_region
        %s1796 = ssub.s32 %s35, 2
        // Predicated region
        $region141: #{tpu_custom_call.1} parent=139 // pred_check
          %p1797 = pneg %p508
        $region142: #{tpu_custom_call.1} parent=139 // pred_check_branch
          %1799 = sbr.rel (%p1797) target = $region144
        $region143: #{tpu_custom_call.1} parent=139 // pred_region
          %s1800 = sand.u32 %s493, 1
          %s1801 = scalar_lea.sflag [#allocation8], %s1800
          %s1802 = sand.u32 %s493, 1
          %s1803 = smul.addr %s1802, 8
          %s1804 = scalar_lea.vmem [#allocation18], %s1803
          %1805 = dma.done %s1801, 128
        $region144: #{tpu_custom_call.1} parent=139 // pred_fallthru
          _
      $region140: #{tpu_custom_call.1} parent=5 // pred_fallthru
        _
    $region6: #{tpu_custom_call.1} parent=1 // loop_footer
      %s39 = sadd.s32 1, %s35
    $region7: #{tpu_custom_call.1} parent=1 // loop_footer_branch
      %34 = sbr.rel target = $region3
    $region8: #{tpu_custom_call.1} parent=1 // loop_exit
      _
    %1806 = vsyncpa [#allocation7], 1
    %s1807 = scalar_lea.sflag [#allocation7], 1
    %1808 = vsyncpa %s1807, 1
    %1809 = vsyncpa [#allocation10], 1
    %1810 = vsyncpa [#allocation13], 1
    %1811 = vsyncpa [#allocation16], 1
    %1812 = vsyncpa [#allocation8], 1
    %s1813 = scalar_lea.sflag [#allocation8], 1
    %1814 = vsyncpa %s1813, 1

// kernel: tpu_custom_call.1
$region0: #{tpu_custom_call.1}
  #allocation0 [shape = 'u32[]', space=smem, size = 0x4, offset = 0x4, fixed_abs, tag = 'smem constant byte address 0x4 - core index']
  #allocation1 [shape = 'u32[144,128]{1,0:T(1,128)}', space=vmem, size = 0x12000, scoped, tag = 'internal scratch']
  #allocation2 [shape = 'bf16[8,32]{1,0:T(8,128)(2,1)}', space=vmem, size = 0x800, scoped, tag = 'scratch operand']
  #allocation3 [shape = 'bf16[8,32]{1,0:T(8,128)(2,1)}', space=vmem, size = 0x800, scoped, tag = 'scratch operand']
  #allocation4 [shape = 'bf16[8,32]{1,0:T(8,128)(2,1)}', space=vmem, size = 0x800, scoped, tag = 'scratch operand']
  #allocation5 [shape = 'bf16[8,32]{1,0:T(8,128)(2,1)}', space=vmem, size = 0x800, scoped, tag = 'scratch operand']
  %s0 = inlined_call_operand.vmem [shape: f32[2,8,32], index: 0, kind: input, shape index: {}]
  %s1 = inlined_call_operand.hbm [shape: f32[2,1,8], index: 1, kind: input, shape index: {}]
  %s2 = inlined_call_operand.vmem [shape: bf16[32,32], index: 2, kind: input, shape index: {}]
  %s3 = inlined_call_operand.hbm [shape: f32[1,32], index: 3, kind: input, shape index: {}]
  %s4 = inlined_call_operand.vmem [shape: bf16[32,32], index: 4, kind: input, shape index: {}]
  %s5 = inlined_call_operand.hbm [shape: f32[1,32], index: 5, kind: input, shape index: {}]
  %s6 = inlined_call_operand.hbm [shape: bf16[32,32], index: 6, kind: input, shape index: {}]
  %s7 = inlined_call_operand.hbm [shape: f32[1,32], index: 7, kind: input, shape index: {}]
  %s8 = inlined_call_operand.hbm [shape: bf16[32,32], index: 8, kind: input, shape index: {}]
  %s9 = inlined_call_operand.hbm [shape: f32[1,32], index: 9, kind: input, shape index: {}]
  %s10 = inlined_call_operand.vmem [shape: bf16[32,64], index: 10, kind: input, shape index: {}]
  %s11 = inlined_call_operand.vmem [shape: f32[1,64], index: 11, kind: input, shape index: {}]
  %s12 = inlined_call_operand.vmem [shape: bf16[64,32], index: 12, kind: input, shape index: {}]
  %s13 = inlined_call_operand.vmem [shape: f32[1,32], index: 13, kind: input, shape index: {}]
  %s14 = inlined_call_operand.vmem [shape: f32[1,32], index: 14, kind: input, shape index: {}]
  %s15 = inlined_call_operand.vmem [shape: f32[1,32], index: 15, kind: input, shape index: {}]
  %s16 = inlined_call_operand.vmem [shape: f32[1,32], index: 16, kind: input, shape index: {}]
  %s17 = inlined_call_operand.vmem [shape: f32[1,32], index: 17, kind: input, shape index: {}]
  %s18 = inlined_call_operand.vmem [shape: f32[1,32], index: 18, kind: input, shape index: {}]
  %s19 = inlined_call_operand.vmem [shape: f32[1,32], index: 19, kind: input, shape index: {}]
  %s20 = inlined_call_operand.hbm [shape: f32[2,8,32], index: 20, kind: output, shape index: {}]
  %s21 = sld [smem:[#allocation0]]
  $region145: #{tpu_custom_call.1} parent=0
    _
  %s23 = ssub.s32 1, %s21
  %s24 = scalar_select 0, %s23, %s21
  $region1: #{tpu_custom_call.1} parent=0
    #allocation6 [shape = 'u8[1024]{0}', space=vmem, size = 0x400, scoped, tag = 'input window, operand 1']
    #allocation7 [shape = 's32[2]{0}', space=sflag, size = 0x8, scoped, tag = 'scoped memory for tpu_custom_call.1']
    #allocation8 [shape = 's32[2]{0}', space=sflag, size = 0x8, scoped, tag = 'scoped memory for tpu_custom_call.1']
    #allocation9 [shape = 'u8[512]{0}', space=vmem, size = 0x400, scoped, tag = 'input window, operand 3, single buffered']
    #allocation10 [shape = 's32[1]{0}', space=sflag, size = 0x4, scoped, tag = 'scoped memory for tpu_custom_call.1']
    #allocation11 [shape = 'u8[512]{0}', space=vmem, size = 0x400, scoped, tag = 'input window, operand 5, single buffered']
    #allocation12 [shape = 'u8[8192]{0}', space=vmem, size = 0x2000, scoped, tag = 'input window, operand 6, single buffered']
    #allocation13 [shape = 's32[1]{0}', space=sflag, size = 0x4, scoped, tag = 'scoped memory for tpu_custom_call.1']
    #allocation14 [shape = 'u8[512]{0}', space=vmem, size = 0x400, scoped, tag = 'input window, operand 7, single buffered']
    #allocation15 [shape = 'u8[8192]{0}', space=vmem, size = 0x2000, scoped, tag = 'input window, operand 8, single buffered']
    #allocation16 [shape = 's32[1]{0}', space=sflag, size = 0x4, scoped, tag = 'scoped memory for tpu_custom_call.1']
    #allocation17 [shape = 'u8[512]{0}', space=vmem, size = 0x400, scoped, tag = 'input window, operand 9, single buffered']
    #allocation18 [shape = 'u8[8192]{0}', space=vmem, size = 0x2000, scoped, tag = 'output window, operand 0']
    %25 = vsyncpa [#allocation7], 0
    %s26 = scalar_lea.sflag [#allocation7], 1
    %27 = vsyncpa %s26, 0
    %28 = vsyncpa [#allocation10], 0
    %29 = vsyncpa [#allocation13], 0
    %30 = vsyncpa [#allocation16], 0
    %31 = vsyncpa [#allocation8], 0
    %s32 = scalar_lea.sflag [#allocation8], 1
    %33 = vsyncpa %s32, 0
    loop: start=0, step=1, limit=4
    $region2: #{tpu_custom_call.1} parent=1 // loop_pre_header
      _
    $region3: #{tpu_custom_call.1} parent=1 // loop_header
      %s35 = sphi 0, %s39
      %p36 = scmp.ge.s32.totalorder %s35, 4
      %s42 = sphi 0, %s54
      %s43 = sphi 0, %s50
      %s44 = sphi 0, %s42
      %s45 = sphi 0, %s43
      %s46 = sphi 0, %s44
      %s47 = sphi 0, %s45
      %s57 = sphi 0, %s59
      %s60 = sphi 0, %s57
      %s61 = sphi 0, %s60
      %s77 = sphi 0, %s61
      %s83 = sphi 0, %s85
      %s86 = sphi 0, %s83
      %s87 = sphi 0, %s86
      %s103 = sphi 0, %s87
      %s107 = sphi 0, %s107
      %s109 = sphi 0, %s107
      %s110 = sphi 0, %s109
      %s124 = sphi 0, %s110
      %s128 = sphi 0, %s128
      %s130 = sphi 0, %s128
      %s131 = sphi 0, %s130
      %s145 = sphi 0, %s131
      %s149 = sphi 0, %s149
      %s151 = sphi 0, %s149
      %s152 = sphi 0, %s151
      %s166 = sphi 0, %s152
      %s170 = sphi 0, %s170
      %s172 = sphi 0, %s170
      %s173 = sphi 0, %s172
      %s187 = sphi 0, %s173
      %s191 = sphi 0, %s191
      %s193 = sphi 0, %s191
      %s194 = sphi 0, %s193
      %s208 = sphi 0, %s194
      %s212 = sphi 0, %s212
      %s214 = sphi 0, %s212
      %s215 = sphi 0, %s214
      %s229 = sphi 0, %s215
      %s233 = sphi 0, %s233
      %s235 = sphi 0, %s233
      %s236 = sphi 0, %s235
      %s250 = sphi 0, %s236
      %s254 = sphi 0, %s254
      %s256 = sphi 0, %s254
      %s257 = sphi 0, %s256
      %s271 = sphi 0, %s257
      %s275 = sphi 0, %s275
      %s277 = sphi 0, %s275
      %s278 = sphi 0, %s277
      %s292 = sphi 0, %s278
      %s296 = sphi 0, %s296
      %s298 = sphi 0, %s296
      %s299 = sphi 0, %s298
      %s313 = sphi 0, %s299
      %s317 = sphi 0, %s317
      %s319 = sphi 0, %s317
      %s320 = sphi 0, %s319
      %s334 = sphi 0, %s320
      %s338 = sphi 0, %s338
      %s340 = sphi 0, %s338
      %s341 = sphi 0, %s340
      %s355 = sphi 0, %s341
      %s359 = sphi 0, %s359
      %s361 = sphi 0, %s359
      %s362 = sphi 0, %s361
      %s376 = sphi 0, %s362
      %s380 = sphi 0, %s380
      %s382 = sphi 0, %s380
      %s383 = sphi 0, %s382
      %s397 = sphi 0, %s383
      %s401 = sphi 0, %s401
      %s403 = sphi 0, %s401
      %s404 = sphi 0, %s403
      %s418 = sphi 0, %s404
      %s422 = sphi 0, %s422
      %s424 = sphi 0, %s422
      %s425 = sphi 0, %s424
      %s439 = sphi 0, %s425
      %s443 = sphi 0, %s443
      %s445 = sphi 0, %s443
      %s446 = sphi 0, %s445
      %s460 = sphi 0, %s446
      %s464 = sphi 0, %s464
      %s466 = sphi 0, %s464
      %s467 = sphi 0, %s466
      %s481 = sphi 0, %s467
      %s489 = sphi 0, %s491
      %s492 = sphi 0, %s489
      %s493 = sphi 0, %s492
      %s509 = sphi 0, %s493
    $region4: #{tpu_custom_call.1} parent=1 // loop_header_branch
      %38 = sbr.rel (%p36) target = $region8
    $region5: #{tpu_custom_call.1} parent=1 // loop_body
      %s40 = ssub.s32 %s35, 1
      %s41 = ssub.s32 %s35, 2
      %s48 = sadd.s32 1, %s43
      %p49 = scmp.ge.s32.totalorder %s48, 1
      %s50 = scalar_select %p49, 0, %s48
      %s51 = sadd.s32 1, %s42
      %s52 = scalar_select %p49, %s51, %s42
      %p53 = scmp.ge.s32.totalorder %s52, 2
      %s54 = scalar_select %p53, 0, %s52
      %s55 = ssub.s32 %s42, %s54
      %p56 = scmp.eq.s32.totalorder %s55, 0
      %s58 = sadd.s32 %s57, 1
      %s59 = scalar_select %p56, %s57, %s58
      %p62 = pneg %p56
      %p63 = scmp.eq.s32.totalorder %s35, 1
      %p64 = por %p62, %p63
      %p65 = scmp.ne.s32.totalorder %s57, %s60
      %p66 = scmp.eq.s32.totalorder %s35, 0
      %p67 = por %p65, %p66
      %p68 = scmp.ne.s32.totalorder %s57, %s60
      %p69 = scmp.eq.s32.totalorder %s40, 1
      %p70 = por %p68, %p69
      %p71 = scmp.ne.s32.totalorder %s60, %s61
      %p72 = scmp.eq.s32.totalorder %s40, 0
      %p73 = por %p71, %p72
      %p74 = scmp.ne.s32.totalorder %s60, %s61
      %p75 = scmp.eq.s32.totalorder %s41, 1
      %p76 = por %p74, %p75
      %p78 = scmp.ne.s32.totalorder %s61, %s77
      %p79 = scmp.eq.s32.totalorder %s41, 0
      %p80 = por %p78, %p79
      %s81 = ssub.s32 %s42, %s54
      %p82 = scmp.eq.s32.totalorder %s81, 0
      %s84 = sadd.s32 %s83, 1
      %s85 = scalar_select %p82, %s83, %s84
      %p88 = pneg %p82
      %p89 = scmp.eq.s32.totalorder %s35, 1
      %p90 = por %p88, %p89
      %p91 = scmp.ne.s32.totalorder %s83, %s86
      %p92 = scmp.eq.s32.totalorder %s35, 0
      %p93 = por %p91, %p92
      %p94 = scmp.ne.s32.totalorder %s83, %s86
      %p95 = scmp.eq.s32.totalorder %s40, 1
      %p96 = por %p94, %p95
      %p97 = scmp.ne.s32.totalorder %s86, %s87
      %p98 = scmp.eq.s32.totalorder %s40, 0
      %p99 = por %p97, %p98
      %p100 = scmp.ne.s32.totalorder %s86, %s87
      %p101 = scmp.eq.s32.totalorder %s41, 1
      %p102 = por %p100, %p101
      %p104 = scmp.ne.s32.totalorder %s87, %s103
      %p105 = scmp.eq.s32.totalorder %s41, 0
      %p106 = por %p104, %p105
      %s108 = sadd.s32 %s107, 1
      %p111 = scmp.eq.s32.totalorder %s35, 1
      %p112 = scmp.ne.s32.totalorder %s107, %s109
      %p113 = scmp.eq.s32.totalorder %s35, 0
      %p114 = por %p112, %p113
      %p115 = scmp.ne.s32.totalorder %s107, %s109
      %p116 = scmp.eq.s32.totalorder %s40, 1
      %p117 = por %p115, %p116
      %p118 = scmp.ne.s32.totalorder %s109, %s110
      %p119 = scmp.eq.s32.totalorder %s40, 0
      %p120 = por %p118, %p119
      %p121 = scmp.ne.s32.totalorder %s109, %s110
      %p122 = scmp.eq.s32.totalorder %s41, 1
      %p123 = por %p121, %p122
      %p125 = scmp.ne.s32.totalorder %s110, %s124
      %p126 = scmp.eq.s32.totalorder %s41, 0
      %p127 = por %p125, %p126
      %s129 = sadd.s32 %s128, 1
      %p132 = scmp.eq.s32.totalorder %s35, 1
      %p133 = scmp.ne.s32.totalorder %s128, %s130
      %p134 = scmp.eq.s32.totalorder %s35, 0
      %p135 = por %p133, %p134
      %p136 = scmp.ne.s32.totalorder %s128, %s130
      %p137 = scmp.eq.s32.totalorder %s40, 1
      %p138 = por %p136, %p137
      %p139 = scmp.ne.s32.totalorder %s130, %s131
      %p140 = scmp.eq.s32.totalorder %s40, 0
      %p141 = por %p139, %p140
      %p142 = scmp.ne.s32.totalorder %s130, %s131
      %p143 = scmp.eq.s32.totalorder %s41, 1
      %p144 = por %p142, %p143
      %p146 = scmp.ne.s32.totalorder %s131, %s145
      %p147 = scmp.eq.s32.totalorder %s41, 0
      %p148 = por %p146, %p147
      %s150 = sadd.s32 %s149, 1
      %p153 = scmp.eq.s32.totalorder %s35, 1
      %p154 = scmp.ne.s32.totalorder %s149, %s151
      %p155 = scmp.eq.s32.totalorder %s35, 0
      %p156 = por %p154, %p155
      %p157 = scmp.ne.s32.totalorder %s149, %s151
      %p158 = scmp.eq.s32.totalorder %s40, 1
      %p159 = por %p157, %p158
      %p160 = scmp.ne.s32.totalorder %s151, %s152
      %p161 = scmp.eq.s32.totalorder %s40, 0
      %p162 = por %p160, %p161
      %p163 = scmp.ne.s32.totalorder %s151, %s152
      %p164 = scmp.eq.s32.totalorder %s41, 1
      %p165 = por %p163, %p164
      %p167 = scmp.ne.s32.totalorder %s152, %s166
      %p168 = scmp.eq.s32.totalorder %s41, 0
      %p169 = por %p167, %p168
      %s171 = sadd.s32 %s170, 1
      %p174 = scmp.eq.s32.totalorder %s35, 1
      %p175 = scmp.ne.s32.totalorder %s170, %s172
      %p176 = scmp.eq.s32.totalorder %s35, 0
      %p177 = por %p175, %p176
      %p178 = scmp.ne.s32.totalorder %s170, %s172
      %p179 = scmp.eq.s32.totalorder %s40, 1
      %p180 = por %p178, %p179
      %p181 = scmp.ne.s32.totalorder %s172, %s173
      %p182 = scmp.eq.s32.totalorder %s40, 0
      %p183 = por %p181, %p182
      %p184 = scmp.ne.s32.totalorder %s172, %s173
      %p185 = scmp.eq.s32.totalorder %s41, 1
      %p186 = por %p184, %p185
      %p188 = scmp.ne.s32.totalorder %s173, %s187
      %p189 = scmp.eq.s32.totalorder %s41, 0
      %p190 = por %p188, %p189
      %s192 = sadd.s32 %s191, 1
      %p195 = scmp.eq.s32.totalorder %s35, 1
      %p196 = scmp.ne.s32.totalorder %s191, %s193
      %p197 = scmp.eq.s32.totalorder %s35, 0
      %p198 = por %p196, %p197
      %p199 = scmp.ne.s32.totalorder %s191, %s193
      %p200 = scmp.eq.s32.totalorder %s40, 1
      %p201 = por %p199, %p200
      %p202 = scmp.ne.s32.totalorder %s193, %s194
      %p203 = scmp.eq.s32.totalorder %s40, 0
      %p204 = por %p202, %p203
      %p205 = scmp.ne.s32.totalorder %s193, %s194
      %p206 = scmp.eq.s32.totalorder %s41, 1
      %p207 = por %p205, %p206
      %p209 = scmp.ne.s32.totalorder %s194, %s208
      %p210 = scmp.eq.s32.totalorder %s41, 0
      %p211 = por %p209, %p210
      %s213 = sadd.s32 %s212, 1
      %p216 = scmp.eq.s32.totalorder %s35, 1
      %p217 = scmp.ne.s32.totalorder %s212, %s214
      %p218 = scmp.eq.s32.totalorder %s35, 0
      %p219 = por %p217, %p218
      %p220 = scmp.ne.s32.totalorder %s212, %s214
      %p221 = scmp.eq.s32.totalorder %s40, 1
      %p222 = por %p220, %p221
      %p223 = scmp.ne.s32.totalorder %s214, %s215
      %p224 = scmp.eq.s32.totalorder %s40, 0
      %p225 = por %p223, %p224
      %p226 = scmp.ne.s32.totalorder %s214, %s215
      %p227 = scmp.eq.s32.totalorder %s41, 1
      %p228 = por %p226, %p227
      %p230 = scmp.ne.s32.totalorder %s215, %s229
      %p231 = scmp.eq.s32.totalorder %s41, 0
      %p232 = por %p230, %p231
      %s234 = sadd.s32 %s233, 1
      %p237 = scmp.eq.s32.totalorder %s35, 1
      %p238 = scmp.ne.s32.totalorder %s233, %s235
      %p239 = scmp.eq.s32.totalorder %s35, 0
      %p240 = por %p238, %p239
      %p241 = scmp.ne.s32.totalorder %s233, %s235
      %p242 = scmp.eq.s32.totalorder %s40, 1
      %p243 = por %p241, %p242
      %p244 = scmp.ne.s32.totalorder %s235, %s236
      %p245 = scmp.eq.s32.totalorder %s40, 0
      %p246 = por %p244, %p245
      %p247 = scmp.ne.s32.totalorder %s235, %s236
      %p248 = scmp.eq.s32.totalorder %s41, 1
      %p249 = por %p247, %p248
      %p251 = scmp.ne.s32.totalorder %s236, %s250
      %p252 = scmp.eq.s32.totalorder %s41, 0
      %p253 = por %p251, %p252
      %s255 = sadd.s32 %s254, 1
      %p258 = scmp.eq.s32.totalorder %s35, 1
      %p259 = scmp.ne.s32.totalorder %s254, %s256
      %p260 = scmp.eq.s32.totalorder %s35, 0
      %p261 = por %p259, %p260
      %p262 = scmp.ne.s32.totalorder %s254, %s256
      %p263 = scmp.eq.s32.totalorder %s40, 1
      %p264 = por %p262, %p263
      %p265 = scmp.ne.s32.totalorder %s256, %s257
      %p266 = scmp.eq.s32.totalorder %s40, 0
      %p267 = por %p265, %p266
      %p268 = scmp.ne.s32.totalorder %s256, %s257
      %p269 = scmp.eq.s32.totalorder %s41, 1
      %p270 = por %p268, %p269
      %p272 = scmp.ne.s32.totalorder %s257, %s271
      %p273 = scmp.eq.s32.totalorder %s41, 0
      %p274 = por %p272, %p273
      %s276 = sadd.s32 %s275, 1
      %p279 = scmp.eq.s32.totalorder %s35, 1
      %p280 = scmp.ne.s32.totalorder %s275, %s277
      %p281 = scmp.eq.s32.totalorder %s35, 0
      %p282 = por %p280, %p281
      %p283 = scmp.ne.s32.totalorder %s275, %s277
      %p284 = scmp.eq.s32.totalorder %s40, 1
      %p285 = por %p283, %p284
      %p286 = scmp.ne.s32.totalorder %s277, %s278
      %p287 = scmp.eq.s32.totalorder %s40, 0
      %p288 = por %p286, %p287
      %p289 = scmp.ne.s32.totalorder %s277, %s278
      %p290 = scmp.eq.s32.totalorder %s41, 1
      %p291 = por %p289, %p290
      %p293 = scmp.ne.s32.totalorder %s278, %s292
      %p294 = scmp.eq.s32.totalorder %s41, 0
      %p295 = por %p293, %p294
      %s297 = sadd.s32 %s296, 1
      %p300 = scmp.eq.s32.totalorder %s35, 1
      %p301 = scmp.ne.s32.totalorder %s296, %s298
      %p302 = scmp.eq.s32.totalorder %s35, 0
      %p303 = por %p301, %p302
      %p304 = scmp.ne.s32.totalorder %s296, %s298
      %p305 = scmp.eq.s32.totalorder %s40, 1
      %p306 = por %p304, %p305
      %p307 = scmp.ne.s32.totalorder %s298, %s299
      %p308 = scmp.eq.s32.totalorder %s40, 0
      %p309 = por %p307, %p308
      %p310 = scmp.ne.s32.totalorder %s298, %s299
      %p311 = scmp.eq.s32.totalorder %s41, 1
      %p312 = por %p310, %p311
      %p314 = scmp.ne.s32.totalorder %s299, %s313
      %p315 = scmp.eq.s32.totalorder %s41, 0
      %p316 = por %p314, %p315
      %s318 = sadd.s32 %s317, 1
      %p321 = scmp.eq.s32.totalorder %s35, 1
      %p322 = scmp.ne.s32.totalorder %s317, %s319
      %p323 = scmp.eq.s32.totalorder %s35, 0
      %p324 = por %p322, %p323
      %p325 = scmp.ne.s32.totalorder %s317, %s319
      %p326 = scmp.eq.s32.totalorder %s40, 1
      %p327 = por %p325, %p326
      %p328 = scmp.ne.s32.totalorder %s319, %s320
      %p329 = scmp.eq.s32.totalorder %s40, 0
      %p330 = por %p328, %p329
      %p331 = scmp.ne.s32.totalorder %s319, %s320
      %p332 = scmp.eq.s32.totalorder %s41, 1
      %p333 = por %p331, %p332
      %p335 = scmp.ne.s32.totalorder %s320, %s334
      %p336 = scmp.eq.s32.totalorder %s41, 0
      %p337 = por %p335, %p336
      %s339 = sadd.s32 %s338, 1
      %p342 = scmp.eq.s32.totalorder %s35, 1
      %p343 = scmp.ne.s32.totalorder %s338, %s340
      %p344 = scmp.eq.s32.totalorder %s35, 0
      %p345 = por %p343, %p344
      %p346 = scmp.ne.s32.totalorder %s338, %s340
      %p347 = scmp.eq.s32.totalorder %s40, 1
      %p348 = por %p346, %p347
      %p349 = scmp.ne.s32.totalorder %s340, %s341
      %p350 = scmp.eq.s32.totalorder %s40, 0
      %p351 = por %p349, %p350
      %p352 = scmp.ne.s32.totalorder %s340, %s341
      %p353 = scmp.eq.s32.totalorder %s41, 1
      %p354 = por %p352, %p353
      %p356 = scmp.ne.s32.totalorder %s341, %s355
      %p357 = scmp.eq.s32.totalorder %s41, 0
      %p358 = por %p356, %p357
      %s360 = sadd.s32 %s359, 1
      %p363 = scmp.eq.s32.totalorder %s35, 1
      %p364 = scmp.ne.s32.totalorder %s359, %s361
      %p365 = scmp.eq.s32.totalorder %s35, 0
      %p366 = por %p364, %p365
      %p367 = scmp.ne.s32.totalorder %s359, %s361
      %p368 = scmp.eq.s32.totalorder %s40, 1
      %p369 = por %p367, %p368
      %p370 = scmp.ne.s32.totalorder %s361, %s362
      %p371 = scmp.eq.s32.totalorder %s40, 0
      %p372 = por %p370, %p371
      %p373 = scmp.ne.s32.totalorder %s361, %s362
      %p374 = scmp.eq.s32.totalorder %s41, 1
      %p375 = por %p373, %p374
      %p377 = scmp.ne.s32.totalorder %s362, %s376
      %p378 = scmp.eq.s32.totalorder %s41, 0
      %p379 = por %p377, %p378
      %s381 = sadd.s32 %s380, 1
      %p384 = scmp.eq.s32.totalorder %s35, 1
      %p385 = scmp.ne.s32.totalorder %s380, %s382
      %p386 = scmp.eq.s32.totalorder %s35, 0
      %p387 = por %p385, %p386
      %p388 = scmp.ne.s32.totalorder %s380, %s382
      %p389 = scmp.eq.s32.totalorder %s40, 1
      %p390 = por %p388, %p389
      %p391 = scmp.ne.s32.totalorder %s382, %s383
      %p392 = scmp.eq.s32.totalorder %s40, 0
      %p393 = por %p391, %p392
      %p394 = scmp.ne.s32.totalorder %s382, %s383
      %p395 = scmp.eq.s32.totalorder %s41, 1
      %p396 = por %p394, %p395
      %p398 = scmp.ne.s32.totalorder %s383, %s397
      %p399 = scmp.eq.s32.totalorder %s41, 0
      %p400 = por %p398, %p399
      %s402 = sadd.s32 %s401, 1
      %p405 = scmp.eq.s32.totalorder %s35, 1
      %p406 = scmp.ne.s32.totalorder %s401, %s403
      %p407 = scmp.eq.s32.totalorder %s35, 0
      %p408 = por %p406, %p407
      %p409 = scmp.ne.s32.totalorder %s401, %s403
      %p410 = scmp.eq.s32.totalorder %s40, 1
      %p411 = por %p409, %p410
      %p412 = scmp.ne.s32.totalorder %s403, %s404
      %p413 = scmp.eq.s32.totalorder %s40, 0
      %p414 = por %p412, %p413
      %p415 = scmp.ne.s32.totalorder %s403, %s404
      %p416 = scmp.eq.s32.totalorder %s41, 1
      %p417 = por %p415, %p416
      %p419 = scmp.ne.s32.totalorder %s404, %s418
      %p420 = scmp.eq.s32.totalorder %s41, 0
      %p421 = por %p419, %p420
      %s423 = sadd.s32 %s422, 1
      %p426 = scmp.eq.s32.totalorder %s35, 1
      %p427 = scmp.ne.s32.totalorder %s422, %s424
      %p428 = scmp.eq.s32.totalorder %s35, 0
      %p429 = por %p427, %p428
      %p430 = scmp.ne.s32.totalorder %s422, %s424
      %p431 = scmp.eq.s32.totalorder %s40, 1
      %p432 = por %p430, %p431
      %p433 = scmp.ne.s32.totalorder %s424, %s425
      %p434 = scmp.eq.s32.totalorder %s40, 0
      %p435 = por %p433, %p434
      %p436 = scmp.ne.s32.totalorder %s424, %s425
      %p437 = scmp.eq.s32.totalorder %s41, 1
      %p438 = por %p436, %p437
      %p440 = scmp.ne.s32.totalorder %s425, %s439
      %p441 = scmp.eq.s32.totalorder %s41, 0
      %p442 = por %p440, %p441
      %s444 = sadd.s32 %s443, 1
      %p447 = scmp.eq.s32.totalorder %s35, 1
      %p448 = scmp.ne.s32.totalorder %s443, %s445
      %p449 = scmp.eq.s32.totalorder %s35, 0
      %p450 = por %p448, %p449
      %p451 = scmp.ne.s32.totalorder %s443, %s445
      %p452 = scmp.eq.s32.totalorder %s40, 1
      %p453 = por %p451, %p452
      %p454 = scmp.ne.s32.totalorder %s445, %s446
      %p455 = scmp.eq.s32.totalorder %s40, 0
      %p456 = por %p454, %p455
      %p457 = scmp.ne.s32.totalorder %s445, %s446
      %p458 = scmp.eq.s32.totalorder %s41, 1
      %p459 = por %p457, %p458
      %p461 = scmp.ne.s32.totalorder %s446, %s460
      %p462 = scmp.eq.s32.totalorder %s41, 0
      %p463 = por %p461, %p462
      %s465 = sadd.s32 %s464, 1
      %p468 = scmp.eq.s32.totalorder %s35, 1
      %p469 = scmp.ne.s32.totalorder %s464, %s466
      %p470 = scmp.eq.s32.totalorder %s35, 0
      %p471 = por %p469, %p470
      %p472 = scmp.ne.s32.totalorder %s464, %s466
      %p473 = scmp.eq.s32.totalorder %s40, 1
      %p474 = por %p472, %p473
      %p475 = scmp.ne.s32.totalorder %s466, %s467
      %p476 = scmp.eq.s32.totalorder %s40, 0
      %p477 = por %p475, %p476
      %p478 = scmp.ne.s32.totalorder %s466, %s467
      %p479 = scmp.eq.s32.totalorder %s41, 1
      %p480 = por %p478, %p479
      %p482 = scmp.ne.s32.totalorder %s467, %s481
      %p483 = scmp.eq.s32.totalorder %s41, 0
      %p484 = por %p482, %p483
      %s485 = ssub.s32 %s42, %s54
      %s486 = ssub.s32 %s43, %s50
      %s487 = sor.u32 %s485, %s486
      %p488 = scmp.eq.s32.totalorder %s487, 0
      %s490 = sadd.s32 %s489, 1
      %s491 = scalar_select %p488, %s489, %s490
      %p494 = pneg %p488
      %p495 = scmp.eq.s32.totalorder %s35, 1
      %p496 = por %p494, %p495
      %p497 = scmp.ne.s32.totalorder %s489, %s492
      %p498 = scmp.eq.s32.totalorder %s35, 0
      %p499 = por %p497, %p498
      %p500 = scmp.ne.s32.totalorder %s489, %s492
      %p501 = scmp.eq.s32.totalorder %s40, 1
      %p502 = por %p500, %p501
      %p503 = scmp.ne.s32.totalorder %s492, %s493
      %p504 = scmp.eq.s32.totalorder %s40, 0
      %p505 = por %p503, %p504
      %p506 = scmp.ne.s32.totalorder %s492, %s493
      %p507 = scmp.eq.s32.totalorder %s41, 1
      %p508 = por %p506, %p507
      %p510 = scmp.ne.s32.totalorder %s493, %s509
      %p511 = scmp.eq.s32.totalorder %s41, 0
      %p512 = por %p510, %p511
      %p513 = scmp.le.s32.totalorder 1, %s35
      %p514 = scmp.lt.s32.totalorder %s35, 3
      %p515 = pnand %p513, %p514
      %p516 = pneg %p515
      // Predicated region
      $region9: #{tpu_custom_call.1} parent=5 // pred_check
        _
      $region10: #{tpu_custom_call.1} parent=5 // pred_check_branch
        %518 = sbr.rel (%p515) target = $region12
      $region11: #{tpu_custom_call.1} parent=5 // pred_region
        %s519 = ssub.s32 %s35, 1
        // Predicated region
        $region13: #{tpu_custom_call.1} parent=11 // pred_check
          %p520 = pneg %p120
        $region14: #{tpu_custom_call.1} parent=11 // pred_check_branch
          %522 = sbr.rel (%p520) target = $region16
        $region15: #{tpu_custom_call.1} parent=11 // pred_region
          _
        $region16: #{tpu_custom_call.1} parent=11 // pred_fallthru
          _
        // Predicated region
        $region17: #{tpu_custom_call.1} parent=11 // pred_check
          %p523 = pneg %p141
        $region18: #{tpu_custom_call.1} parent=11 // pred_check_branch
          %525 = sbr.rel (%p523) target = $region20
        $region19: #{tpu_custom_call.1} parent=11 // pred_region
          %s527 = ssub.s32 16, 16
          %528 = vsyncadd [#allocation10], %s527
          %s530 = sshll.u32 [#allocation9], 4
          %s531 = int_to_ptr.vmem [resolvable:$true] %s530
          %533 = dma.hbm_to_vmem [thread:$0]  %s3, 16, %s531, [#allocation10]
        $region20: #{tpu_custom_call.1} parent=11 // pred_fallthru
          _
        // Predicated region
        $region21: #{tpu_custom_call.1} parent=11 // pred_check
          %p534 = pneg %p162
        $region22: #{tpu_custom_call.1} parent=11 // pred_check_branch
          %536 = sbr.rel (%p534) target = $region24
        $region23: #{tpu_custom_call.1} parent=11 // pred_region
          _
        $region24: #{tpu_custom_call.1} parent=11 // pred_fallthru
          _
        // Predicated region
        $region25: #{tpu_custom_call.1} parent=11 // pred_check
          %p537 = pneg %p183
        $region26: #{tpu_custom_call.1} parent=11 // pred_check_branch
          %539 = sbr.rel (%p537) target = $region28
        $region27: #{tpu_custom_call.1} parent=11 // pred_region
          %s541 = ssub.s32 16, 16
          %542 = vsyncadd [#allocation10], %s541
          %s544 = sshll.u32 [#allocation11], 4
          %s545 = int_to_ptr.vmem [resolvable:$true] %s544
          %547 = dma.hbm_to_vmem [thread:$0]  %s5, 16, %s545, [#allocation10]
        $region28: #{tpu_custom_call.1} parent=11 // pred_fallthru
          _
        // Predicated region
        $region29: #{tpu_custom_call.1} parent=11 // pred_check
          %p548 = pneg %p204
        $region30: #{tpu_custom_call.1} parent=11 // pred_check_branch
          %550 = sbr.rel (%p548) target = $region32
        $region31: #{tpu_custom_call.1} parent=11 // pred_region
          %s552 = ssub.s32 256, 256
          %553 = vsyncadd [#allocation13], %s552
          %s554 = sshll.u32 [#allocation12], 4
          %s555 = int_to_ptr.vmem [resolvable:$true] %s554
          %560 = dma.hbm_to_vmem [thread:$0]  %s6, 256, %s555, [#allocation13], 64, 64, 4
        $region32: #{tpu_custom_call.1} parent=11 // pred_fallthru
          _
        // Predicated region
        $region33: #{tpu_custom_call.1} parent=11 // pred_check
          %p561 = pneg %p225
        $region34: #{tpu_custom_call.1} parent=11 // pred_check_branch
          %563 = sbr.rel (%p561) target = $region36
        $region35: #{tpu_custom_call.1} parent=11 // pred_region
          %s565 = ssub.s32 16, 16
          %566 = vsyncadd [#allocation13], %s565
          %s568 = sshll.u32 [#allocation14], 4
          %s569 = int_to_ptr.vmem [resolvable:$true] %s568
          %571 = dma.hbm_to_vmem [thread:$0]  %s7, 16, %s569, [#allocation13]
        $region36: #{tpu_custom_call.1} parent=11 // pred_fallthru
          _
        // Predicated region
        $region37: #{tpu_custom_call.1} parent=11 // pred_check
          %p572 = pneg %p246
        $region38: #{tpu_custom_call.1} parent=11 // pred_check_branch
          %574 = sbr.rel (%p572) target = $region40
        $region39: #{tpu_custom_call.1} parent=11 // pred_region
          %s576 = ssub.s32 256, 256
          %577 = vsyncadd [#allocation16], %s576
          %s578 = sshll.u32 [#allocation15], 4
          %s579 = int_to_ptr.vmem [resolvable:$true] %s578
          %584 = dma.hbm_to_vmem [thread:$0]  %s8, 256, %s579, [#allocation16], 64, 64, 4
        $region40: #{tpu_custom_call.1} parent=11 // pred_fallthru
          _
        // Predicated region
        $region41: #{tpu_custom_call.1} parent=11 // pred_check
          %p585 = pneg %p267
        $region42: #{tpu_custom_call.1} parent=11 // pred_check_branch
          %587 = sbr.rel (%p585) target = $region44
        $region43: #{tpu_custom_call.1} parent=11 // pred_region
          %s589 = ssub.s32 16, 16
          %590 = vsyncadd [#allocation16], %s589
          %s592 = sshll.u32 [#allocation17], 4
          %s593 = int_to_ptr.vmem [resolvable:$true] %s592
          %595 = dma.hbm_to_vmem [thread:$0]  %s9, 16, %s593, [#allocation16]
        $region44: #{tpu_custom_call.1} parent=11 // pred_fallthru
          _
        // Predicated region
        $region45: #{tpu_custom_call.1} parent=11 // pred_check
          %p596 = pneg %p288
        $region46: #{tpu_custom_call.1} parent=11 // pred_check_branch
          %598 = sbr.rel (%p596) target = $region48
        $region47: #{tpu_custom_call.1} parent=11 // pred_region
          _
        $region48: #{tpu_custom_call.1} parent=11 // pred_fallthru
          _
        // Predicated region
        $region49: #{tpu_custom_call.1} parent=11 // pred_check
          %p599 = pneg %p309
        $region50: #{tpu_custom_call.1} parent=11 // pred_check_branch
          %601 = sbr.rel (%p599) target = $region52
        $region51: #{tpu_custom_call.1} parent=11 // pred_region
          _
        $region52: #{tpu_custom_call.1} parent=11 // pred_fallthru
          _
        // Predicated region
        $region53: #{tpu_custom_call.1} parent=11 // pred_check
          %p602 = pneg %p330
        $region54: #{tpu_custom_call.1} parent=11 // pred_check_branch
          %604 = sbr.rel (%p602) target = $region56
        $region55: #{tpu_custom_call.1} parent=11 // pred_region
          _
        $region56: #{tpu_custom_call.1} parent=11 // pred_fallthru
          _
        // Predicated region
        $region57: #{tpu_custom_call.1} parent=11 // pred_check
          %p605 = pneg %p351
        $region58: #{tpu_custom_call.1} parent=11 // pred_check_branch
          %607 = sbr.rel (%p605) target = $region60
        $region59: #{tpu_custom_call.1} parent=11 // pred_region
          _
        $region60: #{tpu_custom_call.1} parent=11 // pred_fallthru
          _
        // Predicated region
        $region61: #{tpu_custom_call.1} parent=11 // pred_check
          %p608 = pneg %p372
        $region62: #{tpu_custom_call.1} parent=11 // pred_check_branch
          %610 = sbr.rel (%p608) target = $region64
        $region63: #{tpu_custom_call.1} parent=11 // pred_region
          _
        $region64: #{tpu_custom_call.1} parent=11 // pred_fallthru
          _
        // Predicated region
        $region65: #{tpu_custom_call.1} parent=11 // pred_check
          %p611 = pneg %p393
        $region66: #{tpu_custom_call.1} parent=11 // pred_check_branch
          %613 = sbr.rel (%p611) target = $region68
        $region67: #{tpu_custom_call.1} parent=11 // pred_region
          _
        $region68: #{tpu_custom_call.1} parent=11 // pred_fallthru
          _
        // Predicated region
        $region69: #{tpu_custom_call.1} parent=11 // pred_check
          %p614 = pneg %p414
        $region70: #{tpu_custom_call.1} parent=11 // pred_check_branch
          %616 = sbr.rel (%p614) target = $region72
        $region71: #{tpu_custom_call.1} parent=11 // pred_region
          _
        $region72: #{tpu_custom_call.1} parent=11 // pred_fallthru
          _
        // Predicated region
        $region73: #{tpu_custom_call.1} parent=11 // pred_check
          %p617 = pneg %p435
        $region74: #{tpu_custom_call.1} parent=11 // pred_check_branch
          %619 = sbr.rel (%p617) target = $region76
        $region75: #{tpu_custom_call.1} parent=11 // pred_region
          _
        $region76: #{tpu_custom_call.1} parent=11 // pred_fallthru
          _
        // Predicated region
        $region77: #{tpu_custom_call.1} parent=11 // pred_check
          %p620 = pneg %p456
        $region78: #{tpu_custom_call.1} parent=11 // pred_check_branch
          %622 = sbr.rel (%p620) target = $region80
        $region79: #{tpu_custom_call.1} parent=11 // pred_region
          _
        $region80: #{tpu_custom_call.1} parent=11 // pred_fallthru
          _
        // Predicated region
        $region81: #{tpu_custom_call.1} parent=11 // pred_check
          %p623 = pneg %p477
        $region82: #{tpu_custom_call.1} parent=11 // pred_check_branch
          %625 = sbr.rel (%p623) target = $region84
        $region83: #{tpu_custom_call.1} parent=11 // pred_region
          _
        $region84: #{tpu_custom_call.1} parent=11 // pred_fallthru
          _
      $region12: #{tpu_custom_call.1} parent=5 // pred_fallthru
        _
      %p626 = scmp.lt.s32.totalorder %s35, 2
      // Predicated region
      $region85: #{tpu_custom_call.1} parent=5 // pred_check
        %p627 = pneg %p626
      $region86: #{tpu_custom_call.1} parent=5 // pred_check_branch
        %629 = sbr.rel (%p627) target = $region88
      $region87: #{tpu_custom_call.1} parent=5 // pred_region
        // Predicated region
        $region89: #{tpu_custom_call.1} parent=87 // pred_check
          %p630 = pneg %p67
        $region90: #{tpu_custom_call.1} parent=87 // pred_check_branch
          %632 = sbr.rel (%p630) target = $region92
        $region91: #{tpu_custom_call.1} parent=87 // pred_region
          %p633 = scmp.lt.s32.totalorder %s42, 1
          %s634 = scalar_select %p633, %s42, 1
          %s635 = smul.addr %s634, 8
          %s636 = scalar_lea.vmem %s0, %s635
        $region92: #{tpu_custom_call.1} parent=87 // pred_fallthru
          _
        // Predicated region
        $region93: #{tpu_custom_call.1} parent=87 // pred_check
          %p637 = pneg %p93
        $region94: #{tpu_custom_call.1} parent=87 // pred_check_branch
          %639 = sbr.rel (%p637) target = $region96
        $region95: #{tpu_custom_call.1} parent=87 // pred_region
          %s640 = sand.u32 %s83, 1
          %s641 = scalar_lea.sflag [#allocation7], %s640
          %s642 = sand.u32 %s83, 1
          %s643 = scalar_lea.vmem [#allocation6], %s642
          %s645 = ssub.s32 16, 16
          %646 = vsyncadd %s641, %s645
          %s647 = smul.addr %s42, 16
          %s648 = scalar_lea.hbm %s1, %s647
          %s650 = sshll.u32 %s643, 4
          %s651 = int_to_ptr.vmem [resolvable:$true] %s650
          %653 = dma.hbm_to_vmem [thread:$0]  %s648, 16, %s651, %s641
        $region96: #{tpu_custom_call.1} parent=87 // pred_fallthru
          _
      $region88: #{tpu_custom_call.1} parent=5 // pred_fallthru
        _
      %p654 = scmp.le.s32.totalorder 1, %s35
      %p655 = scmp.lt.s32.totalorder %s35, 3
      %p656 = pnand %p654, %p655
      %p657 = pneg %p656
      // Predicated region
      $region97: #{tpu_custom_call.1} parent=5 // pred_check
        _
      $region98: #{tpu_custom_call.1} parent=5 // pred_check_branch
        %659 = sbr.rel (%p656) target = $region100
      $region99: #{tpu_custom_call.1} parent=5 // pred_region
        %s660 = ssub.s32 %s35, 1
        %s661 = sand.u32 %s86, 1
        %s662 = scalar_lea.sflag [#allocation7], %s661
        %s663 = sand.u32 %s86, 1
        %s664 = scalar_lea.vmem [#allocation6], %s663
        // Predicated region
        $region101: #{tpu_custom_call.1} parent=99 // pred_check
          %p665 = pneg %p99
        $region102: #{tpu_custom_call.1} parent=99 // pred_check_branch
          %667 = sbr.rel (%p665) target = $region104
        $region103: #{tpu_custom_call.1} parent=99 // pred_region
          %668 = dma.done %s662, 16
        $region104: #{tpu_custom_call.1} parent=99 // pred_fallthru
          _
        // Predicated region
        $region105: #{tpu_custom_call.1} parent=99 // pred_check
          %p669 = pneg %p141
        $region106: #{tpu_custom_call.1} parent=99 // pred_check_branch
          %671 = sbr.rel (%p669) target = $region108
        $region107: #{tpu_custom_call.1} parent=99 // pred_region
          %672 = dma.done [#allocation10], 16
        $region108: #{tpu_custom_call.1} parent=99 // pred_fallthru
          _
        // Predicated region
        $region109: #{tpu_custom_call.1} parent=99 // pred_check
          %p673 = pneg %p183
        $region110: #{tpu_custom_call.1} parent=99 // pred_check_branch
          %675 = sbr.rel (%p673) target = $region112
        $region111: #{tpu_custom_call.1} parent=99 // pred_region
          %676 = dma.done [#allocation10], 16
        $region112: #{tpu_custom_call.1} parent=99 // pred_fallthru
          _
        // Predicated region
        $region113: #{tpu_custom_call.1} parent=99 // pred_check
          %p677 = pneg %p204
        $region114: #{tpu_custom_call.1} parent=99 // pred_check_branch
          %679 = sbr.rel (%p677) target = $region116
        $region115: #{tpu_custom_call.1} parent=99 // pred_region
          %680 = dma.done [#allocation13], 256
        $region116: #{tpu_custom_call.1} parent=99 // pred_fallthru
          _
        // Predicated region
        $region117: #{tpu_custom_call.1} parent=99 // pred_check
          %p681 = pneg %p225
        $region118: #{tpu_custom_call.1} parent=99 // pred_check_branch
          %683 = sbr.rel (%p681) target = $region120
        $region119: #{tpu_custom_call.1} parent=99 // pred_region
          %684 = dma.done [#allocation13], 16
        $region120: #{tpu_custom_call.1} parent=99 // pred_fallthru
          _
        // Predicated region
        $region121: #{tpu_custom_call.1} parent=99 // pred_check
          %p685 = pneg %p246
        $region122: #{tpu_custom_call.1} parent=99 // pred_check_branch
          %687 = sbr.rel (%p685) target = $region124
        $region123: #{tpu_custom_call.1} parent=99 // pred_region
          %688 = dma.done [#allocation16], 256
        $region124: #{tpu_custom_call.1} parent=99 // pred_fallthru
          _
        // Predicated region
        $region125: #{tpu_custom_call.1} parent=99 // pred_check
          %p689 = pneg %p267
        $region126: #{tpu_custom_call.1} parent=99 // pred_check_branch
          %691 = sbr.rel (%p689) target = $region128
        $region127: #{tpu_custom_call.1} parent=99 // pred_region
          %692 = dma.done [#allocation16], 16
        $region128: #{tpu_custom_call.1} parent=99 // pred_fallthru
          _
        %p693 = scmp.lt.s32.totalorder %s44, 1
        %s694 = scalar_select %p693, %s44, 1
        %s695 = smul.addr %s694, 8
        %s696 = scalar_lea.vmem %s0, %s695
        %p697 = pneg %p73
        %p698 = pneg %p70
        %s699 = sand.u32 %s86, 1
        %s700 = scalar_lea.sflag [#allocation7], %s699
        %s701 = sand.u32 %s86, 1
        %s702 = scalar_lea.vmem [#allocation6], %s701
        %p703 = pneg %p99
        %p704 = pneg %p96
        %p705 = pneg %p120
        %p706 = pneg %p117
        %p707 = pneg %p141
        %p708 = pneg %p138
        %p709 = pneg %p162
        %p710 = pneg %p159
        %p711 = pneg %p183
        %p712 = pneg %p180
        %p713 = pneg %p204
        %p714 = pneg %p201
        %p715 = pneg %p225
        %p716 = pneg %p222
        %p717 = pneg %p246
        %p718 = pneg %p243
        %p719 = pneg %p267
        %p720 = pneg %p264
        %p721 = pneg %p288
        %p722 = pneg %p285
        %p723 = pneg %p309
        %p724 = pneg %p306
        %p725 = pneg %p330
        %p726 = pneg %p327
        %p727 = pneg %p351
        %p728 = pneg %p348
        %p729 = pneg %p372
        %p730 = pneg %p369
        %p731 = pneg %p393
        %p732 = pneg %p390
        %p733 = pneg %p414
        %p734 = pneg %p411
        %p735 = pneg %p435
        %p736 = pneg %p432
        %p737 = pneg %p456
        %p738 = pneg %p453
        %p739 = pneg %p477
        %p740 = pneg %p474
        %p741 = pneg %p505
        %p742 = pneg %p502
        %s743 = sand.u32 %s492, 1
        %s744 = scalar_lea.sflag [#allocation8], %s743
        %s745 = sand.u32 %s492, 1
        %s746 = smul.addr %s745, 8
        %s747 = scalar_lea.vmem [#allocation18], %s746
        %p748 = scmp.lt.s32.totalorder %s44, 1
        %s749 = scalar_select %p748, %s44, 1
        %s750 = smul.addr %s749, 8
        %s751 = scalar_lea.vmem %s0, %s750
        %p753 = scmp.eq.s32.totalorder %s45, 0
        // Predicated region
        $region129: #{tpu_custom_call.1} parent=99 // pred_check
          %p754 = pneg %p753
        $region130: #{tpu_custom_call.1} parent=99 // pred_check_branch
          %756 = sbr.rel (%p754) target = $region132
        $region131: #{tpu_custom_call.1} parent=99 // pred_region
          %v757 = vld [vmem:[%s751] sm:$0xff]
          %v758 = vld [vmem:[%s14] sm:$0x1]
          %v759 = vld [vmem:[%s15] sm:$0x1]
          %vm760 = vcmask 261120
          %v761 = vsel %vm760, %v757, 0.0
          %762 = vadd.xlane.f32.xlu0 %v761
          %v763 = vpop.xlane.xlu0 %762
          %v764 = vrcp.pop 32.0
          %v765 = vmul.f32 %v763, %v764
          %v766 = vsub.f32 %v757, %v765
          %v767 = vmul.f32 %v766, %v766
          %v768 = vsel %vm760, %v767, 0.0
          %769 = vadd.xlane.f32.xlu0 %v768
          %v770 = vpop.xlane.xlu0 %769
          %v771 = vmul.f32 %v770, 0.032258064
          %v772 = vrsqrt.pop %v771
          %v773 = vmul.f32 %v771, %v772
          %vm774 = vcmp.eq.f32.partialorder %v771, inf
          %v775 = vsel %vm774, %v771, %v773
          %vm776 = vcmp.eq.f32.partialorder %v771, 0.0
          %v777 = vand.u32 %v771, 2147483648
          %v778 = vsel %vm776, %v777, %v775
          %v780 = vlaneseq
          %v781 = vshrl.u32 %v780, 7
          %v782 = vsub.s32 0, %v781
          %v783 = vrot.slane %v758, %v782
          %v785 = vmul.f32 %v783, %v766
          %v786 = vadd.f32 %v778, 1e-06
          %v787 = vrcp.pop %v786
          %v788 = vmul.f32 1.0, %v787
          %v789 = vmul.f32 %v785, %v788
          %v791 = vlaneseq
          %v792 = vshrl.u32 %v791, 7
          %v793 = vsub.s32 0, %v792
          %v794 = vrot.slane %v759, %v793
          %v796 = vadd.f32 %v789, %v794
          %v797 = vpack.c.bf16 %v796, %v796
          %v798 = vld [vmem:[%s2] sm:$0xf]
          %v799 = vld [vmem:[%s2 + $0x4] sm:$0xf]
          %v800 = vld [vmem:[%s2 + $0x8] sm:$0xf]
          %v801 = vld [vmem:[%s2 + $0xc] sm:$0xf]
          %v802 = vld [vmem:[#allocation9] sm:$0x1]
          %v804 = vlaneseq
          %v805 = vshrl.u32 %v804, 7
          %v806 = vsub.s32 0, %v805
          %v807 = vrot.slane %v802, %v806
          %v813 = vunpack.c.l.b16 %v798
          %v814 = vunpack.c.l.b16 %v799
          %v815 = vunpack.c.l.b16 %v800
          %v816 = vunpack.c.l.b16 %v801
          %v817 = vpack.c.b16 %v814, %v813
          %v818 = vpack.c.b16 %v816, %v815
          %v822 = vsel %vm760, %v797, 0
          %824 = vmatprep.subr.bf16.mxu0 0
          %825 = vmatpush1.bf16.msra.mxu0 0
          %826 = vmatprep.subr.bf16.mxu0 0
          %827 = vmatpush1.bf16.msra.mxu0 0
          %828 = vmatprep.subr.bf16.mxu0 0
          %829 = vmatpush1.bf16.msra.mxu0 0
          %830 = vmatprep.subr.bf16.mxu0 0
          %831 = vmatpush1.bf16.msra.mxu0 0
          %832 = vmatprep.subr.bf16.mxu0 0
          %833 = vmatpush1.bf16.msra.mxu0 0
          %834 = vmatprep.subr.bf16.mxu0 0
          %835 = vmatpush1.bf16.msra.mxu0 0
          %836 = vmatprep.subr.bf16.mxu0 0
          %837 = vmatpush1.bf16.msra.mxu0 %v818
          %838 = vmatprep.subr.bf16.mxu0 0
          %839 = vmatpush1.bf16.msra.mxu0 %v817
          %840 = vmatprep.subr.bf16.mxu0 0
          %841 = vmatpush2.bf16.msra.mxu0 0
          %842 = vmatprep.subr.bf16.mxu0 0
          %843 = vmatpush2.bf16.msra.mxu0 0
          %844 = vmatprep.subr.bf16.mxu0 0
          %845 = vmatpush2.bf16.msra.mxu0 0
          %846 = vmatprep.subr.bf16.mxu0 0
          %847 = vmatpush2.bf16.msra.mxu0 0
          %848 = vmatprep.subr.bf16.mxu0 0
          %849 = vmatpush2.bf16.msra.mxu0 0
          %850 = vmatprep.subr.bf16.mxu0 0
          %851 = vmatpush2.bf16.msra.mxu0 0
          %852 = vmatprep.subr.bf16.mxu0 0
          %853 = vmatpush2.bf16.msra.mxu0 0
          %854 = vmatprep.subr.bf16.mxu0 0
          %855 = vmatpush2.bf16.msra.mxu0 0
          %856 = vmatprep.mubr.bf16.mxu0 0
          %857 = vmatmul.mubr.bf16.gmra.mxu0 %v822
          %v858 = vpop.f32.mrf.mxu0
          %v859 = vadd.f32 %v807, %v858
          %v860 = vpop.f32.mrf.mxu0
          %v861 = vpop.f32.mrf.mxu0
          %v862 = vpop.f32.mrf.mxu0
          %863 = vdwg.mxu0
          %v864 = vmul.f32 %v859, 0.35355338
          %v865 = vpack.c.bf16 %v864, %v864
          %vm866 = vcmask 257024
          %867 = vst.msk [vmem:[#allocation2] sm:$0xf] %vm866, %v865
          %v868 = vld [vmem:[%s4] sm:$0xf]
          %v869 = vld [vmem:[%s4 + $0x4] sm:$0xf]
          %v870 = vld [vmem:[%s4 + $0x8] sm:$0xf]
          %v871 = vld [vmem:[%s4 + $0xc] sm:$0xf]
          %v872 = vld [vmem:[#allocation11] sm:$0x1]
          %v874 = vlaneseq
          %v875 = vshrl.u32 %v874, 7
          %v876 = vsub.s32 0, %v875
          %v877 = vrot.slane %v872, %v876
          %v883 = vunpack.c.l.b16 %v868
          %v884 = vunpack.c.l.b16 %v869
          %v885 = vunpack.c.l.b16 %v870
          %v886 = vunpack.c.l.b16 %v871
          %v887 = vpack.c.b16 %v884, %v883
          %v888 = vpack.c.b16 %v886, %v885
          %891 = vmatprep.subr.bf16.mxu0 0
          %892 = vmatpush1.bf16.msra.mxu0 0
          %893 = vmatprep.subr.bf16.mxu0 0
          %894 = vmatpush1.bf16.msra.mxu0 0
          %895 = vmatprep.subr.bf16.mxu0 0
          %896 = vmatpush1.bf16.msra.mxu0 0
          %897 = vmatprep.subr.bf16.mxu0 0
          %898 = vmatpush1.bf16.msra.mxu0 0
          %899 = vmatprep.subr.bf16.mxu0 0
          %900 = vmatpush1.bf16.msra.mxu0 0
          %901 = vmatprep.subr.bf16.mxu0 0
          %902 = vmatpush1.bf16.msra.mxu0 0
          %903 = vmatprep.subr.bf16.mxu0 0
          %904 = vmatpush1.bf16.msra.mxu0 %v888
          %905 = vmatprep.subr.bf16.mxu0 0
          %906 = vmatpush1.bf16.msra.mxu0 %v887
          %907 = vmatprep.subr.bf16.mxu0 0
          %908 = vmatpush2.bf16.msra.mxu0 0
          %909 = vmatprep.subr.bf16.mxu0 0
          %910 = vmatpush2.bf16.msra.mxu0 0
          %911 = vmatprep.subr.bf16.mxu0 0
          %912 = vmatpush2.bf16.msra.mxu0 0
          %913 = vmatprep.subr.bf16.mxu0 0
          %914 = vmatpush2.bf16.msra.mxu0 0
          %915 = vmatprep.subr.bf16.mxu0 0
          %916 = vmatpush2.bf16.msra.mxu0 0
          %917 = vmatprep.subr.bf16.mxu0 0
          %918 = vmatpush2.bf16.msra.mxu0 0
          %919 = vmatprep.subr.bf16.mxu0 0
          %920 = vmatpush2.bf16.msra.mxu0 0
          %921 = vmatprep.subr.bf16.mxu0 0
          %922 = vmatpush2.bf16.msra.mxu0 0
          %923 = vmatprep.mubr.bf16.mxu0 0
          %924 = vmatmul.mubr.bf16.gmra.mxu0 %v822
          %v925 = vpop.f32.mrf.mxu0
          %v926 = vadd.f32 %v877, %v925
          %v927 = vpop.f32.mrf.mxu0
          %v928 = vpop.f32.mrf.mxu0
          %v929 = vpop.f32.mrf.mxu0
          %930 = vdwg.mxu0
          %v931 = vpack.c.bf16 %v926, %v926
          %932 = vst.msk [vmem:[#allocation3] sm:$0xf] %vm866, %v931
          %v933 = vld [vmem:[#allocation12] sm:$0xf]
          %v934 = vld [vmem:[#allocation12 + $0x4] sm:$0xf]
          %v935 = vld [vmem:[#allocation12 + $0x8] sm:$0xf]
          %v936 = vld [vmem:[#allocation12 + $0xc] sm:$0xf]
          %v937 = vld [vmem:[#allocation14] sm:$0x1]
          %v939 = vlaneseq
          %v940 = vshrl.u32 %v939, 7
          %v941 = vsub.s32 0, %v940
          %v942 = vrot.slane %v937, %v941
          %v948 = vunpack.c.l.b16 %v933
          %v949 = vunpack.c.l.b16 %v934
          %v950 = vunpack.c.l.b16 %v935
          %v951 = vunpack.c.l.b16 %v936
          %v952 = vpack.c.b16 %v949, %v948
          %v953 = vpack.c.b16 %v951, %v950
          %956 = vmatprep.subr.bf16.mxu0 0
          %957 = vmatpush1.bf16.msra.mxu0 0
          %958 = vmatprep.subr.bf16.mxu0 0
          %959 = vmatpush1.bf16.msra.mxu0 0
          %960 = vmatprep.subr.bf16.mxu0 0
          %961 = vmatpush1.bf16.msra.mxu0 0
          %962 = vmatprep.subr.bf16.mxu0 0
          %963 = vmatpush1.bf16.msra.mxu0 0
          %964 = vmatprep.subr.bf16.mxu0 0
          %965 = vmatpush1.bf16.msra.mxu0 0
          %966 = vmatprep.subr.bf16.mxu0 0
          %967 = vmatpush1.bf16.msra.mxu0 0
          %968 = vmatprep.subr.bf16.mxu0 0
          %969 = vmatpush1.bf16.msra.mxu0 %v953
          %970 = vmatprep.subr.bf16.mxu0 0
          %971 = vmatpush1.bf16.msra.mxu0 %v952
          %972 = vmatprep.subr.bf16.mxu0 0
          %973 = vmatpush2.bf16.msra.mxu0 0
          %974 = vmatprep.subr.bf16.mxu0 0
          %975 = vmatpush2.bf16.msra.mxu0 0
          %976 = vmatprep.subr.bf16.mxu0 0
          %977 = vmatpush2.bf16.msra.mxu0 0
          %978 = vmatprep.subr.bf16.mxu0 0
          %979 = vmatpush2.bf16.msra.mxu0 0
          %980 = vmatprep.subr.bf16.mxu0 0
          %981 = vmatpush2.bf16.msra.mxu0 0
          %982 = vmatprep.subr.bf16.mxu0 0
          %983 = vmatpush2.bf16.msra.mxu0 0
          %984 = vmatprep.subr.bf16.mxu0 0
          %985 = vmatpush2.bf16.msra.mxu0 0
          %986 = vmatprep.subr.bf16.mxu0 0
          %987 = vmatpush2.bf16.msra.mxu0 0
          %988 = vmatprep.mubr.bf16.mxu0 0
          %989 = vmatmul.mubr.bf16.gmra.mxu0 %v822
          %v990 = vpop.f32.mrf.mxu0
          %v991 = vadd.f32 %v942, %v990
          %v992 = vpop.f32.mrf.mxu0
          %v993 = vpop.f32.mrf.mxu0
          %v994 = vpop.f32.mrf.mxu0
          %995 = vdwg.mxu0
          %v996 = vpack.c.bf16 %v991, %v991
          %997 = vst.msk [vmem:[#allocation4] sm:$0xf] %vm866, %v996
        $region132: #{tpu_custom_call.1} parent=99 // pred_fallthru
          _
        %s998 = smul.u32 %s45, 8
        %s999 = scalar_lea.vmem %s751, %s998
        %v1000 = vld [vmem:[%s999] sm:$0xff]
        %v1001 = vld [vmem:[%s664] sm:$0x1]
        %vm1002 = vcmp.ne.f32.partialorder %v1001, 0.0
        %v1003 = vsel %vm1002, 0.0, -1e+09
        %s1004 = sshra.s32 %s998, 3
        %s1005 = sand.u32 %s998, 7
        %s1006 = smul.addr %s1004, 4
        %s1007 = scalar_lea.vmem [#allocation2], %s1006
        %v1008 = vld [vmem:[%s1007] sm:$0xf]
        %v1009 = vld [vmem:[#allocation3] sm:$0xf]
        %v1010 = vld [vmem:[#allocation4] sm:$0xf]
        %v1012 = vlaneseq
        %v1013 = vshrl.u32 %v1012, 7
        %v1014 = vsub.s32 0, %v1013
        %v1015 = vrot.slane %v1003, %v1014
        %vm1017 = vcmask 64512
        %v1019 = vsel %vm1017, %v1008, 0
        %v1022 = vsel %vm1017, %v1009, 0
        %1024 = vmatprep.subr.bf16.mxu0 0
        %1025 = vmatpush1.bf16.xpose.msra.mxu0 0
        %1026 = vmatprep.subr.bf16.mxu0 0
        %1027 = vmatpush1.bf16.xpose.msra.mxu0 0
        %1028 = vmatprep.subr.bf16.mxu0 0
        %1029 = vmatpush1.bf16.xpose.msra.mxu0 0
        %1030 = vmatprep.subr.bf16.mxu0 0
        %1031 = vmatpush1.bf16.xpose.msra.mxu0 0
        %1032 = vmatprep.subr.bf16.mxu0 0
        %1033 = vmatpush1.bf16.xpose.msra.mxu0 0
        %1034 = vmatprep.subr.bf16.mxu0 0
        %1035 = vmatpush1.bf16.xpose.msra.mxu0 0
        %1036 = vmatprep.subr.bf16.mxu0 0
        %1037 = vmatpush1.bf16.xpose.msra.mxu0 0
        %1038 = vmatprep.subr.bf16.mxu0 0
        %1039 = vmatpush1.bf16.xpose.msra.mxu0 %v1022
        %1040 = vmatprep.subr.bf16.mxu0 0
        %1041 = vmatpush2.bf16.xpose.msra.mxu0 0
        %1042 = vmatprep.subr.bf16.mxu0 0
        %1043 = vmatpush2.bf16.xpose.msra.mxu0 0
        %1044 = vmatprep.subr.bf16.mxu0 0
        %1045 = vmatpush2.bf16.xpose.msra.mxu0 0
        %1046 = vmatprep.subr.bf16.mxu0 0
        %1047 = vmatpush2.bf16.xpose.msra.mxu0 0
        %1048 = vmatprep.subr.bf16.mxu0 0
        %1049 = vmatpush2.bf16.xpose.msra.mxu0 0
        %1050 = vmatprep.subr.bf16.mxu0 0
        %1051 = vmatpush2.bf16.xpose.msra.mxu0 0
        %1052 = vmatprep.subr.bf16.mxu0 0
        %1053 = vmatpush2.bf16.xpose.msra.mxu0 0
        %1054 = vmatprep.subr.bf16.mxu0 0
        %1055 = vmatpush2.bf16.xpose.msra.mxu0 0
        %1056 = vmatprep.mubr.bf16.mxu0 0
        %1057 = vmatmul.mubr.bf16.gmra.mxu0 %v1019
        %v1058 = vpop.f32.mrf.mxu0
        %v1059 = vadd.f32 %v1015, %v1058
        %v1060 = vpop.f32.mrf.mxu0
        %v1061 = vpop.f32.mrf.mxu0
        %v1062 = vpop.f32.mrf.mxu0
        %1063 = vdwg.mxu0
        %v1064 = vsel %vm1017, %v1059, -inf
        %1065 = vmax.xlane.f32.xlu0 %v1064
        %v1066 = vpop.xlane.xlu0 %1065
        %v1067 = vsub.f32 %v1059, %v1066
        %v1068 = vmul.f32 %v1067, 1.442695
        %v1069 = vpow.pop %v1068
        %v1070 = vsel %vm1017, %v1069, 0.0
        %1071 = vadd.xlane.f32.xlu0 %v1070
        %v1072 = vpop.xlane.xlu0 %1071
        %v1073 = vrcp.pop %v1072
        %v1074 = vmul.f32 %v1069, %v1073
        %v1075 = vpack.c.bf16 %v1074, %v1074
        %v1077 = vsel %vm1017, %v1075, 0
        %vm1079 = vcmask 1043456
        %v1081 = vsel %vm1079, %v1010, 0
        %1083 = vmatprep.subr.bf16.mxu0 0
        %1084 = vmatpush1.bf16.msra.mxu0 0
        %1085 = vmatprep.subr.bf16.mxu0 0
        %1086 = vmatpush1.bf16.msra.mxu0 0
        %1087 = vmatprep.subr.bf16.mxu0 0
        %1088 = vmatpush1.bf16.msra.mxu0 0
        %1089 = vmatprep.subr.bf16.mxu0 0
        %1090 = vmatpush1.bf16.msra.mxu0 0
        %1091 = vmatprep.subr.bf16.mxu0 0
        %1092 = vmatpush1.bf16.msra.mxu0 0
        %1093 = vmatprep.subr.bf16.mxu0 0
        %1094 = vmatpush1.bf16.msra.mxu0 0
        %1095 = vmatprep.subr.bf16.mxu0 0
        %1096 = vmatpush1.bf16.msra.mxu0 0
        %1097 = vmatprep.subr.bf16.mxu0 0
        %1098 = vmatpush1.bf16.msra.mxu0 %v1081
        %1099 = vmatprep.subr.bf16.mxu0 0
        %1100 = vmatpush2.bf16.msra.mxu0 0
        %1101 = vmatprep.subr.bf16.mxu0 0
        %1102 = vmatpush2.bf16.msra.mxu0 0
        %1103 = vmatprep.subr.bf16.mxu0 0
        %1104 = vmatpush2.bf16.msra.mxu0 0
        %1105 = vmatprep.subr.bf16.mxu0 0
        %1106 = vmatpush2.bf16.msra.mxu0 0
        %1107 = vmatprep.subr.bf16.mxu0 0
        %1108 = vmatpush2.bf16.msra.mxu0 0
        %1109 = vmatprep.subr.bf16.mxu0 0
        %1110 = vmatpush2.bf16.msra.mxu0 0
        %1111 = vmatprep.subr.bf16.mxu0 0
        %1112 = vmatpush2.bf16.msra.mxu0 0
        %1113 = vmatprep.subr.bf16.mxu0 0
        %1114 = vmatpush2.bf16.msra.mxu0 0
        %1115 = vmatprep.mubr.bf16.mxu0 0
        %1116 = vmatmul.mubr.bf16.gmra.mxu0 %v1077
        %v1117 = vpop.f32.mrf.mxu0
        %v1118 = vadd.f32 0.0, %v1117
        %v1119 = vpop.f32.mrf.mxu0
        %v1120 = vpop.f32.mrf.mxu0
        %v1121 = vpop.f32.mrf.mxu0
        %1122 = vdwg.mxu0
        %v1123 = vpack.c.bf16 %v1118, %v1118
        %vm1124 = vcmask 60416
        %1125 = vst.msk [vmem:[#allocation5] sm:$0xf] %vm1124, %v1123
        %v1126 = vld [vmem:[#allocation3] sm:$0xf]
        %v1127 = vld [vmem:[#allocation4] sm:$0xf]
        %v1129 = vunpack.c.l.b16 %v1008
        %v1130 = vpack.c.b16 %v1129, %v1129
        %1131 = vrot.lane.b32.xlu0 %v1130, 120
        %v1132 = vpop.permute.xlu0 %1131
        %v1134 = vunpack.c.l.b16 %v1126
        %v1135 = vpack.c.b16 %v1134, %v1134
        %1136 = vrot.lane.b32.xlu0 %v1135, 120
        %v1137 = vpop.permute.xlu0 %1136
        %v1139 = vsel %vm1017, %v1132, 0
        %v1142 = vsel %vm1017, %v1137, 0
        %1144 = vmatprep.subr.bf16.mxu0 0
        %1145 = vmatpush1.bf16.xpose.msra.mxu0 0
        %1146 = vmatprep.subr.bf16.mxu0 0
        %1147 = vmatpush1.bf16.xpose.msra.mxu0 0
        %1148 = vmatprep.subr.bf16.mxu0 0
        %1149 = vmatpush1.bf16.xpose.msra.mxu0 0
        %1150 = vmatprep.subr.bf16.mxu0 0
        %1151 = vmatpush1.bf16.xpose.msra.mxu0 0
        %1152 = vmatprep.subr.bf16.mxu0 0
        %1153 = vmatpush1.bf16.xpose.msra.mxu0 0
        %1154 = vmatprep.subr.bf16.mxu0 0
        %1155 = vmatpush1.bf16.xpose.msra.mxu0 0
        %1156 = vmatprep.subr.bf16.mxu0 0
        %1157 = vmatpush1.bf16.xpose.msra.mxu0 0
        %1158 = vmatprep.subr.bf16.mxu0 0
        %1159 = vmatpush1.bf16.xpose.msra.mxu0 %v1142
        %1160 = vmatprep.subr.bf16.mxu0 0
        %1161 = vmatpush2.bf16.xpose.msra.mxu0 0
        %1162 = vmatprep.subr.bf16.mxu0 0
        %1163 = vmatpush2.bf16.xpose.msra.mxu0 0
        %1164 = vmatprep.subr.bf16.mxu0 0
        %1165 = vmatpush2.bf16.xpose.msra.mxu0 0
        %1166 = vmatprep.subr.bf16.mxu0 0
        %1167 = vmatpush2.bf16.xpose.msra.mxu0 0
        %1168 = vmatprep.subr.bf16.mxu0 0
        %1169 = vmatpush2.bf16.xpose.msra.mxu0 0
        %1170 = vmatprep.subr.bf16.mxu0 0
        %1171 = vmatpush2.bf16.xpose.msra.mxu0 0
        %1172 = vmatprep.subr.bf16.mxu0 0
        %1173 = vmatpush2.bf16.xpose.msra.mxu0 0
        %1174 = vmatprep.subr.bf16.mxu0 0
        %1175 = vmatpush2.bf16.xpose.msra.mxu0 0
        %1176 = vmatprep.mubr.bf16.mxu0 0
        %1177 = vmatmul.mubr.bf16.gmra.mxu0 %v1139
        %v1178 = vpop.f32.mrf.mxu0
        %v1179 = vadd.f32 %v1015, %v1178
        %v1180 = vpop.f32.mrf.mxu0
        %v1181 = vpop.f32.mrf.mxu0
        %v1182 = vpop.f32.mrf.mxu0
        %1183 = vdwg.mxu0
        %v1184 = vsel %vm1017, %v1179, -inf
        %1185 = vmax.xlane.f32.xlu0 %v1184
        %v1186 = vpop.xlane.xlu0 %1185
        %v1187 = vsub.f32 %v1179, %v1186
        %v1188 = vmul.f32 %v1187, 1.442695
        %v1189 = vpow.pop %v1188
        %v1190 = vsel %vm1017, %v1189, 0.0
        %1191 = vadd.xlane.f32.xlu0 %v1190
        %v1192 = vpop.xlane.xlu0 %1191
        %v1193 = vrcp.pop %v1192
        %v1194 = vmul.f32 %v1189, %v1193
        %v1195 = vpack.c.bf16 %v1194, %v1194
        %v1197 = vunpack.c.l.b16 %v1127
        %v1198 = vpack.c.b16 %v1197, %v1197
        %1199 = vrot.lane.b32.xlu0 %v1198, 120
        %v1200 = vpop.permute.xlu0 %1199
        %v1202 = vsel %vm1017, %v1195, 0
        %v1205 = vsel %vm1079, %v1200, 0
        %1207 = vmatprep.subr.bf16.mxu0 0
        %1208 = vmatpush1.bf16.msra.mxu0 0
        %1209 = vmatprep.subr.bf16.mxu0 0
        %1210 = vmatpush1.bf16.msra.mxu0 0
        %1211 = vmatprep.subr.bf16.mxu0 0
        %1212 = vmatpush1.bf16.msra.mxu0 0
        %1213 = vmatprep.subr.bf16.mxu0 0
        %1214 = vmatpush1.bf16.msra.mxu0 0
        %1215 = vmatprep.subr.bf16.mxu0 0
        %1216 = vmatpush1.bf16.msra.mxu0 0
        %1217 = vmatprep.subr.bf16.mxu0 0
        %1218 = vmatpush1.bf16.msra.mxu0 0
        %1219 = vmatprep.subr.bf16.mxu0 0
        %1220 = vmatpush1.bf16.msra.mxu0 0
        %1221 = vmatprep.subr.bf16.mxu0 0
        %1222 = vmatpush1.bf16.msra.mxu0 %v1205
        %1223 = vmatprep.subr.bf16.mxu0 0
        %1224 = vmatpush2.bf16.msra.mxu0 0
        %1225 = vmatprep.subr.bf16.mxu0 0
        %1226 = vmatpush2.bf16.msra.mxu0 0
        %1227 = vmatprep.subr.bf16.mxu0 0
        %1228 = vmatpush2.bf16.msra.mxu0 0
        %1229 = vmatprep.subr.bf16.mxu0 0
        %1230 = vmatpush2.bf16.msra.mxu0 0
        %1231 = vmatprep.subr.bf16.mxu0 0
        %1232 = vmatpush2.bf16.msra.mxu0 0
        %1233 = vmatprep.subr.bf16.mxu0 0
        %1234 = vmatpush2.bf16.msra.mxu0 0
        %1235 = vmatprep.subr.bf16.mxu0 0
        %1236 = vmatpush2.bf16.msra.mxu0 0
        %1237 = vmatprep.subr.bf16.mxu0 0
        %1238 = vmatpush2.bf16.msra.mxu0 0
        %1239 = vmatprep.mubr.bf16.mxu0 0
        %1240 = vmatmul.mubr.bf16.gmra.mxu0 %v1202
        %v1241 = vpop.f32.mrf.mxu0
        %v1242 = vadd.f32 0.0, %v1241
        %v1243 = vpop.f32.mrf.mxu0
        %v1244 = vpop.f32.mrf.mxu0
        %v1245 = vpop.f32.mrf.mxu0
        %1246 = vdwg.mxu0
        %v1247 = vpack.c.bf16 %v1242, %v1242
        %v1249 = vunpack.c.l.b16 %v1247
        %v1250 = vpack.c.b16 %v1249, %v1249
        %1251 = vrot.lane.b32.xlu0 %v1250, 8
        %v1252 = vpop.permute.xlu0 %1251
        %vm1254 = vcmask 126016
        %1255 = vst.msk [vmem:[#allocation5] sm:$0xf] %vm1254, %v1252
        %v1256 = vld [vmem:[#allocation3] sm:$0xf]
        %v1257 = vld [vmem:[#allocation4] sm:$0xf]
        %1258 = vrot.lane.b32.xlu0 %v1130, 112
        %v1259 = vpop.permute.xlu0 %1258
        %v1261 = vunpack.c.l.b16 %v1256
        %v1262 = vpack.c.b16 %v1261, %v1261
        %1263 = vrot.lane.b32.xlu0 %v1262, 112
        %v1264 = vpop.permute.xlu0 %1263
        %v1266 = vsel %vm1017, %v1259, 0
        %v1269 = vsel %vm1017, %v1264, 0
        %1271 = vmatprep.subr.bf16.mxu0 0
        %1272 = vmatpush1.bf16.xpose.msra.mxu0 0
        %1273 = vmatprep.subr.bf16.mxu0 0
        %1274 = vmatpush1.bf16.xpose.msra.mxu0 0
        %1275 = vmatprep.subr.bf16.mxu0 0
        %1276 = vmatpush1.bf16.xpose.msra.mxu0 0
        %1277 = vmatprep.subr.bf16.mxu0 0
        %1278 = vmatpush1.bf16.xpose.msra.mxu0 0
        %1279 = vmatprep.subr.bf16.mxu0 0
        %1280 = vmatpush1.bf16.xpose.msra.mxu0 0
        %1281 = vmatprep.subr.bf16.mxu0 0
        %1282 = vmatpush1.bf16.xpose.msra.mxu0 0
        %1283 = vmatprep.subr.bf16.mxu0 0
        %1284 = vmatpush1.bf16.xpose.msra.mxu0 0
        %1285 = vmatprep.subr.bf16.mxu0 0
        %1286 = vmatpush1.bf16.xpose.msra.mxu0 %v1269
        %1287 = vmatprep.subr.bf16.mxu0 0
        %1288 = vmatpush2.bf16.xpose.msra.mxu0 0
        %1289 = vmatprep.subr.bf16.mxu0 0
        %1290 = vmatpush2.bf16.xpose.msra.mxu0 0
        %1291 = vmatprep.subr.bf16.mxu0 0
        %1292 = vmatpush2.bf16.xpose.msra.mxu0 0
        %1293 = vmatprep.subr.bf16.mxu0 0
        %1294 = vmatpush2.bf16.xpose.msra.mxu0 0
        %1295 = vmatprep.subr.bf16.mxu0 0
        %1296 = vmatpush2.bf16.xpose.msra.mxu0 0
        %1297 = vmatprep.subr.bf16.mxu0 0
        %1298 = vmatpush2.bf16.xpose.msra.mxu0 0
        %1299 = vmatprep.subr.bf16.mxu0 0
        %1300 = vmatpush2.bf16.xpose.msra.mxu0 0
        %1301 = vmatprep.subr.bf16.mxu0 0
        %1302 = vmatpush2.bf16.xpose.msra.mxu0 0
        %1303 = vmatprep.mubr.bf16.mxu0 0
        %1304 = vmatmul.mubr.bf16.gmra.mxu0 %v1266
        %v1305 = vpop.f32.mrf.mxu0
        %v1306 = vadd.f32 %v1015, %v1305
        %v1307 = vpop.f32.mrf.mxu0
        %v1308 = vpop.f32.mrf.mxu0
        %v1309 = vpop.f32.mrf.mxu0
        %1310 = vdwg.mxu0
        %v1311 = vsel %vm1017, %v1306, -inf
        %1312 = vmax.xlane.f32.xlu0 %v1311
        %v1313 = vpop.xlane.xlu0 %1312
        %v1314 = vsub.f32 %v1306, %v1313
        %v1315 = vmul.f32 %v1314, 1.442695
        %v1316 = vpow.pop %v1315
        %v1317 = vsel %vm1017, %v1316, 0.0
        %1318 = vadd.xlane.f32.xlu0 %v1317
        %v1319 = vpop.xlane.xlu0 %1318
        %v1320 = vrcp.pop %v1319
        %v1321 = vmul.f32 %v1316, %v1320
        %v1322 = vpack.c.bf16 %v1321, %v1321
        %v1324 = vunpack.c.l.b16 %v1257
        %v1325 = vpack.c.b16 %v1324, %v1324
        %1326 = vrot.lane.b32.xlu0 %v1325, 112
        %v1327 = vpop.permute.xlu0 %1326
        %v1329 = vsel %vm1017, %v1322, 0
        %v1332 = vsel %vm1079, %v1327, 0
        %1334 = vmatprep.subr.bf16.mxu0 0
        %1335 = vmatpush1.bf16.msra.mxu0 0
        %1336 = vmatprep.subr.bf16.mxu0 0
        %1337 = vmatpush1.bf16.msra.mxu0 0
        %1338 = vmatprep.subr.bf16.mxu0 0
        %1339 = vmatpush1.bf16.msra.mxu0 0
        %1340 = vmatprep.subr.bf16.mxu0 0
        %1341 = vmatpush1.bf16.msra.mxu0 0
        %1342 = vmatprep.subr.bf16.mxu0 0
        %1343 = vmatpush1.bf16.msra.mxu0 0
        %1344 = vmatprep.subr.bf16.mxu0 0
        %1345 = vmatpush1.bf16.msra.mxu0 0
        %1346 = vmatprep.subr.bf16.mxu0 0
        %1347 = vmatpush1.bf16.msra.mxu0 0
        %1348 = vmatprep.subr.bf16.mxu0 0
        %1349 = vmatpush1.bf16.msra.mxu0 %v1332
        %1350 = vmatprep.subr.bf16.mxu0 0
        %1351 = vmatpush2.bf16.msra.mxu0 0
        %1352 = vmatprep.subr.bf16.mxu0 0
        %1353 = vmatpush2.bf16.msra.mxu0 0
        %1354 = vmatprep.subr.bf16.mxu0 0
        %1355 = vmatpush2.bf16.msra.mxu0 0
        %1356 = vmatprep.subr.bf16.mxu0 0
        %1357 = vmatpush2.bf16.msra.mxu0 0
        %1358 = vmatprep.subr.bf16.mxu0 0
        %1359 = vmatpush2.bf16.msra.mxu0 0
        %1360 = vmatprep.subr.bf16.mxu0 0
        %1361 = vmatpush2.bf16.msra.mxu0 0
        %1362 = vmatprep.subr.bf16.mxu0 0
        %1363 = vmatpush2.bf16.msra.mxu0 0
        %1364 = vmatprep.subr.bf16.mxu0 0
        %1365 = vmatpush2.bf16.msra.mxu0 0
        %1366 = vmatprep.mubr.bf16.mxu0 0
        %1367 = vmatmul.mubr.bf16.gmra.mxu0 %v1329
        %v1368 = vpop.f32.mrf.mxu0
        %v1369 = vadd.f32 0.0, %v1368
        %v1370 = vpop.f32.mrf.mxu0
        %v1371 = vpop.f32.mrf.mxu0
        %v1372 = vpop.f32.mrf.mxu0
        %1373 = vdwg.mxu0
        %v1374 = vpack.c.bf16 %v1369, %v1369
        %v1376 = vunpack.c.l.b16 %v1374
        %v1377 = vpack.c.b16 %v1376, %v1376
        %1378 = vrot.lane.b32.xlu0 %v1377, 16
        %v1379 = vpop.permute.xlu0 %1378
        %vm1381 = vcmask 191616
        %1382 = vst.msk [vmem:[#allocation5] sm:$0xf] %vm1381, %v1379
        %v1383 = vld [vmem:[#allocation3] sm:$0xf]
        %v1384 = vld [vmem:[#allocation4] sm:$0xf]
        %1385 = vrot.lane.b32.xlu0 %v1130, 104
        %v1386 = vpop.permute.xlu0 %1385
        %v1388 = vunpack.c.l.b16 %v1383
        %v1389 = vpack.c.b16 %v1388, %v1388
        %1390 = vrot.lane.b32.xlu0 %v1389, 104
        %v1391 = vpop.permute.xlu0 %1390
        %v1393 = vsel %vm1017, %v1386, 0
        %v1396 = vsel %vm1017, %v1391, 0
        %1398 = vmatprep.subr.bf16.mxu0 0
        %1399 = vmatpush1.bf16.xpose.msra.mxu0 0
        %1400 = vmatprep.subr.bf16.mxu0 0
        %1401 = vmatpush1.bf16.xpose.msra.mxu0 0
        %1402 = vmatprep.subr.bf16.mxu0 0
        %1403 = vmatpush1.bf16.xpose.msra.mxu0 0
        %1404 = vmatprep.subr.bf16.mxu0 0
        %1405 = vmatpush1.bf16.xpose.msra.mxu0 0
        %1406 = vmatprep.subr.bf16.mxu0 0
        %1407 = vmatpush1.bf16.xpose.msra.mxu0 0
        %1408 = vmatprep.subr.bf16.mxu0 0
        %1409 = vmatpush1.bf16.xpose.msra.mxu0 0
        %1410 = vmatprep.subr.bf16.mxu0 0
        %1411 = vmatpush1.bf16.xpose.msra.mxu0 0
        %1412 = vmatprep.subr.bf16.mxu0 0
        %1413 = vmatpush1.bf16.xpose.msra.mxu0 %v1396
        %1414 = vmatprep.subr.bf16.mxu0 0
        %1415 = vmatpush2.bf16.xpose.msra.mxu0 0
        %1416 = vmatprep.subr.bf16.mxu0 0
        %1417 = vmatpush2.bf16.xpose.msra.mxu0 0
        %1418 = vmatprep.subr.bf16.mxu0 0
        %1419 = vmatpush2.bf16.xpose.msra.mxu0 0
        %1420 = vmatprep.subr.bf16.mxu0 0
        %1421 = vmatpush2.bf16.xpose.msra.mxu0 0
        %1422 = vmatprep.subr.bf16.mxu0 0
        %1423 = vmatpush2.bf16.xpose.msra.mxu0 0
        %1424 = vmatprep.subr.bf16.mxu0 0
        %1425 = vmatpush2.bf16.xpose.msra.mxu0 0
        %1426 = vmatprep.subr.bf16.mxu0 0
        %1427 = vmatpush2.bf16.xpose.msra.mxu0 0
        %1428 = vmatprep.subr.bf16.mxu0 0
        %1429 = vmatpush2.bf16.xpose.msra.mxu0 0
        %1430 = vmatprep.mubr.bf16.mxu0 0
        %1431 = vmatmul.mubr.bf16.gmra.mxu0 %v1393
        %v1432 = vpop.f32.mrf.mxu0
        %v1433 = vadd.f32 %v1015, %v1432
        %v1434 = vpop.f32.mrf.mxu0
        %v1435 = vpop.f32.mrf.mxu0
        %v1436 = vpop.f32.mrf.mxu0
        %1437 = vdwg.mxu0
        %v1438 = vsel %vm1017, %v1433, -inf
        %1439 = vmax.xlane.f32.xlu0 %v1438
        %v1440 = vpop.xlane.xlu0 %1439
        %v1441 = vsub.f32 %v1433, %v1440
        %v1442 = vmul.f32 %v1441, 1.442695
        %v1443 = vpow.pop %v1442
        %v1444 = vsel %vm1017, %v1443, 0.0
        %1445 = vadd.xlane.f32.xlu0 %v1444
        %v1446 = vpop.xlane.xlu0 %1445
        %v1447 = vrcp.pop %v1446
        %v1448 = vmul.f32 %v1443, %v1447
        %v1449 = vpack.c.bf16 %v1448, %v1448
        %v1451 = vunpack.c.l.b16 %v1384
        %v1452 = vpack.c.b16 %v1451, %v1451
        %1453 = vrot.lane.b32.xlu0 %v1452, 104
        %v1454 = vpop.permute.xlu0 %1453
        %v1456 = vsel %vm1017, %v1449, 0
        %v1459 = vsel %vm1079, %v1454, 0
        %1461 = vmatprep.subr.bf16.mxu0 0
        %1462 = vmatpush1.bf16.msra.mxu0 0
        %1463 = vmatprep.subr.bf16.mxu0 0
        %1464 = vmatpush1.bf16.msra.mxu0 0
        %1465 = vmatprep.subr.bf16.mxu0 0
        %1466 = vmatpush1.bf16.msra.mxu0 0
        %1467 = vmatprep.subr.bf16.mxu0 0
        %1468 = vmatpush1.bf16.msra.mxu0 0
        %1469 = vmatprep.subr.bf16.mxu0 0
        %1470 = vmatpush1.bf16.msra.mxu0 0
        %1471 = vmatprep.subr.bf16.mxu0 0
        %1472 = vmatpush1.bf16.msra.mxu0 0
        %1473 = vmatprep.subr.bf16.mxu0 0
        %1474 = vmatpush1.bf16.msra.mxu0 0
        %1475 = vmatprep.subr.bf16.mxu0 0
        %1476 = vmatpush1.bf16.msra.mxu0 %v1459
        %1477 = vmatprep.subr.bf16.mxu0 0
        %1478 = vmatpush2.bf16.msra.mxu0 0
        %1479 = vmatprep.subr.bf16.mxu0 0
        %1480 = vmatpush2.bf16.msra.mxu0 0
        %1481 = vmatprep.subr.bf16.mxu0 0
        %1482 = vmatpush2.bf16.msra.mxu0 0
        %1483 = vmatprep.subr.bf16.mxu0 0
        %1484 = vmatpush2.bf16.msra.mxu0 0
        %1485 = vmatprep.subr.bf16.mxu0 0
        %1486 = vmatpush2.bf16.msra.mxu0 0
        %1487 = vmatprep.subr.bf16.mxu0 0
        %1488 = vmatpush2.bf16.msra.mxu0 0
        %1489 = vmatprep.subr.bf16.mxu0 0
        %1490 = vmatpush2.bf16.msra.mxu0 0
        %1491 = vmatprep.subr.bf16.mxu0 0
        %1492 = vmatpush2.bf16.msra.mxu0 0
        %1493 = vmatprep.mubr.bf16.mxu0 0
        %1494 = vmatmul.mubr.bf16.gmra.mxu0 %v1456
        %v1495 = vpop.f32.mrf.mxu0
        %v1496 = vadd.f32 0.0, %v1495
        %v1497 = vpop.f32.mrf.mxu0
        %v1498 = vpop.f32.mrf.mxu0
        %v1499 = vpop.f32.mrf.mxu0
        %1500 = vdwg.mxu0
        %v1501 = vpack.c.bf16 %v1496, %v1496
        %v1503 = vunpack.c.l.b16 %v1501
        %v1504 = vpack.c.b16 %v1503, %v1503
        %1505 = vrot.lane.b32.xlu0 %v1504, 24
        %v1506 = vpop.permute.xlu0 %1505
        %vm1508 = vcmask 257216
        %1509 = vst.msk [vmem:[#allocation5] sm:$0xf] %vm1508, %v1506
        %v1510 = vld [vmem:[#allocation5] sm:$0xf]
        %v1511 = vld [vmem:[#allocation15] sm:$0xf]
        %v1512 = vld [vmem:[#allocation15 + $0x4] sm:$0xf]
        %v1513 = vld [vmem:[#allocation15 + $0x8] sm:$0xf]
        %v1514 = vld [vmem:[#allocation15 + $0xc] sm:$0xf]
        %v1519 = vunpack.c.l.b16 %v1511
        %v1520 = vunpack.c.l.b16 %v1512
        %v1521 = vunpack.c.l.b16 %v1513
        %v1522 = vunpack.c.l.b16 %v1514
        %v1523 = vpack.c.b16 %v1520, %v1519
        %v1524 = vpack.c.b16 %v1522, %v1521
        %vm1527 = vcmask 261120
        %v1529 = vsel %vm1527, %v1510, 0
        %1531 = vmatprep.subr.bf16.mxu0 0
        %1532 = vmatpush1.bf16.msra.mxu0 0
        %1533 = vmatprep.subr.bf16.mxu0 0
        %1534 = vmatpush1.bf16.msra.mxu0 0
        %1535 = vmatprep.subr.bf16.mxu0 0
        %1536 = vmatpush1.bf16.msra.mxu0 0
        %1537 = vmatprep.subr.bf16.mxu0 0
        %1538 = vmatpush1.bf16.msra.mxu0 0
        %1539 = vmatprep.subr.bf16.mxu0 0
        %1540 = vmatpush1.bf16.msra.mxu0 0
        %1541 = vmatprep.subr.bf16.mxu0 0
        %1542 = vmatpush1.bf16.msra.mxu0 0
        %1543 = vmatprep.subr.bf16.mxu0 0
        %1544 = vmatpush1.bf16.msra.mxu0 %v1524
        %1545 = vmatprep.subr.bf16.mxu0 0
        %1546 = vmatpush1.bf16.msra.mxu0 %v1523
        %1547 = vmatprep.subr.bf16.mxu0 0
        %1548 = vmatpush2.bf16.msra.mxu0 0
        %1549 = vmatprep.subr.bf16.mxu0 0
        %1550 = vmatpush2.bf16.msra.mxu0 0
        %1551 = vmatprep.subr.bf16.mxu0 0
        %1552 = vmatpush2.bf16.msra.mxu0 0
        %1553 = vmatprep.subr.bf16.mxu0 0
        %1554 = vmatpush2.bf16.msra.mxu0 0
        %1555 = vmatprep.subr.bf16.mxu0 0
        %1556 = vmatpush2.bf16.msra.mxu0 0
        %1557 = vmatprep.subr.bf16.mxu0 0
        %1558 = vmatpush2.bf16.msra.mxu0 0
        %1559 = vmatprep.subr.bf16.mxu0 0
        %1560 = vmatpush2.bf16.msra.mxu0 0
        %1561 = vmatprep.subr.bf16.mxu0 0
        %1562 = vmatpush2.bf16.msra.mxu0 0
        %1563 = vmatprep.mubr.bf16.mxu0 0
        %1564 = vmatmul.mubr.bf16.gmra.mxu0 %v1529
        %v1565 = vpop.f32.mrf.mxu0
        %v1566 = vadd.f32 0.0, %v1565
        %v1567 = vpop.f32.mrf.mxu0
        %v1568 = vpop.f32.mrf.mxu0
        %v1569 = vpop.f32.mrf.mxu0
        %1570 = vdwg.mxu0
        %v1571 = vadd.f32 %v1000, %v1566
        %v1572 = vld [vmem:[#allocation17] sm:$0x1]
        %v1574 = vlaneseq
        %v1575 = vshrl.u32 %v1574, 7
        %v1576 = vsub.s32 0, %v1575
        %v1577 = vrot.slane %v1572, %v1576
        %v1579 = vadd.f32 %v1571, %v1577
        %v1580 = vld [vmem:[%s16] sm:$0x1]
        %v1581 = vld [vmem:[%s17] sm:$0x1]
        %v1582 = vsel %vm1527, %v1579, 0.0
        %1583 = vadd.xlane.f32.xlu0 %v1582
        %v1584 = vpop.xlane.xlu0 %1583
        %v1585 = vrcp.pop 32.0
        %v1586 = vmul.f32 %v1584, %v1585
        %v1587 = vsub.f32 %v1579, %v1586
        %v1588 = vmul.f32 %v1587, %v1587
        %v1589 = vsel %vm1527, %v1588, 0.0
        %1590 = vadd.xlane.f32.xlu0 %v1589
        %v1591 = vpop.xlane.xlu0 %1590
        %v1592 = vmul.f32 %v1591, 0.032258064
        %v1593 = vrsqrt.pop %v1592
        %v1594 = vmul.f32 %v1592, %v1593
        %vm1595 = vcmp.eq.f32.partialorder %v1592, inf
        %v1596 = vsel %vm1595, %v1592, %v1594
        %vm1597 = vcmp.eq.f32.partialorder %v1592, 0.0
        %v1598 = vand.u32 %v1592, 2147483648
        %v1599 = vsel %vm1597, %v1598, %v1596
        %v1601 = vlaneseq
        %v1602 = vshrl.u32 %v1601, 7
        %v1603 = vsub.s32 0, %v1602
        %v1604 = vrot.slane %v1580, %v1603
        %v1606 = vmul.f32 %v1604, %v1587
        %v1607 = vadd.f32 %v1599, 1e-06
        %v1608 = vrcp.pop %v1607
        %v1609 = vmul.f32 1.0, %v1608
        %v1610 = vmul.f32 %v1606, %v1609
        %v1612 = vlaneseq
        %v1613 = vshrl.u32 %v1612, 7
        %v1614 = vsub.s32 0, %v1613
        %v1615 = vrot.slane %v1581, %v1614
        %v1617 = vadd.f32 %v1610, %v1615
        %v1618 = vpack.c.bf16 %v1617, %v1617
        %v1619 = vld [vmem:[%s10] sm:$0xf]
        %v1620 = vld [vmem:[%s10 + $0x4] sm:$0xf]
        %v1621 = vld [vmem:[%s10 + $0x8] sm:$0xf]
        %v1622 = vld [vmem:[%s10 + $0xc] sm:$0xf]
        %v1623 = vld [vmem:[%s11] sm:$0x1]
        %v1625 = vlaneseq
        %v1626 = vshrl.u32 %v1625, 7
        %v1627 = vsub.s32 0, %v1626
        %v1628 = vrot.slane %v1623, %v1627
        %v1634 = vunpack.c.l.b16 %v1619
        %v1635 = vunpack.c.l.b16 %v1620
        %v1636 = vunpack.c.l.b16 %v1621
        %v1637 = vunpack.c.l.b16 %v1622
        %v1638 = vpack.c.b16 %v1635, %v1634
        %v1639 = vpack.c.b16 %v1637, %v1636
        %v1643 = vsel %vm1527, %v1618, 0
        %1645 = vmatprep.subr.bf16.mxu0 0
        %1646 = vmatpush1.bf16.msra.mxu0 0
        %1647 = vmatprep.subr.bf16.mxu0 0
        %1648 = vmatpush1.bf16.msra.mxu0 0
        %1649 = vmatprep.subr.bf16.mxu0 0
        %1650 = vmatpush1.bf16.msra.mxu0 0
        %1651 = vmatprep.subr.bf16.mxu0 0
        %1652 = vmatpush1.bf16.msra.mxu0 0
        %1653 = vmatprep.subr.bf16.mxu0 0
        %1654 = vmatpush1.bf16.msra.mxu0 0
        %1655 = vmatprep.subr.bf16.mxu0 0
        %1656 = vmatpush1.bf16.msra.mxu0 0
        %1657 = vmatprep.subr.bf16.mxu0 0
        %1658 = vmatpush1.bf16.msra.mxu0 %v1639
        %1659 = vmatprep.subr.bf16.mxu0 0
        %1660 = vmatpush1.bf16.msra.mxu0 %v1638
        %1661 = vmatprep.subr.bf16.mxu0 0
        %1662 = vmatpush2.bf16.msra.mxu0 0
        %1663 = vmatprep.subr.bf16.mxu0 0
        %1664 = vmatpush2.bf16.msra.mxu0 0
        %1665 = vmatprep.subr.bf16.mxu0 0
        %1666 = vmatpush2.bf16.msra.mxu0 0
        %1667 = vmatprep.subr.bf16.mxu0 0
        %1668 = vmatpush2.bf16.msra.mxu0 0
        %1669 = vmatprep.subr.bf16.mxu0 0
        %1670 = vmatpush2.bf16.msra.mxu0 0
        %1671 = vmatprep.subr.bf16.mxu0 0
        %1672 = vmatpush2.bf16.msra.mxu0 0
        %1673 = vmatprep.subr.bf16.mxu0 0
        %1674 = vmatpush2.bf16.msra.mxu0 0
        %1675 = vmatprep.subr.bf16.mxu0 0
        %1676 = vmatpush2.bf16.msra.mxu0 0
        %1677 = vmatprep.mubr.bf16.mxu0 0
        %1678 = vmatmul.mubr.bf16.gmra.mxu0 %v1643
        %v1679 = vpop.f32.mrf.mxu0
        %v1680 = vadd.f32 %v1628, %v1679
        %v1681 = vpop.f32.mrf.mxu0
        %v1682 = vpop.f32.mrf.mxu0
        %v1683 = vpop.f32.mrf.mxu0
        %1684 = vdwg.mxu0
        %v1685 = vmax.f32 %v1680, 0.0
        %v1686 = vpack.c.bf16 %v1685, %v1685
        %v1687 = vld [vmem:[%s12] sm:$0xf]
        %v1688 = vld [vmem:[%s12 + $0x4] sm:$0xf]
        %v1689 = vld [vmem:[%s12 + $0x8] sm:$0xf]
        %v1690 = vld [vmem:[%s12 + $0xc] sm:$0xf]
        %v1691 = vld [vmem:[%s12 + $0x10] sm:$0xf]
        %v1692 = vld [vmem:[%s12 + $0x14] sm:$0xf]
        %v1693 = vld [vmem:[%s12 + $0x18] sm:$0xf]
        %v1694 = vld [vmem:[%s12 + $0x1c] sm:$0xf]
        %v1703 = vunpack.c.l.b16 %v1687
        %v1704 = vunpack.c.l.b16 %v1688
        %v1705 = vunpack.c.l.b16 %v1689
        %v1706 = vunpack.c.l.b16 %v1690
        %v1707 = vunpack.c.l.b16 %v1691
        %v1708 = vunpack.c.l.b16 %v1692
        %v1709 = vunpack.c.l.b16 %v1693
        %v1710 = vunpack.c.l.b16 %v1694
        %v1711 = vpack.c.b16 %v1704, %v1703
        %v1712 = vpack.c.b16 %v1706, %v1705
        %v1713 = vpack.c.b16 %v1708, %v1707
        %v1714 = vpack.c.b16 %v1710, %v1709
        %vm1719 = vcmask 523264
        %v1721 = vsel %vm1719, %v1686, 0
        %1723 = vmatprep.subr.bf16.mxu0 0
        %1724 = vmatpush1.bf16.msra.mxu0 0
        %1725 = vmatprep.subr.bf16.mxu0 0
        %1726 = vmatpush1.bf16.msra.mxu0 0
        %1727 = vmatprep.subr.bf16.mxu0 0
        %1728 = vmatpush1.bf16.msra.mxu0 0
        %1729 = vmatprep.subr.bf16.mxu0 0
        %1730 = vmatpush1.bf16.msra.mxu0 0
        %1731 = vmatprep.subr.bf16.mxu0 0
        %1732 = vmatpush1.bf16.msra.mxu0 %v1714
        %1733 = vmatprep.subr.bf16.mxu0 0
        %1734 = vmatpush1.bf16.msra.mxu0 %v1713
        %1735 = vmatprep.subr.bf16.mxu0 0
        %1736 = vmatpush1.bf16.msra.mxu0 %v1712
        %1737 = vmatprep.subr.bf16.mxu0 0
        %1738 = vmatpush1.bf16.msra.mxu0 %v1711
        %1739 = vmatprep.subr.bf16.mxu0 0
        %1740 = vmatpush2.bf16.msra.mxu0 0
        %1741 = vmatprep.subr.bf16.mxu0 0
        %1742 = vmatpush2.bf16.msra.mxu0 0
        %1743 = vmatprep.subr.bf16.mxu0 0
        %1744 = vmatpush2.bf16.msra.mxu0 0
        %1745 = vmatprep.subr.bf16.mxu0 0
        %1746 = vmatpush2.bf16.msra.mxu0 0
        %1747 = vmatprep.subr.bf16.mxu0 0
        %1748 = vmatpush2.bf16.msra.mxu0 0
        %1749 = vmatprep.subr.bf16.mxu0 0
        %1750 = vmatpush2.bf16.msra.mxu0 0
        %1751 = vmatprep.subr.bf16.mxu0 0
        %1752 = vmatpush2.bf16.msra.mxu0 0
        %1753 = vmatprep.subr.bf16.mxu0 0
        %1754 = vmatpush2.bf16.msra.mxu0 0
        %1755 = vmatprep.mubr.bf16.mxu0 0
        %1756 = vmatmul.mubr.bf16.gmra.mxu0 %v1721
        %v1757 = vpop.f32.mrf.mxu0
        %v1758 = vadd.f32 0.0, %v1757
        %v1759 = vpop.f32.mrf.mxu0
        %v1760 = vpop.f32.mrf.mxu0
        %v1761 = vpop.f32.mrf.mxu0
        %1762 = vdwg.mxu0
        %v1763 = vadd.f32 %v1579, %v1758
        %v1764 = vld [vmem:[%s13] sm:$0x1]
        %v1766 = vlaneseq
        %v1767 = vshrl.u32 %v1766, 7
        %v1768 = vsub.s32 0, %v1767
        %v1769 = vrot.slane %v1764, %v1768
        %v1771 = vadd.f32 %v1763, %v1769
        %1772 = vst.msk [vmem:[%s747] sm:$0xff] %vm1527, %v1771
        %s1773 = sand.u32 %s492, 1
        %s1774 = scalar_lea.sflag [#allocation8], %s1773
        %s1775 = sand.u32 %s492, 1
        %s1776 = smul.addr %s1775, 8
        %s1777 = scalar_lea.vmem [#allocation18], %s1776
        // Predicated region
        $region133: #{tpu_custom_call.1} parent=99 // pred_check
          %p1778 = pneg %p502
        $region134: #{tpu_custom_call.1} parent=99 // pred_check_branch
          %1780 = sbr.rel (%p1778) target = $region136
        $region135: #{tpu_custom_call.1} parent=99 // pred_region
          %s1782 = ssub.s32 128, 128
          %1783 = vsyncadd %s1774, %s1782
          %s1784 = sadd.s32 %s45, %s44
          %s1785 = smul.addr %s1784, 128
          %s1786 = scalar_lea.hbm %s20, %s1785
          %s1788 = sshll.u32 %s1777, 4
          %s1789 = int_to_ptr.vmem [resolvable:$true] %s1788
          %1791 = dma.vmem_to_hbm [thread:$0]  %s1789, 128, %s1786, %s1774
        $region136: #{tpu_custom_call.1} parent=99 // pred_fallthru
          _
      $region100: #{tpu_custom_call.1} parent=5 // pred_fallthru
        _
      %p1792 = scmp.le.s32.totalorder 2, %s35
      // Predicated region
      $region137: #{tpu_custom_call.1} parent=5 // pred_check
        %p1793 = pneg %p1792
      $region138: #{tpu_custom_call.1} parent=5 // pred_check_branch
        %1795 = sbr.rel (%p1793) target = $region140
      $region139: #{tpu_custom_call.1} parent=5 // pred_region
        %s1796 = ssub.s32 %s35, 2
        // Predicated region
        $region141: #{tpu_custom_call.1} parent=139 // pred_check
          %p1797 = pneg %p508
        $region142: #{tpu_custom_call.1} parent=139 // pred_check_branch
          %1799 = sbr.rel (%p1797) target = $region144
        $region143: #{tpu_custom_call.1} parent=139 // pred_region
          %s1800 = sand.u32 %s493, 1
          %s1801 = scalar_lea.sflag [#allocation8], %s1800
          %s1802 = sand.u32 %s493, 1
          %s1803 = smul.addr %s1802, 8
          %s1804 = scalar_lea.vmem [#allocation18], %s1803
          %1805 = dma.done %s1801, 128
        $region144: #{tpu_custom_call.1} parent=139 // pred_fallthru
          _
      $region140: #{tpu_custom_call.1} parent=5 // pred_fallthru
        _
    $region6: #{tpu_custom_call.1} parent=1 // loop_footer
      %s39 = sadd.s32 1, %s35
    $region7: #{tpu_custom_call.1} parent=1 // loop_footer_branch
      %34 = sbr.rel target = $region3
    $region8: #{tpu_custom_call.1} parent=1 // loop_exit
      _
    %1806 = vsyncpa [#allocation7], 1
    %s1807 = scalar_lea.sflag [#allocation7], 1
    %1808 = vsyncpa %s1807, 1
    %1809 = vsyncpa [#allocation10], 1
    %1810 = vsyncpa [#allocation13], 1
    %1811 = vsyncpa [#allocation16], 1
    %1812 = vsyncpa [#allocation8], 1
    %s1813 = scalar_lea.sflag [#allocation8], 1
    %1814 = vsyncpa %s1813, 1

</llo_original>
